<compile_context>
chip_gen: v5e
topology: v5e:2x2
jax: 0.10.0
libtpu: 0.0.40
codegen_flags: <defaults>
</compile_context>

<pallas_src>
import functools
import math

import jax
import jax.numpy as jnp
from jax.experimental import pallas as pl
from jax.experimental.pallas import tpu as pltpu

VMEM = pltpu.MemorySpace.VMEM


# ---------------------------------------------------------------------------
# Pallas kernels
# ---------------------------------------------------------------------------

def _emb_ln_kernel(x_ref, g_ref, b_ref, o_ref, *, eps):
    x = x_ref[...].astype(jnp.float32)
    mu = jnp.mean(x, axis=-1, keepdims=True)
    var = jnp.mean(x * x, axis=-1, keepdims=True) - mu * mu        # E[x^2] - mu^2
    inv = jax.lax.rsqrt(var + eps)
    o_ref[...] = ((x - mu) * inv * g_ref[...] + b_ref[...]).astype(o_ref.dtype)


def _layer_kernel(x_ref, bias_ref,
                  wqkv_ref, bqkv_ref, wo_ref, bo_ref, g1_ref, b1_ref,
                  wi_ref, bi_ref, wo2_ref, bo2_ref, g2_ref, b2_ref,
                  o_ref, ctx_ref, *, nh, dh, scale, eps):
    """One full BERT encoder layer for one batch element (grid axis = batch)."""
    H = nh * dh
    S = x_ref.shape[0]

    x = x_ref[...].astype(jnp.float32)                      # (S, H) residual kept in f32
    xb = x.astype(jnp.bfloat16)

    # fused QKV projection: single (S, 3H) MXU pass, lane-dense (3H multiple of 128)
    qkv = jnp.dot(xb, wqkv_ref[...], preferred_element_type=jnp.float32) + bqkv_ref[...]

    bias = bias_ref[...].reshape(1, S)                      # additive (1-mask)*-1e4 key bias

    # per-head attention; heads are static lane slices of the fused QKV result
    for h in range(nh):
        q = qkv[:, h * dh:(h + 1) * dh].astype(jnp.bfloat16)
        k = qkv[:, H + h * dh:H + (h + 1) * dh].astype(jnp.bfloat16)
        v = qkv[:, 2 * H + h * dh:2 * H + (h + 1) * dh].astype(jnp.bfloat16)
        s = jax.lax.dot_general(q, k, (((1,), (1,)), ((), ())),
                                preferred_element_type=jnp.float32) * scale   # q @ k.T
        s = s + bias
        m = jnp.max(s, axis=-1, keepdims=True)
        p = jnp.exp(s - m)
        denom = jnp.sum(p, axis=-1, keepdims=True)
        p = p * pl.reciprocal(denom, approx=True)           # EUP reciprocal, no VALU divide
        ctx = jnp.dot(p.astype(jnp.bfloat16), v, preferred_element_type=jnp.float32)
        ctx_ref[:, h * dh:(h + 1) * dh] = ctx

    # attention output projection + residual + LayerNorm
    attn = jnp.dot(ctx_ref[...].astype(jnp.bfloat16), wo_ref[...],
                   preferred_element_type=jnp.float32) + bo_ref[...]
    h1 = attn + x
    mu = jnp.mean(h1, axis=-1, keepdims=True)
    var = jnp.mean(h1 * h1, axis=-1, keepdims=True) - mu * mu
    h1 = (h1 - mu) * jax.lax.rsqrt(var + eps) * g1_ref[...] + b1_ref[...]

    # FFN (GELU in f32) + residual + LayerNorm
    inter = jnp.dot(h1.astype(jnp.bfloat16), wi_ref[...],
                    preferred_element_type=jnp.float32) + bi_ref[...]
    # TODO(synk): HF BERT uses erf-based GELU; tanh approximation used here (EUP-friendly).
    inter = 0.5 * inter * (1.0 + jnp.tanh(0.7978845608028654 *
                                          (inter + 0.044715 * inter * inter * inter)))
    ffn = jnp.dot(inter.astype(jnp.bfloat16), wo2_ref[...],
                  preferred_element_type=jnp.float32) + bo2_ref[...]
    h2 = ffn + h1
    mu = jnp.mean(h2, axis=-1, keepdims=True)
    var = jnp.mean(h2 * h2, axis=-1, keepdims=True) - mu * mu
    h2 = (h2 - mu) * jax.lax.rsqrt(var + eps) * g2_ref[...] + b2_ref[...]

    o_ref[...] = h2.astype(o_ref.dtype)


def _head_kernel(cls_ref, wp_ref, bp_ref, wf_ref, bf_ref, wc_ref, bc_ref, o_ref):
    """BERT pooler (tanh) -> linearF -> ReLU -> classifier, fused, padded-lane output."""
    cls = cls_ref[...].astype(jnp.bfloat16)
    pooled = jnp.tanh(jnp.dot(cls, wp_ref[...],
                              preferred_element_type=jnp.float32) + bp_ref[...])
    hf = jnp.dot(pooled.astype(jnp.bfloat16), wf_ref[...],
                 preferred_element_type=jnp.float32) + bf_ref[...]
    hf = jnp.maximum(hf, 0.0)                               # classifier ReLU
    logits = jnp.dot(hf.astype(jnp.bfloat16), wc_ref[...],
                     preferred_element_type=jnp.float32) + bc_ref[...]
    o_ref[...] = logits.astype(o_ref.dtype)


# ---------------------------------------------------------------------------
# pallas_call wrappers
# ---------------------------------------------------------------------------

def embedding_layernorm(x2d, gamma, beta, eps=1e-12):
    m, h = x2d.shape
    return pl.pallas_call(
        functools.partial(_emb_ln_kernel, eps=eps),
        out_shape=jax.ShapeDtypeStruct((m, h), jnp.float32),
        in_specs=[pl.BlockSpec(memory_space=VMEM)] * 3,
        out_specs=pl.BlockSpec(memory_space=VMEM),
    )(x2d, gamma, beta)


def encoder_layer(x2d, bias3, layer, cfg):
    B = bias3.shape[0]
    H, I = cfg["hidden"], cfg["intermediate"]
    nh = cfg["heads"]
    dh = H // nh
    S = x2d.shape[0] // B

    kernel = functools.partial(_layer_kernel, nh=nh, dh=dh,
                               scale=1.0 / math.sqrt(dh), eps=1e-12)

    def w_spec(shape):
        return pl.BlockSpec(shape, lambda b: (0,) * len(shape))   # resident across grid

    return pl.pallas_call(
        kernel,
        out_shape=jax.ShapeDtypeStruct((B * S, H), jnp.float32),
        grid=(B,),
        in_specs=[
            pl.BlockSpec((S, H), lambda b: (b, 0)),        # activations for this batch
            pl.BlockSpec((1, 1, S), lambda b: (b, 0, 0)),  # attention-mask bias
            w_spec((H, 3 * H)), w_spec((1, 3 * H)),        # fused QKV
            w_spec((H, H)), w_spec((1, H)),                # attn output proj
            w_spec((1, H)), w_spec((1, H)),                # LN1 gamma/beta
            w_spec((H, I)), w_spec((1, I)),                # FFN in
            w_spec((I, H)), w_spec((1, H)),                # FFN out
            w_spec((1, H)), w_spec((1, H)),                # LN2 gamma/beta
        ],
        out_specs=pl.BlockSpec((S, H), lambda b: (b, 0)),
        scratch_shapes=[pltpu.VMEM((S, H), jnp.float32)],  # per-batch attention context
        compiler_params=pltpu.CompilerParams(
            dimension_semantics=("parallel",)),            # v7x: shard batch across 2 TCs
    )(x2d, bias3,
      layer["wqkv"], layer["bqkv"], layer["wo"], layer["bo"],
      layer["ln1_g"], layer["ln1_b"],
      layer["wi"], layer["bi"], layer["wo2"], layer["bo2"],
      layer["ln2_g"], layer["ln2_b"])


def classification_head(cls, params):
    B = cls.shape[0]
    n_out = params["wc"].shape[1]                          # 384 (padded)
    return pl.pallas_call(
        _head_kernel,
        out_shape=jax.ShapeDtypeStruct((B, n_out), jnp.float32),
        in_specs=[pl.BlockSpec(memory_space=VMEM)] * 7,
        out_specs=pl.BlockSpec(memory_space=VMEM),
    )(cls, params["wp"], params["bp"], params["wF"], params["bF"],
      params["wc"], params["bc"])


# ---------------------------------------------------------------------------
# Parameter init (deterministic, synthetic) + model assembly
# ---------------------------------------------------------------------------

def init_params(key, cfg):
    H, I = cfg["hidden"], cfg["intermediate"]
    V, P, L = cfg["vocab"], cfg["max_pos"], cfg["layers"]
    n_cls, n_cls_pad = 118 + 130 + 12, 384                 # pad classifier to 3*128 lanes
    keys = iter(jax.random.split(key, 8 + 8 * L))

    def w(shape, dtype=jnp.bfloat16):
        return (jax.random.normal(next(keys), shape, jnp.float32) * 0.02).astype(dtype)

    wc = jnp.zeros((256, n_cls_pad), jnp.float32).at[:, :n_cls].set(
        jax.random.normal(next(keys), (256, n_cls), jnp.float32) * 0.02)

    params = {
        "word_emb": w((V, H), jnp.float32),
        "pos_emb": w((P, H), jnp.float32),
        "type_emb": w((2, H), jnp.float32),
        "emb_ln_g": jnp.ones((1, H), jnp.float32),
        "emb_ln_b": jnp.zeros((1, H), jnp.float32),
        # BERT pooler
        "wp": w((H, H)), "bp": jnp.zeros((1, H), jnp.float32),
        # linearF (768->256 in the real model; H->256 here)
        "wF": w((H, 256)), "bF": jnp.zeros((1, 256), jnp.float32),
        # classifier Linear (256 -> 260, zero-padded to 384 lanes)
        "wc": wc.astype(jnp.bfloat16), "bc": jnp.zeros((1, n_cls_pad), jnp.float32),
        "layers": [],
    }
    for _ in range(L):
        params["layers"].append({
            "wqkv": w((H, 3 * H)), "bqkv": jnp.zeros((1, 3 * H), jnp.float32),
            "wo": w((H, H)), "bo": jnp.zeros((1, H), jnp.float32),
            "ln1_g": jnp.ones((1, H), jnp.float32), "ln1_b": jnp.zeros((1, H), jnp.float32),
            "wi": w((H, I)), "bi": jnp.zeros((1, I), jnp.float32),
            "wo2": w((I, H)), "bo2": jnp.zeros((1, H), jnp.float32),
            "ln2_g": jnp.ones((1, H), jnp.float32), "ln2_b": jnp.zeros((1, H), jnp.float32),
        })
    return params


def legal_model_forward(params, input_ids, attention_mask, cfg):
    B, S = input_ids.shape
    H = cfg["hidden"]

    # --- BERT embeddings (token gather is XLA glue; LayerNorm runs in Pallas) ---
    # TODO(synk): token_type_ids hard-coded to all-zero (matches the module's call pattern).
    x = (params["word_emb"][input_ids]
         + params["pos_emb"][:S][None, :, :]
         + params["type_emb"][0][None, None, :])
    x2d = embedding_layernorm(x.reshape(B * S, H),
                              params["emb_ln_g"], params["emb_ln_b"])

    # extended attention mask: additive (1 - mask) * -10000, one key-row per batch
    bias3 = ((1.0 - attention_mask.astype(jnp.float32)) * -10000.0)[:, None, :]   # (B,1,S)

    # --- transformer encoder: one fused Pallas kernel per layer ---
    for layer in params["layers"]:
        x2d = encoder_layer(x2d, bias3, layer, cfg)

    # --- pooler + linearF + ReLU + classifier (single fused kernel on CLS rows) ---
    cls = x2d.reshape(B, S, H)[:, 0, :]                    # outputs[1] input = CLS token
    logits = classification_head(cls, params)              # (B, 384) padded
    law_logits = logits[:, :118]
    accu_logits = logits[:, 118:248]
    time_logits = logits[:, 248:260]
    return law_logits, accu_logits, time_logits


if __name__ == "__main__":
    cfg = dict(vocab=64, hidden=128, heads=2, intermediate=256, layers=2, max_pos=32)
    key = jax.random.PRNGKey(0)
    pkey, ikey = jax.random.split(key)
    params = init_params(pkey, cfg)

    B, S = 2, 8
    input_ids = jax.random.randint(ikey, (B, S), 0, cfg["vocab"], dtype=jnp.int32)
    attention_mask = jnp.array([[1, 1, 1, 1, 1, 1, 1, 1],
                                [1, 1, 1, 1, 1, 1, 0, 0]], dtype=jnp.int32)

    fwd = jax.jit(functools.partial(legal_model_forward, cfg=cfg))
    law, accu, time_l = fwd(params, input_ids, attention_mask)
    jax.block_until_ready((law, accu, time_l))
    assert law.shape == (B, 118)
    assert accu.shape == (B, 130)
    assert time_l.shape == (B, 12)
    print("KERNEL_OK")
</pallas_src>

<mosaic_0001>
module attributes {stable_mosaic.version = 11 : i64} {
  func.func @_emb_ln_kernel(%arg0: memref<16x128xf32, #tpu.memory_space<vmem>>, %arg1: memref<1x128xf32, #tpu.memory_space<vmem>>, %arg2: memref<1x128xf32, #tpu.memory_space<vmem>>, %arg3: memref<16x128xf32, #tpu.memory_space<vmem>>) attributes {dimension_semantics = [], scalar_prefetch = 0 : i64, scratch_operands = 0 : i64, tpu.core_type = #tpu.core_type<tc>} {
    %c0 = arith.constant 0 : index
    %c0_0 = arith.constant 0 : index
    %0 = vector.load %arg0[%c0, %c0_0] : memref<16x128xf32, #tpu.memory_space<vmem>>, vector<16x128xf32>
    %cst = arith.constant dense<0.000000e+00> : vector<16xf32>
    %1 = vector.multi_reduction <add>, %0, %cst [1] : vector<16x128xf32> to vector<16xf32>
    %2 = vector.shape_cast %1 : vector<16xf32> to vector<16x1xf32>
    %cst_1 = arith.constant 1.280000e+02 : f32
    %3 = vector.broadcast %cst_1 : f32 to vector<16x1xf32>
    %4 = arith.divf %2, %3 : vector<16x1xf32>
    %5 = arith.mulf %0, %0 : vector<16x128xf32>
    %cst_2 = arith.constant dense<0.000000e+00> : vector<16xf32>
    %6 = vector.multi_reduction <add>, %5, %cst_2 [1] : vector<16x128xf32> to vector<16xf32>
    %7 = vector.shape_cast %6 : vector<16xf32> to vector<16x1xf32>
    %cst_3 = arith.constant 1.280000e+02 : f32
    %8 = vector.broadcast %cst_3 : f32 to vector<16x1xf32>
    %9 = arith.divf %7, %8 : vector<16x1xf32>
    %10 = arith.mulf %4, %4 : vector<16x1xf32>
    %11 = arith.subf %9, %10 : vector<16x1xf32>
    %cst_4 = arith.constant 9.99999996E-13 : f32
    %12 = vector.broadcast %cst_4 : f32 to vector<16x1xf32>
    %13 = arith.addf %11, %12 : vector<16x1xf32>
    %14 = math.rsqrt %13 : vector<16x1xf32>
    %15 = vector.broadcast %4 : vector<16x1xf32> to vector<16x128xf32>
    %16 = arith.subf %0, %15 : vector<16x128xf32>
    %17 = vector.broadcast %14 : vector<16x1xf32> to vector<16x128xf32>
    %18 = arith.mulf %16, %17 : vector<16x128xf32>
    %c0_5 = arith.constant 0 : index
    %c0_6 = arith.constant 0 : index
    %19 = vector.load %arg1[%c0_5, %c0_6] : memref<1x128xf32, #tpu.memory_space<vmem>>, vector<1x128xf32>
    %20 = vector.broadcast %19 : vector<1x128xf32> to vector<16x128xf32>
    %21 = arith.mulf %18, %20 : vector<16x128xf32>
    %c0_7 = arith.constant 0 : index
    %c0_8 = arith.constant 0 : index
    %22 = vector.load %arg2[%c0_7, %c0_8] : memref<1x128xf32, #tpu.memory_space<vmem>>, vector<1x128xf32>
    %23 = vector.broadcast %22 : vector<1x128xf32> to vector<16x128xf32>
    %24 = arith.addf %21, %23 : vector<16x128xf32>
    %c0_9 = arith.constant 0 : index
    %c0_10 = arith.constant 0 : index
    %25 = vector.load %arg3[%c0_9, %c0_10] : memref<16x128xf32, #tpu.memory_space<vmem>>, vector<16x128xf32>
    tpu.vector_store %arg3[%c0_9, %c0_10], %24 {strides = array<i32>} : memref<16x128xf32, #tpu.memory_space<vmem>>, vector<16x128xf32>,
    return
  }
}

module attributes {stable_mosaic.version = 11 : i64} {
  func.func @_layer_kernel(%arg0: i32, %arg1: memref<8x128xf32, #tpu.memory_space<vmem>>, %arg2: memref<1x1x8xf32, #tpu.memory_space<vmem>>, %arg3: memref<128x384xbf16, #tpu.memory_space<vmem>>, %arg4: memref<1x384xf32, #tpu.memory_space<vmem>>, %arg5: memref<128x128xbf16, #tpu.memory_space<vmem>>, %arg6: memref<1x128xf32, #tpu.memory_space<vmem>>, %arg7: memref<1x128xf32, #tpu.memory_space<vmem>>, %arg8: memref<1x128xf32, #tpu.memory_space<vmem>>, %arg9: memref<128x256xbf16, #tpu.memory_space<vmem>>, %arg10: memref<1x256xf32, #tpu.memory_space<vmem>>, %arg11: memref<256x128xbf16, #tpu.memory_space<vmem>>, %arg12: memref<1x128xf32, #tpu.memory_space<vmem>>, %arg13: memref<1x128xf32, #tpu.memory_space<vmem>>, %arg14: memref<1x128xf32, #tpu.memory_space<vmem>>, %arg15: memref<8x128xf32, #tpu.memory_space<vmem>>, %arg16: memref<8x128xf32, #tpu.memory_space<vmem>>) attributes {dimension_semantics = [#tpu.dimension_semantics<parallel>], iteration_bounds = array<i64: 2>, scalar_prefetch = 0 : i64, scratch_operands = 1 : i64, tpu.core_type = #tpu.core_type<tc>, window_params = [{transform_indices = @transform_0, window_bounds = array<i64: 8, 128>}, {transform_indices = @transform_1, window_bounds = array<i64: 1, 1, 8>}, {pipeline_mode = #tpu.pipeline_mode<synchronous>, transform_indices = @transform_2, window_bounds = array<i64: 128, 384>}, {pipeline_mode = #tpu.pipeline_mode<synchronous>, transform_indices = @transform_3, window_bounds = array<i64: 1, 384>}, {pipeline_mode = #tpu.pipeline_mode<synchronous>, transform_indices = @transform_4, window_bounds = array<i64: 128, 128>}, {pipeline_mode = #tpu.pipeline_mode<synchronous>, transform_indices = @transform_5, window_bounds = array<i64: 1, 128>}, {pipeline_mode = #tpu.pipeline_mode<synchronous>, transform_indices = @transform_6, window_bounds = array<i64: 1, 128>}, {pipeline_mode = #tpu.pipeline_mode<synchronous>, transform_indices = @transform_7, window_bounds = array<i64: 1, 128>}, {pipeline_mode = #tpu.pipeline_mode<synchronous>, transform_indices = @transform_8, window_bounds = array<i64: 128, 256>}, {pipeline_mode = #tpu.pipeline_mode<synchronous>, transform_indices = @transform_9, window_bounds = array<i64: 1, 256>}, {pipeline_mode = #tpu.pipeline_mode<synchronous>, transform_indices = @transform_10, window_bounds = array<i64: 256, 128>}, {pipeline_mode = #tpu.pipeline_mode<synchronous>, transform_indices = @transform_11, window_bounds = array<i64: 1, 128>}, {pipeline_mode = #tpu.pipeline_mode<synchronous>, transform_indices = @transform_12, window_bounds = array<i64: 1, 128>}, {pipeline_mode = #tpu.pipeline_mode<synchronous>, transform_indices = @transform_13, window_bounds = array<i64: 1, 128>}, {transform_indices = @transform_14, window_bounds = array<i64: 8, 128>}]} {
    %c0 = arith.constant 0 : index
    %c0_0 = arith.constant 0 : index
    %0 = vector.load %arg1[%c0, %c0_0] : memref<8x128xf32, #tpu.memory_space<vmem>>, vector<8x128xf32>
    %1 = arith.truncf %0 : vector<8x128xf32> to vector<8x128xbf16>
    %c0_1 = arith.constant 0 : index
    %c0_2 = arith.constant 0 : index
    %2 = vector.load %arg3[%c0_1, %c0_2] : memref<128x384xbf16, #tpu.memory_space<vmem>>, vector<128x384xbf16>
    %cst = arith.constant dense<0.000000e+00> : vector<8x384xf32>
    %3 = tpu.matmul %1, %2, %cst {dimension_numbers = #tpu.dot_dimension_numbers<[1], [0], [0], [1], [0, 0, 1, 1], [], []>} : vector<8x128xbf16>, vector<128x384xbf16>, vector<8x384xf32> -> vector<8x384xf32>
    %c0_3 = arith.constant 0 : index
    %c0_4 = arith.constant 0 : index
    %4 = vector.load %arg4[%c0_3, %c0_4] : memref<1x384xf32, #tpu.memory_space<vmem>>, vector<1x384xf32>
    %5 = vector.broadcast %4 : vector<1x384xf32> to vector<8x384xf32>
    %6 = arith.addf %3, %5 : vector<8x384xf32>
    %c0_5 = arith.constant 0 : index
    %c0_6 = arith.constant 0 : index
    %c0_7 = arith.constant 0 : index
    %7 = vector.load %arg2[%c0_5, %c0_6, %c0_7] : memref<1x1x8xf32, #tpu.memory_space<vmem>>, vector<1x1x8xf32>
    %8 = vector.shape_cast %7 : vector<1x1x8xf32> to vector<1x8xf32>
    %9 = vector.extract_strided_slice %6 {offsets = [0, 0], sizes = [8, 64], strides = [1, 1]} : vector<8x384xf32> to vector<8x64xf32>
    %10 = arith.truncf %9 : vector<8x64xf32> to vector<8x64xbf16>
    %11 = vector.extract_strided_slice %6 {offsets = [0, 128], sizes = [8, 64], strides = [1, 1]} : vector<8x384xf32> to vector<8x64xf32>
    %12 = arith.truncf %11 : vector<8x64xf32> to vector<8x64xbf16>
    %13 = vector.extract_strided_slice %6 {offsets = [0, 256], sizes = [8, 64], strides = [1, 1]} : vector<8x384xf32> to vector<8x64xf32>
    %14 = arith.truncf %13 : vector<8x64xf32> to vector<8x64xbf16>
    %cst_8 = arith.constant dense<0.000000e+00> : vector<8x8xf32>
    %15 = tpu.matmul %10, %12, %cst_8 {dimension_numbers = #tpu.dot_dimension_numbers<[1], [1], [0], [0], [0, 0, 1, 0], [], []>} : vector<8x64xbf16>, vector<8x64xbf16>, vector<8x8xf32> -> vector<8x8xf32>
    %cst_9 = arith.constant 1.250000e-01 : f32
    %16 = vector.broadcast %cst_9 : f32 to vector<8x8xf32>
    %17 = arith.mulf %15, %16 : vector<8x8xf32>
    %18 = vector.broadcast %8 : vector<1x8xf32> to vector<8x8xf32>
    %19 = arith.addf %17, %18 : vector<8x8xf32>
    %cst_10 = arith.constant dense<0xFF800000> : vector<8xf32>
    %20 = vector.multi_reduction <maximumf>, %19, %cst_10 [1] : vector<8x8xf32> to vector<8xf32>
    %21 = vector.shape_cast %20 : vector<8xf32> to vector<8x1xf32>
    %22 = vector.broadcast %21 : vector<8x1xf32> to vector<8x8xf32>
    %23 = arith.subf %19, %22 : vector<8x8xf32>
    %24 = math.exp %23 : vector<8x8xf32>
    %cst_11 = arith.constant dense<0.000000e+00> : vector<8xf32>
    %25 = vector.multi_reduction <add>, %24, %cst_11 [1] : vector<8x8xf32> to vector<8xf32>
    %26 = vector.shape_cast %25 : vector<8xf32> to vector<8x1xf32>
    %27 = tpu.reciprocal %26 {approx = true} : vector<8x1xf32> -> vector<8x1xf32>
    %28 = vector.broadcast %27 : vector<8x1xf32> to vector<8x8xf32>
    %29 = arith.mulf %24, %28 : vector<8x8xf32>
    %30 = arith.truncf %29 : vector<8x8xf32> to vector<8x8xbf16>
    %cst_12 = arith.constant dense<0.000000e+00> : vector<8x64xf32>
    %31 = tpu.matmul %30, %14, %cst_12 {dimension_numbers = #tpu.dot_dimension_numbers<[1], [0], [0], [1], [0, 0, 1, 1], [], []>} : vector<8x8xbf16>, vector<8x64xbf16>, vector<8x64xf32> -> vector<8x64xf32>
    %c0_13 = arith.constant 0 : index
    %c0_14 = arith.constant 0 : index
    %32 = vector.load %arg16[%c0_13, %c0_14] : memref<8x128xf32, #tpu.memory_space<vmem>>, vector<8x64xf32>
    tpu.vector_store %arg16[%c0_13, %c0_14], %31 {strides = array<i32>} : memref<8x128xf32, #tpu.memory_space<vmem>>, vector<8x64xf32>,
    %33 = vector.extract_strided_slice %6 {offsets = [0, 64], sizes = [8, 64], strides = [1, 1]} : vector<8x384xf32> to vector<8x64xf32>
    %34 = arith.truncf %33 : vector<8x64xf32> to vector<8x64xbf16>
    %35 = vector.extract_strided_slice %6 {offsets = [0, 192], sizes = [8, 64], strides = [1, 1]} : vector<8x384xf32> to vector<8x64xf32>
    %36 = arith.truncf %35 : vector<8x64xf32> to vector<8x64xbf16>
    %37 = vector.extract_strided_slice %6 {offsets = [0, 320], sizes = [8, 64], strides = [1, 1]} : vector<8x384xf32> to vector<8x64xf32>
    %38 = arith.truncf %37 : vector<8x64xf32> to vector<8x64xbf16>
    %cst_15 = arith.constant dense<0.000000e+00> : vector<8x8xf32>
    %39 = tpu.matmul %34, %36, %cst_15 {dimension_numbers = #tpu.dot_dimension_numbers<[1], [1], [0], [0], [0, 0, 1, 0], [], []>} : vector<8x64xbf16>, vector<8x64xbf16>, vector<8x8xf32> -> vector<8x8xf32>
    %cst_16 = arith.constant 1.250000e-01 : f32
    %40 = vector.broadcast %cst_16 : f32 to vector<8x8xf32>
    %41 = arith.mulf %39, %40 : vector<8x8xf32>
    %42 = vector.broadcast %8 : vector<1x8xf32> to vector<8x8xf32>
    %43 = arith.addf %41, %42 : vector<8x8xf32>
    %cst_17 = arith.constant dense<0xFF800000> : vector<8xf32>
    %44 = vector.multi_reduction <maximumf>, %43, %cst_17 [1] : vector<8x8xf32> to vector<8xf32>
    %45 = vector.shape_cast %44 : vector<8xf32> to vector<8x1xf32>
    %46 = vector.broadcast %45 : vector<8x1xf32> to vector<8x8xf32>
    %47 = arith.subf %43, %46 : vector<8x8xf32>
    %48 = math.exp %47 : vector<8x8xf32>
    %cst_18 = arith.constant dense<0.000000e+00> : vector<8xf32>
    %49 = vector.multi_reduction <add>, %48, %cst_18 [1] : vector<8x8xf32> to vector<8xf32>
    %50 = vector.shape_cast %49 : vector<8xf32> to vector<8x1xf32>
    %51 = tpu.reciprocal %50 {approx = true} : vector<8x1xf32> -> vector<8x1xf32>
    %52 = vector.broadcast %51 : vector<8x1xf32> to vector<8x8xf32>
    %53 = arith.mulf %48, %52 : vector<8x8xf32>
    %54 = arith.truncf %53 : vector<8x8xf32> to vector<8x8xbf16>
    %cst_19 = arith.constant dense<0.000000e+00> : vector<8x64xf32>
    %55 = tpu.matmul %54, %38, %cst_19 {dimension_numbers = #tpu.dot_dimension_numbers<[1], [0], [0], [1], [0, 0, 1, 1], [], []>} : vector<8x8xbf16>, vector<8x64xbf16>, vector<8x64xf32> -> vector<8x64xf32>
    %c0_20 = arith.constant 0 : index
    %c64 = arith.constant 64 : index
    %56 = vector.load %arg16[%c0_20, %c64] : memref<8x128xf32, #tpu.memory_space<vmem>>, vector<8x64xf32>
    tpu.vector_store %arg16[%c0_20, %c64], %55 {strides = array<i32>} : memref<8x128xf32, #tpu.memory_space<vmem>>, vector<8x64xf32>,
    %c0_21 = arith.constant 0 : index
    %c0_22 = arith.constant 0 : index
    %57 = vector.load %arg16[%c0_21, %c0_22] : memref<8x128xf32, #tpu.memory_space<vmem>>, vector<8x128xf32>
    %58 = arith.truncf %57 : vector<8x128xf32> to vector<8x128xbf16>
    %c0_23 = arith.constant 0 : index
    %c0_24 = arith.constant 0 : index
    %59 = vector.load %arg5[%c0_23, %c0_24] : memref<128x128xbf16, #tpu.memory_space<vmem>>, vector<128x128xbf16>
    %cst_25 = arith.constant dense<0.000000e+00> : vector<8x128xf32>
    %60 = tpu.matmul %58, %59, %cst_25 {dimension_numbers = #tpu.dot_dimension_numbers<[1], [0], [0], [1], [0, 0, 1, 1], [], []>} : vector<8x128xbf16>, vector<128x128xbf16>, vector<8x128xf32> -> vector<8x128xf32>
    %c0_26 = arith.constant 0 : index
    %c0_27 = arith.constant 0 : index
    %61 = vector.load %arg6[%c0_26, %c0_27] : memref<1x128xf32, #tpu.memory_space<vmem>>, vector<1x128xf32>
    %62 = vector.broadcast %61 : vector<1x128xf32> to vector<8x128xf32>
    %63 = arith.addf %60, %62 : vector<8x128xf32>
    %64 = arith.addf %63, %0 : vector<8x128xf32>
    %cst_28 = arith.constant dense<0.000000e+00> : vector<8xf32>
    %65 = vector.multi_reduction <add>, %64, %cst_28 [1] : vector<8x128xf32> to vector<8xf32>
    %66 = vector.shape_cast %65 : vector<8xf32> to vector<8x1xf32>
    %cst_29 = arith.constant 1.280000e+02 : f32
    %67 = vector.broadcast %cst_29 : f32 to vector<8x1xf32>
    %68 = arith.divf %66, %67 : vector<8x1xf32>
    %69 = arith.mulf %64, %64 : vector<8x128xf32>
    %cst_30 = arith.constant dense<0.000000e+00> : vector<8xf32>
    %70 = vector.multi_reduction <add>, %69, %cst_30 [1] : vector<8x128xf32> to vector<8xf32>
    %71 = vector.shape_cast %70 : vector<8xf32> to vector<8x1xf32>
    %cst_31 = arith.constant 1.280000e+02 : f32
    %72 = vector.broadcast %cst_31 : f32 to vector<8x1xf32>
    %73 = arith.divf %71, %72 : vector<8x1xf32>
    %74 = arith.mulf %68, %68 : vector<8x1xf32>
    %75 = arith.subf %73, %74 : vector<8x1xf32>
    %76 = vector.broadcast %68 : vector<8x1xf32> to vector<8x128xf32>
    %77 = arith.subf %64, %76 : vector<8x128xf32>
    %cst_32 = arith.constant 9.99999996E-13 : f32
    %78 = vector.broadcast %cst_32 : f32 to vector<8x1xf32>
    %79 = arith.addf %75, %78 : vector<8x1xf32>
    %80 = math.rsqrt %79 : vector<8x1xf32>
    %81 = vector.broadcast %80 : vector<8x1xf32> to vector<8x128xf32>
    %82 = arith.mulf %77, %81 : vector<8x128xf32>
    %c0_33 = arith.constant 0 : index
    %c0_34 = arith.constant 0 : index
    %83 = vector.load %arg7[%c0_33, %c0_34] : memref<1x128xf32, #tpu.memory_space<vmem>>, vector<1x128xf32>
    %84 = vector.broadcast %83 : vector<1x128xf32> to vector<8x128xf32>
    %85 = arith.mulf %82, %84 : vector<8x128xf32>
    %c0_35 = arith.constant 0 : index
    %c0_36 = arith.constant 0 : index
    %86 = vector.load %arg8[%c0_35, %c0_36] : memref<1x128xf32, #tpu.memory_space<vmem>>, vector<1x128xf32>
    %87 = vector.broadcast %86 : vector<1x128xf32> to vector<8x128xf32>
    %88 = arith.addf %85, %87 : vector<8x128xf32>
    %89 = arith.truncf %88 : vector<8x128xf32> to vector<8x128xbf16>
    %c0_37 = arith.constant 0 : index
    %c0_38 = arith.constant 0 : index
    %90 = vector.load %arg9[%c0_37, %c0_38] : memref<128x256xbf16, #tpu.memory_space<vmem>>, vector<128x256xbf16>
    %cst_39 = arith.constant dense<0.000000e+00> : vector<8x256xf32>
    %91 = tpu.matmul %89, %90, %cst_39 {dimension_numbers = #tpu.dot_dimension_numbers<[1], [0], [0], [1], [0, 0, 1, 1], [], []>} : vector<8x128xbf16>, vector<128x256xbf16>, vector<8x256xf32> -> vector<8x256xf32>
    %c0_40 = arith.constant 0 : index
    %c0_41 = arith.constant 0 : index
    %92 = vector.load %arg10[%c0_40, %c0_41] : memref<1x256xf32, #tpu.memory_space<vmem>>, vector<1x256xf32>
    %93 = vector.broadcast %92 : vector<1x256xf32> to vector<8x256xf32>
    %94 = arith.addf %91, %93 : vector<8x256xf32>
    %cst_42 = arith.constant 5.000000e-01 : f32
    %95 = vector.broadcast %cst_42 : f32 to vector<8x256xf32>
    %96 = arith.mulf %95, %94 : vector<8x256xf32>
    %cst_43 = arith.constant 4.471500e-02 : f32
    %97 = vector.broadcast %cst_43 : f32 to vector<8x256xf32>
    %98 = arith.mulf %97, %94 : vector<8x256xf32>
    %99 = arith.mulf %98, %94 : vector<8x256xf32>
    %100 = arith.mulf %99, %94 : vector<8x256xf32>
    %101 = arith.addf %94, %100 : vector<8x256xf32>
    %cst_44 = arith.constant 0.797884583 : f32
    %102 = vector.broadcast %cst_44 : f32 to vector<8x256xf32>
    %103 = arith.mulf %102, %101 : vector<8x256xf32>
    %104 = math.tanh %103 : vector<8x256xf32>
    %cst_45 = arith.constant 1.000000e+00 : f32
    %105 = vector.broadcast %cst_45 : f32 to vector<8x256xf32>
    %106 = arith.addf %105, %104 : vector<8x256xf32>
    %107 = arith.mulf %96, %106 : vector<8x256xf32>
    %108 = arith.truncf %107 : vector<8x256xf32> to vector<8x256xbf16>
    %c0_46 = arith.constant 0 : index
    %c0_47 = arith.constant 0 : index
    %109 = vector.load %arg11[%c0_46, %c0_47] : memref<256x128xbf16, #tpu.memory_space<vmem>>, vector<256x128xbf16>
    %cst_48 = arith.constant dense<0.000000e+00> : vector<8x128xf32>
    %110 = tpu.matmul %108, %109, %cst_48 {dimension_numbers = #tpu.dot_dimension_numbers<[1], [0], [0], [1], [0, 0, 1, 1], [], []>} : vector<8x256xbf16>, vector<256x128xbf16>, vector<8x128xf32> -> vector<8x128xf32>
    %c0_49 = arith.constant 0 : index
    %c0_50 = arith.constant 0 : index
    %111 = vector.load %arg12[%c0_49, %c0_50] : memref<1x128xf32, #tpu.memory_space<vmem>>, vector<1x128xf32>
    %112 = vector.broadcast %111 : vector<1x128xf32> to vector<8x128xf32>
    %113 = arith.addf %110, %112 : vector<8x128xf32>
    %114 = arith.addf %113, %88 : vector<8x128xf32>
    %cst_51 = arith.constant dense<0.000000e+00> : vector<8xf32>
    %115 = vector.multi_reduction <add>, %114, %cst_51 [1] : vector<8x128xf32> to vector<8xf32>
    %116 = vector.shape_cast %115 : vector<8xf32> to vector<8x1xf32>
    %cst_52 = arith.constant 1.280000e+02 : f32
    %117 = vector.broadcast %cst_52 : f32 to vector<8x1xf32>
    %118 = arith.divf %116, %117 : vector<8x1xf32>
    %119 = arith.mulf %114, %114 : vector<8x128xf32>
    %cst_53 = arith.constant dense<0.000000e+00> : vector<8xf32>
    %120 = vector.multi_reduction <add>, %119, %cst_53 [1] : vector<8x128xf32> to vector<8xf32>
    %121 = vector.shape_cast %120 : vector<8xf32> to vector<8x1xf32>
    %cst_54 = arith.constant 1.280000e+02 : f32
    %122 = vector.broadcast %cst_54 : f32 to vector<8x1xf32>
    %123 = arith.divf %121, %122 : vector<8x1xf32>
    %124 = arith.mulf %118, %118 : vector<8x1xf32>
    %125 = arith.subf %123, %124 : vector<8x1xf32>
    %126 = vector.broadcast %118 : vector<8x1xf32> to vector<8x128xf32>
    %127 = arith.subf %114, %126 : vector<8x128xf32>
    %cst_55 = arith.constant 9.99999996E-13 : f32
    %128 = vector.broadcast %cst_55 : f32 to vector<8x1xf32>
    %129 = arith.addf %125, %128 : vector<8x1xf32>
    %130 = math.rsqrt %129 : vector<8x1xf32>
    %131 = vector.broadcast %130 : vector<8x1xf32> to vector<8x128xf32>
    %132 = arith.mulf %127, %131 : vector<8x128xf32>
    %c0_56 = arith.constant 0 : index
    %c0_57 = arith.constant 0 : index
    %133 = vector.load %arg13[%c0_56, %c0_57] : memref<1x128xf32, #tpu.memory_space<vmem>>, vector<1x128xf32>
    %134 = vector.broadcast %133 : vector<1x128xf32> to vector<8x128xf32>
    %135 = arith.mulf %132, %134 : vector<8x128xf32>
    %c0_58 = arith.constant 0 : index
    %c0_59 = arith.constant 0 : index
    %136 = vector.load %arg14[%c0_58, %c0_59] : memref<1x128xf32, #tpu.memory_space<vmem>>, vector<1x128xf32>
    %137 = vector.broadcast %136 : vector<1x128xf32> to vector<8x128xf32>
    %138 = arith.addf %135, %137 : vector<8x128xf32>
    %c0_60 = arith.constant 0 : index
    %c0_61 = arith.constant 0 : index
    %139 = vector.load %arg15[%c0_60, %c0_61] : memref<8x128xf32, #tpu.memory_space<vmem>>, vector<8x128xf32>
    tpu.vector_store %arg15[%c0_60, %c0_61], %138 {strides = array<i32>} : memref<8x128xf32, #tpu.memory_space<vmem>>, vector<8x128xf32>,
    return
  }
  func.func @transform_0(%arg0: i32) -> (i32, i32) {
    %c0_i32 = arith.constant 0 : i32
    %c0_i32_0 = arith.constant 0 : i32
    return %arg0, %c0_i32 : i32, i32
  }
  func.func @transform_1(%arg0: i32) -> (i32, i32, i32) {
    %c0_i32 = arith.constant 0 : i32
    %c0_i32_0 = arith.constant 0 : i32
    %c0_i32_1 = arith.constant 0 : i32
    return %arg0, %c0_i32, %c0_i32_0 : i32, i32, i32
  }
  func.func @transform_2(%arg0: i32) -> (i32, i32) {
    %c0_i32 = arith.constant 0 : i32
    %c0_i32_0 = arith.constant 0 : i32
    %c0_i32_1 = arith.constant 0 : i32
    return %c0_i32, %c0_i32_0 : i32, i32
  }
  func.func @transform_3(%arg0: i32) -> (i32, i32) {
    %c0_i32 = arith.constant 0 : i32
    %c0_i32_0 = arith.constant 0 : i32
    %c0_i32_1 = arith.constant 0 : i32
    return %c0_i32, %c0_i32_0 : i32, i32
  }
  func.func @transform_4(%arg0: i32) -> (i32, i32) {
    %c0_i32 = arith.constant 0 : i32
    %c0_i32_0 = arith.constant 0 : i32
    %c0_i32_1 = arith.constant 0 : i32
    return %c0_i32, %c0_i32_0 : i32, i32
  }
  func.func @transform_5(%arg0: i32) -> (i32, i32) {
    %c0_i32 = arith.constant 0 : i32
    %c0_i32_0 = arith.constant 0 : i32
    %c0_i32_1 = arith.constant 0 : i32
    return %c0_i32, %c0_i32_0 : i32, i32
  }
  func.func @transform_6(%arg0: i32) -> (i32, i32) {
    %c0_i32 = arith.constant 0 : i32
    %c0_i32_0 = arith.constant 0 : i32
    %c0_i32_1 = arith.constant 0 : i32
    return %c0_i32, %c0_i32_0 : i32, i32
  }
  func.func @transform_7(%arg0: i32) -> (i32, i32) {
    %c0_i32 = arith.constant 0 : i32
    %c0_i32_0 = arith.constant 0 : i32
    %c0_i32_1 = arith.constant 0 : i32
    return %c0_i32, %c0_i32_0 : i32, i32
  }
  func.func @transform_8(%arg0: i32) -> (i32, i32) {
    %c0_i32 = arith.constant 0 : i32
    %c0_i32_0 = arith.constant 0 : i32
    %c0_i32_1 = arith.constant 0 : i32
    return %c0_i32, %c0_i32_0 : i32, i32
  }
  func.func @transform_9(%arg0: i32) -> (i32, i32) {
    %c0_i32 = arith.constant 0 : i32
    %c0_i32_0 = arith.constant 0 : i32
    %c0_i32_1 = arith.constant 0 : i32
    return %c0_i32, %c0_i32_0 : i32, i32
  }
  func.func @transform_10(%arg0: i32) -> (i32, i32) {
    %c0_i32 = arith.constant 0 : i32
    %c0_i32_0 = arith.constant 0 : i32
    %c0_i32_1 = arith.constant 0 : i32
    return %c0_i32, %c0_i32_0 : i32, i32
  }
  func.func @transform_11(%arg0: i32) -> (i32, i32) {
    %c0_i32 = arith.constant 0 : i32
    %c0_i32_0 = arith.constant 0 : i32
    %c0_i32_1 = arith.constant 0 : i32
    return %c0_i32, %c0_i32_0 : i32, i32
  }
  func.func @transform_12(%arg0: i32) -> (i32, i32) {
    %c0_i32 = arith.constant 0 : i32
    %c0_i32_0 = arith.constant 0 : i32
    %c0_i32_1 = arith.constant 0 : i32
    return %c0_i32, %c0_i32_0 : i32, i32
  }
  func.func @transform_13(%arg0: i32) -> (i32, i32) {
    %c0_i32 = arith.constant 0 : i32
    %c0_i32_0 = arith.constant 0 : i32
    %c0_i32_1 = arith.constant 0 : i32
    return %c0_i32, %c0_i32_0 : i32, i32
  }
  func.func @transform_14(%arg0: i32) -> (i32, i32) {
    %c0_i32 = arith.constant 0 : i32
    %c0_i32_0 = arith.constant 0 : i32
    return %arg0, %c0_i32 : i32, i32
  }
}

module attributes {stable_mosaic.version = 11 : i64} {
  func.func @_layer_kernel(%arg0: i32, %arg1: memref<8x128xf32, #tpu.memory_space<vmem>>, %arg2: memref<1x1x8xf32, #tpu.memory_space<vmem>>, %arg3: memref<128x384xbf16, #tpu.memory_space<vmem>>, %arg4: memref<1x384xf32, #tpu.memory_space<vmem>>, %arg5: memref<128x128xbf16, #tpu.memory_space<vmem>>, %arg6: memref<1x128xf32, #tpu.memory_space<vmem>>, %arg7: memref<1x128xf32, #tpu.memory_space<vmem>>, %arg8: memref<1x128xf32, #tpu.memory_space<vmem>>, %arg9: memref<128x256xbf16, #tpu.memory_space<vmem>>, %arg10: memref<1x256xf32, #tpu.memory_space<vmem>>, %arg11: memref<256x128xbf16, #tpu.memory_space<vmem>>, %arg12: memref<1x128xf32, #tpu.memory_space<vmem>>, %arg13: memref<1x128xf32, #tpu.memory_space<vmem>>, %arg14: memref<1x128xf32, #tpu.memory_space<vmem>>, %arg15: memref<8x128xf32, #tpu.memory_space<vmem>>, %arg16: memref<8x128xf32, #tpu.memory_space<vmem>>) attributes {dimension_semantics = [#tpu.dimension_semantics<parallel>], iteration_bounds = array<i64: 2>, scalar_prefetch = 0 : i64, scratch_operands = 1 : i64, tpu.core_type = #tpu.core_type<tc>, window_params = [{transform_indices = @transform_0, window_bounds = array<i64: 8, 128>}, {transform_indices = @transform_1, window_bounds = array<i64: 1, 1, 8>}, {pipeline_mode = #tpu.pipeline_mode<synchronous>, transform_indices = @transform_2, window_bounds = array<i64: 128, 384>}, {pipeline_mode = #tpu.pipeline_mode<synchronous>, transform_indices = @transform_3, window_bounds = array<i64: 1, 384>}, {pipeline_mode = #tpu.pipeline_mode<synchronous>, transform_indices = @transform_4, window_bounds = array<i64: 128, 128>}, {pipeline_mode = #tpu.pipeline_mode<synchronous>, transform_indices = @transform_5, window_bounds = array<i64: 1, 128>}, {pipeline_mode = #tpu.pipeline_mode<synchronous>, transform_indices = @transform_6, window_bounds = array<i64: 1, 128>}, {pipeline_mode = #tpu.pipeline_mode<synchronous>, transform_indices = @transform_7, window_bounds = array<i64: 1, 128>}, {pipeline_mode = #tpu.pipeline_mode<synchronous>, transform_indices = @transform_8, window_bounds = array<i64: 128, 256>}, {pipeline_mode = #tpu.pipeline_mode<synchronous>, transform_indices = @transform_9, window_bounds = array<i64: 1, 256>}, {pipeline_mode = #tpu.pipeline_mode<synchronous>, transform_indices = @transform_10, window_bounds = array<i64: 256, 128>}, {pipeline_mode = #tpu.pipeline_mode<synchronous>, transform_indices = @transform_11, window_bounds = array<i64: 1, 128>}, {pipeline_mode = #tpu.pipeline_mode<synchronous>, transform_indices = @transform_12, window_bounds = array<i64: 1, 128>}, {pipeline_mode = #tpu.pipeline_mode<synchronous>, transform_indices = @transform_13, window_bounds = array<i64: 1, 128>}, {transform_indices = @transform_14, window_bounds = array<i64: 8, 128>}]} {
    %c0 = arith.constant 0 : index
    %c0_0 = arith.constant 0 : index
    %0 = vector.load %arg1[%c0, %c0_0] : memref<8x128xf32, #tpu.memory_space<vmem>>, vector<8x128xf32>
    %1 = arith.truncf %0 : vector<8x128xf32> to vector<8x128xbf16>
    %c0_1 = arith.constant 0 : index
    %c0_2 = arith.constant 0 : index
    %2 = vector.load %arg3[%c0_1, %c0_2] : memref<128x384xbf16, #tpu.memory_space<vmem>>, vector<128x384xbf16>
    %cst = arith.constant dense<0.000000e+00> : vector<8x384xf32>
    %3 = tpu.matmul %1, %2, %cst {dimension_numbers = #tpu.dot_dimension_numbers<[1], [0], [0], [1], [0, 0, 1, 1], [], []>} : vector<8x128xbf16>, vector<128x384xbf16>, vector<8x384xf32> -> vector<8x384xf32>
    %c0_3 = arith.constant 0 : index
    %c0_4 = arith.constant 0 : index
    %4 = vector.load %arg4[%c0_3, %c0_4] : memref<1x384xf32, #tpu.memory_space<vmem>>, vector<1x384xf32>
    %5 = vector.broadcast %4 : vector<1x384xf32> to vector<8x384xf32>
    %6 = arith.addf %3, %5 : vector<8x384xf32>
    %c0_5 = arith.constant 0 : index
    %c0_6 = arith.constant 0 : index
    %c0_7 = arith.constant 0 : index
    %7 = vector.load %arg2[%c0_5, %c0_6, %c0_7] : memref<1x1x8xf32, #tpu.memory_space<vmem>>, vector<1x1x8xf32>
    %8 = vector.shape_cast %7 : vector<1x1x8xf32> to vector<1x8xf32>
    %9 = vector.extract_strided_slice %6 {offsets = [0, 0], sizes = [8, 64], strides = [1, 1]} : vector<8x384xf32> to vector<8x64xf32>
    %10 = arith.truncf %9 : vector<8x64xf32> to vector<8x64xbf16>
    %11 = vector.extract_strided_slice %6 {offsets = [0, 128], sizes = [8, 64], strides = [1, 1]} : vector<8x384xf32> to vector<8x64xf32>
    %12 = arith.truncf %11 : vector<8x64xf32> to vector<8x64xbf16>
    %13 = vector.extract_strided_slice %6 {offsets = [0, 256], sizes = [8, 64], strides = [1, 1]} : vector<8x384xf32> to vector<8x64xf32>
    %14 = arith.truncf %13 : vector<8x64xf32> to vector<8x64xbf16>
    %cst_8 = arith.constant dense<0.000000e+00> : vector<8x8xf32>
    %15 = tpu.matmul %10, %12, %cst_8 {dimension_numbers = #tpu.dot_dimension_numbers<[1], [1], [0], [0], [0, 0, 1, 0], [], []>} : vector<8x64xbf16>, vector<8x64xbf16>, vector<8x8xf32> -> vector<8x8xf32>
    %cst_9 = arith.constant 1.250000e-01 : f32
    %16 = vector.broadcast %cst_9 : f32 to vector<8x8xf32>
    %17 = arith.mulf %15, %16 : vector<8x8xf32>
    %18 = vector.broadcast %8 : vector<1x8xf32> to vector<8x8xf32>
    %19 = arith.addf %17, %18 : vector<8x8xf32>
    %cst_10 = arith.constant dense<0xFF800000> : vector<8xf32>
    %20 = vector.multi_reduction <maximumf>, %19, %cst_10 [1] : vector<8x8xf32> to vector<8xf32>
    %21 = vector.shape_cast %20 : vector<8xf32> to vector<8x1xf32>
    %22 = vector.broadcast %21 : vector<8x1xf32> to vector<8x8xf32>
    %23 = arith.subf %19, %22 : vector<8x8xf32>
    %24 = math.exp %23 : vector<8x8xf32>
    %cst_11 = arith.constant dense<0.000000e+00> : vector<8xf32>
    %25 = vector.multi_reduction <add>, %24, %cst_11 [1] : vector<8x8xf32> to vector<8xf32>
    %26 = vector.shape_cast %25 : vector<8xf32> to vector<8x1xf32>
    %27 = tpu.reciprocal %26 {approx = true} : vector<8x1xf32> -> vector<8x1xf32>
    %28 = vector.broadcast %27 : vector<8x1xf32> to vector<8x8xf32>
    %29 = arith.mulf %24, %28 : vector<8x8xf32>
    %30 = arith.truncf %29 : vector<8x8xf32> to vector<8x8xbf16>
    %cst_12 = arith.constant dense<0.000000e+00> : vector<8x64xf32>
    %31 = tpu.matmul %30, %14, %cst_12 {dimension_numbers = #tpu.dot_dimension_numbers<[1], [0], [0], [1], [0, 0, 1, 1], [], []>} : vector<8x8xbf16>, vector<8x64xbf16>, vector<8x64xf32> -> vector<8x64xf32>
    %c0_13 = arith.constant 0 : index
    %c0_14 = arith.constant 0 : index
    %32 = vector.load %arg16[%c0_13, %c0_14] : memref<8x128xf32, #tpu.memory_space<vmem>>, vector<8x64xf32>
    tpu.vector_store %arg16[%c0_13, %c0_14], %31 {strides = array<i32>} : memref<8x128xf32, #tpu.memory_space<vmem>>, vector<8x64xf32>,
    %33 = vector.extract_strided_slice %6 {offsets = [0, 64], sizes = [8, 64], strides = [1, 1]} : vector<8x384xf32> to vector<8x64xf32>
    %34 = arith.truncf %33 : vector<8x64xf32> to vector<8x64xbf16>
    %35 = vector.extract_strided_slice %6 {offsets = [0, 192], sizes = [8, 64], strides = [1, 1]} : vector<8x384xf32> to vector<8x64xf32>
    %36 = arith.truncf %35 : vector<8x64xf32> to vector<8x64xbf16>
    %37 = vector.extract_strided_slice %6 {offsets = [0, 320], sizes = [8, 64], strides = [1, 1]} : vector<8x384xf32> to vector<8x64xf32>
    %38 = arith.truncf %37 : vector<8x64xf32> to vector<8x64xbf16>
    %cst_15 = arith.constant dense<0.000000e+00> : vector<8x8xf32>
    %39 = tpu.matmul %34, %36, %cst_15 {dimension_numbers = #tpu.dot_dimension_numbers<[1], [1], [0], [0], [0, 0, 1, 0], [], []>} : vector<8x64xbf16>, vector<8x64xbf16>, vector<8x8xf32> -> vector<8x8xf32>
    %cst_16 = arith.constant 1.250000e-01 : f32
    %40 = vector.broadcast %cst_16 : f32 to vector<8x8xf32>
    %41 = arith.mulf %39, %40 : vector<8x8xf32>
    %42 = vector.broadcast %8 : vector<1x8xf32> to vector<8x8xf32>
    %43 = arith.addf %41, %42 : vector<8x8xf32>
    %cst_17 = arith.constant dense<0xFF800000> : vector<8xf32>
    %44 = vector.multi_reduction <maximumf>, %43, %cst_17 [1] : vector<8x8xf32> to vector<8xf32>
    %45 = vector.shape_cast %44 : vector<8xf32> to vector<8x1xf32>
    %46 = vector.broadcast %45 : vector<8x1xf32> to vector<8x8xf32>
    %47 = arith.subf %43, %46 : vector<8x8xf32>
    %48 = math.exp %47 : vector<8x8xf32>
    %cst_18 = arith.constant dense<0.000000e+00> : vector<8xf32>
    %49 = vector.multi_reduction <add>, %48, %cst_18 [1] : vector<8x8xf32> to vector<8xf32>
    %50 = vector.shape_cast %49 : vector<8xf32> to vector<8x1xf32>
    %51 = tpu.reciprocal %50 {approx = true} : vector<8x1xf32> -> vector<8x1xf32>
    %52 = vector.broadcast %51 : vector<8x1xf32> to vector<8x8xf32>
    %53 = arith.mulf %48, %52 : vector<8x8xf32>
    %54 = arith.truncf %53 : vector<8x8xf32> to vector<8x8xbf16>
    %cst_19 = arith.constant dense<0.000000e+00> : vector<8x64xf32>
    %55 = tpu.matmul %54, %38, %cst_19 {dimension_numbers = #tpu.dot_dimension_numbers<[1], [0], [0], [1], [0, 0, 1, 1], [], []>} : vector<8x8xbf16>, vector<8x64xbf16>, vector<8x64xf32> -> vector<8x64xf32>
    %c0_20 = arith.constant 0 : index
    %c64 = arith.constant 64 : index
    %56 = vector.load %arg16[%c0_20, %c64] : memref<8x128xf32, #tpu.memory_space<vmem>>, vector<8x64xf32>
    tpu.vector_store %arg16[%c0_20, %c64], %55 {strides = array<i32>} : memref<8x128xf32, #tpu.memory_space<vmem>>, vector<8x64xf32>,
    %c0_21 = arith.constant 0 : index
    %c0_22 = arith.constant 0 : index
    %57 = vector.load %arg16[%c0_21, %c0_22] : memref<8x128xf32, #tpu.memory_space<vmem>>, vector<8x128xf32>
    %58 = arith.truncf %57 : vector<8x128xf32> to vector<8x128xbf16>
    %c0_23 = arith.constant 0 : index
    %c0_24 = arith.constant 0 : index
    %59 = vector.load %arg5[%c0_23, %c0_24] : memref<128x128xbf16, #tpu.memory_space<vmem>>, vector<128x128xbf16>
    %cst_25 = arith.constant dense<0.000000e+00> : vector<8x128xf32>
    %60 = tpu.matmul %58, %59, %cst_25 {dimension_numbers = #tpu.dot_dimension_numbers<[1], [0], [0], [1], [0, 0, 1, 1], [], []>} : vector<8x128xbf16>, vector<128x128xbf16>, vector<8x128xf32> -> vector<8x128xf32>
    %c0_26 = arith.constant 0 : index
    %c0_27 = arith.constant 0 : index
    %61 = vector.load %arg6[%c0_26, %c0_27] : memref<1x128xf32, #tpu.memory_space<vmem>>, vector<1x128xf32>
    %62 = vector.broadcast %61 : vector<1x128xf32> to vector<8x128xf32>
    %63 = arith.addf %60, %62 : vector<8x128xf32>
    %64 = arith.addf %63, %0 : vector<8x128xf32>
    %cst_28 = arith.constant dense<0.000000e+00> : vector<8xf32>
    %65 = vector.multi_reduction <add>, %64, %cst_28 [1] : vector<8x128xf32> to vector<8xf32>
    %66 = vector.shape_cast %65 : vector<8xf32> to vector<8x1xf32>
    %cst_29 = arith.constant 1.280000e+02 : f32
    %67 = vector.broadcast %cst_29 : f32 to vector<8x1xf32>
    %68 = arith.divf %66, %67 : vector<8x1xf32>
    %69 = arith.mulf %64, %64 : vector<8x128xf32>
    %cst_30 = arith.constant dense<0.000000e+00> : vector<8xf32>
    %70 = vector.multi_reduction <add>, %69, %cst_30 [1] : vector<8x128xf32> to vector<8xf32>
    %71 = vector.shape_cast %70 : vector<8xf32> to vector<8x1xf32>
    %cst_31 = arith.constant 1.280000e+02 : f32
    %72 = vector.broadcast %cst_31 : f32 to vector<8x1xf32>
    %73 = arith.divf %71, %72 : vector<8x1xf32>
    %74 = arith.mulf %68, %68 : vector<8x1xf32>
    %75 = arith.subf %73, %74 : vector<8x1xf32>
    %76 = vector.broadcast %68 : vector<8x1xf32> to vector<8x128xf32>
    %77 = arith.subf %64, %76 : vector<8x128xf32>
    %cst_32 = arith.constant 9.99999996E-13 : f32
    %78 = vector.broadcast %cst_32 : f32 to vector<8x1xf32>
    %79 = arith.addf %75, %78 : vector<8x1xf32>
    %80 = math.rsqrt %79 : vector<8x1xf32>
    %81 = vector.broadcast %80 : vector<8x1xf32> to vector<8x128xf32>
    %82 = arith.mulf %77, %81 : vector<8x128xf32>
    %c0_33 = arith.constant 0 : index
    %c0_34 = arith.constant 0 : index
    %83 = vector.load %arg7[%c0_33, %c0_34] : memref<1x128xf32, #tpu.memory_space<vmem>>, vector<1x128xf32>
    %84 = vector.broadcast %83 : vector<1x128xf32> to vector<8x128xf32>
    %85 = arith.mulf %82, %84 : vector<8x128xf32>
    %c0_35 = arith.constant 0 : index
    %c0_36 = arith.constant 0 : index
    %86 = vector.load %arg8[%c0_35, %c0_36] : memref<1x128xf32, #tpu.memory_space<vmem>>, vector<1x128xf32>
    %87 = vector.broadcast %86 : vector<1x128xf32> to vector<8x128xf32>
    %88 = arith.addf %85, %87 : vector<8x128xf32>
    %89 = arith.truncf %88 : vector<8x128xf32> to vector<8x128xbf16>
    %c0_37 = arith.constant 0 : index
    %c0_38 = arith.constant 0 : index
    %90 = vector.load %arg9[%c0_37, %c0_38] : memref<128x256xbf16, #tpu.memory_space<vmem>>, vector<128x256xbf16>
    %cst_39 = arith.constant dense<0.000000e+00> : vector<8x256xf32>
    %91 = tpu.matmul %89, %90, %cst_39 {dimension_numbers = #tpu.dot_dimension_numbers<[1], [0], [0], [1], [0, 0, 1, 1], [], []>} : vector<8x128xbf16>, vector<128x256xbf16>, vector<8x256xf32> -> vector<8x256xf32>
    %c0_40 = arith.constant 0 : index
    %c0_41 = arith.constant 0 : index
    %92 = vector.load %arg10[%c0_40, %c0_41] : memref<1x256xf32, #tpu.memory_space<vmem>>, vector<1x256xf32>
    %93 = vector.broadcast %92 : vector<1x256xf32> to vector<8x256xf32>
    %94 = arith.addf %91, %93 : vector<8x256xf32>
    %cst_42 = arith.constant 5.000000e-01 : f32
    %95 = vector.broadcast %cst_42 : f32 to vector<8x256xf32>
    %96 = arith.mulf %95, %94 : vector<8x256xf32>
    %cst_43 = arith.constant 4.471500e-02 : f32
    %97 = vector.broadcast %cst_43 : f32 to vector<8x256xf32>
    %98 = arith.mulf %97, %94 : vector<8x256xf32>
    %99 = arith.mulf %98, %94 : vector<8x256xf32>
    %100 = arith.mulf %99, %94 : vector<8x256xf32>
    %101 = arith.addf %94, %100 : vector<8x256xf32>
    %cst_44 = arith.constant 0.797884583 : f32
    %102 = vector.broadcast %cst_44 : f32 to vector<8x256xf32>
    %103 = arith.mulf %102, %101 : vector<8x256xf32>
    %104 = math.tanh %103 : vector<8x256xf32>
    %cst_45 = arith.constant 1.000000e+00 : f32
    %105 = vector.broadcast %cst_45 : f32 to vector<8x256xf32>
    %106 = arith.addf %105, %104 : vector<8x256xf32>
    %107 = arith.mulf %96, %106 : vector<8x256xf32>
    %108 = arith.truncf %107 : vector<8x256xf32> to vector<8x256xbf16>
    %c0_46 = arith.constant 0 : index
    %c0_47 = arith.constant 0 : index
    %109 = vector.load %arg11[%c0_46, %c0_47] : memref<256x128xbf16, #tpu.memory_space<vmem>>, vector<256x128xbf16>
    %cst_48 = arith.constant dense<0.000000e+00> : vector<8x128xf32>
    %110 = tpu.matmul %108, %109, %cst_48 {dimension_numbers = #tpu.dot_dimension_numbers<[1], [0], [0], [1], [0, 0, 1, 1], [], []>} : vector<8x256xbf16>, vector<256x128xbf16>, vector<8x128xf32> -> vector<8x128xf32>
    %c0_49 = arith.constant 0 : index
    %c0_50 = arith.constant 0 : index
    %111 = vector.load %arg12[%c0_49, %c0_50] : memref<1x128xf32, #tpu.memory_space<vmem>>, vector<1x128xf32>
    %112 = vector.broadcast %111 : vector<1x128xf32> to vector<8x128xf32>
    %113 = arith.addf %110, %112 : vector<8x128xf32>
    %114 = arith.addf %113, %88 : vector<8x128xf32>
    %cst_51 = arith.constant dense<0.000000e+00> : vector<8xf32>
    %115 = vector.multi_reduction <add>, %114, %cst_51 [1] : vector<8x128xf32> to vector<8xf32>
    %116 = vector.shape_cast %115 : vector<8xf32> to vector<8x1xf32>
    %cst_52 = arith.constant 1.280000e+02 : f32
    %117 = vector.broadcast %cst_52 : f32 to vector<8x1xf32>
    %118 = arith.divf %116, %117 : vector<8x1xf32>
    %119 = arith.mulf %114, %114 : vector<8x128xf32>
    %cst_53 = arith.constant dense<0.000000e+00> : vector<8xf32>
    %120 = vector.multi_reduction <add>, %119, %cst_53 [1] : vector<8x128xf32> to vector<8xf32>
    %121 = vector.shape_cast %120 : vector<8xf32> to vector<8x1xf32>
    %cst_54 = arith.constant 1.280000e+02 : f32
    %122 = vector.broadcast %cst_54 : f32 to vector<8x1xf32>
    %123 = arith.divf %121, %122 : vector<8x1xf32>
    %124 = arith.mulf %118, %118 : vector<8x1xf32>
    %125 = arith.subf %123, %124 : vector<8x1xf32>
    %126 = vector.broadcast %118 : vector<8x1xf32> to vector<8x128xf32>
    %127 = arith.subf %114, %126 : vector<8x128xf32>
    %cst_55 = arith.constant 9.99999996E-13 : f32
    %128 = vector.broadcast %cst_55 : f32 to vector<8x1xf32>
    %129 = arith.addf %125, %128 : vector<8x1xf32>
    %130 = math.rsqrt %129 : vector<8x1xf32>
    %131 = vector.broadcast %130 : vector<8x1xf32> to vector<8x128xf32>
    %132 = arith.mulf %127, %131 : vector<8x128xf32>
    %c0_56 = arith.constant 0 : index
    %c0_57 = arith.constant 0 : index
    %133 = vector.load %arg13[%c0_56, %c0_57] : memref<1x128xf32, #tpu.memory_space<vmem>>, vector<1x128xf32>
    %134 = vector.broadcast %133 : vector<1x128xf32> to vector<8x128xf32>
    %135 = arith.mulf %132, %134 : vector<8x128xf32>
    %c0_58 = arith.constant 0 : index
    %c0_59 = arith.constant 0 : index
    %136 = vector.load %arg14[%c0_58, %c0_59] : memref<1x128xf32, #tpu.memory_space<vmem>>, vector<1x128xf32>
    %137 = vector.broadcast %136 : vector<1x128xf32> to vector<8x128xf32>
    %138 = arith.addf %135, %137 : vector<8x128xf32>
    %c0_60 = arith.constant 0 : index
    %c0_61 = arith.constant 0 : index
    %139 = vector.load %arg15[%c0_60, %c0_61] : memref<8x128xf32, #tpu.memory_space<vmem>>, vector<8x128xf32>
    tpu.vector_store %arg15[%c0_60, %c0_61], %138 {strides = array<i32>} : memref<8x128xf32, #tpu.memory_space<vmem>>, vector<8x128xf32>,
    return
  }
  func.func @transform_0(%arg0: i32) -> (i32, i32) {
    %c0_i32 = arith.constant 0 : i32
    %c0_i32_0 = arith.constant 0 : i32
    return %arg0, %c0_i32 : i32, i32
  }
  func.func @transform_1(%arg0: i32) -> (i32, i32, i32) {
    %c0_i32 = arith.constant 0 : i32
    %c0_i32_0 = arith.constant 0 : i32
    %c0_i32_1 = arith.constant 0 : i32
    return %arg0, %c0_i32, %c0_i32_0 : i32, i32, i32
  }
  func.func @transform_2(%arg0: i32) -> (i32, i32) {
    %c0_i32 = arith.constant 0 : i32
    %c0_i32_0 = arith.constant 0 : i32
    %c0_i32_1 = arith.constant 0 : i32
    return %c0_i32, %c0_i32_0 : i32, i32
  }
  func.func @transform_3(%arg0: i32) -> (i32, i32) {
    %c0_i32 = arith.constant 0 : i32
    %c0_i32_0 = arith.constant 0 : i32
    %c0_i32_1 = arith.constant 0 : i32
    return %c0_i32, %c0_i32_0 : i32, i32
  }
  func.func @transform_4(%arg0: i32) -> (i32, i32) {
    %c0_i32 = arith.constant 0 : i32
    %c0_i32_0 = arith.constant 0 : i32
    %c0_i32_1 = arith.constant 0 : i32
    return %c0_i32, %c0_i32_0 : i32, i32
  }
  func.func @transform_5(%arg0: i32) -> (i32, i32) {
    %c0_i32 = arith.constant 0 : i32
    %c0_i32_0 = arith.constant 0 : i32
    %c0_i32_1 = arith.constant 0 : i32
    return %c0_i32, %c0_i32_0 : i32, i32
  }
  func.func @transform_6(%arg0: i32) -> (i32, i32) {
    %c0_i32 = arith.constant 0 : i32
    %c0_i32_0 = arith.constant 0 : i32
    %c0_i32_1 = arith.constant 0 : i32
    return %c0_i32, %c0_i32_0 : i32, i32
  }
  func.func @transform_7(%arg0: i32) -> (i32, i32) {
    %c0_i32 = arith.constant 0 : i32
    %c0_i32_0 = arith.constant 0 : i32
    %c0_i32_1 = arith.constant 0 : i32
    return %c0_i32, %c0_i32_0 : i32, i32
  }
  func.func @transform_8(%arg0: i32) -> (i32, i32) {
    %c0_i32 = arith.constant 0 : i32
    %c0_i32_0 = arith.constant 0 : i32
    %c0_i32_1 = arith.constant 0 : i32
    return %c0_i32, %c0_i32_0 : i32, i32
  }
  func.func @transform_9(%arg0: i32) -> (i32, i32) {
    %c0_i32 = arith.constant 0 : i32
    %c0_i32_0 = arith.constant 0 : i32
    %c0_i32_1 = arith.constant 0 : i32
    return %c0_i32, %c0_i32_0 : i32, i32
  }
  func.func @transform_10(%arg0: i32) -> (i32, i32) {
    %c0_i32 = arith.constant 0 : i32
    %c0_i32_0 = arith.constant 0 : i32
    %c0_i32_1 = arith.constant 0 : i32
    return %c0_i32, %c0_i32_0 : i32, i32
  }
  func.func @transform_11(%arg0: i32) -> (i32, i32) {
    %c0_i32 = arith.constant 0 : i32
    %c0_i32_0 = arith.constant 0 : i32
    %c0_i32_1 = arith.constant 0 : i32
    return %c0_i32, %c0_i32_0 : i32, i32
  }
  func.func @transform_12(%arg0: i32) -> (i32, i32) {
    %c0_i32 = arith.constant 0 : i32
    %c0_i32_0 = arith.constant 0 : i32
    %c0_i32_1 = arith.constant 0 : i32
    return %c0_i32, %c0_i32_0 : i32, i32
  }
  func.func @transform_13(%arg0: i32) -> (i32, i32) {
    %c0_i32 = arith.constant 0 : i32
    %c0_i32_0 = arith.constant 0 : i32
    %c0_i32_1 = arith.constant 0 : i32
    return %c0_i32, %c0_i32_0 : i32, i32
  }
  func.func @transform_14(%arg0: i32) -> (i32, i32) {
    %c0_i32 = arith.constant 0 : i32
    %c0_i32_0 = arith.constant 0 : i32
    return %arg0, %c0_i32 : i32, i32
  }
}

module attributes {stable_mosaic.version = 11 : i64} {
  func.func @_head_kernel(%arg0: memref<2x128xf32, #tpu.memory_space<vmem>>, %arg1: memref<128x128xbf16, #tpu.memory_space<vmem>>, %arg2: memref<1x128xf32, #tpu.memory_space<vmem>>, %arg3: memref<128x256xbf16, #tpu.memory_space<vmem>>, %arg4: memref<1x256xf32, #tpu.memory_space<vmem>>, %arg5: memref<256x384xbf16, #tpu.memory_space<vmem>>, %arg6: memref<1x384xf32, #tpu.memory_space<vmem>>, %arg7: memref<2x384xf32, #tpu.memory_space<vmem>>) attributes {dimension_semantics = [], scalar_prefetch = 0 : i64, scratch_operands = 0 : i64, tpu.core_type = #tpu.core_type<tc>} {
    %c0 = arith.constant 0 : index
    %c0_0 = arith.constant 0 : index
    %0 = vector.load %arg0[%c0, %c0_0] : memref<2x128xf32, #tpu.memory_space<vmem>>, vector<2x128xf32>
    %1 = arith.truncf %0 : vector<2x128xf32> to vector<2x128xbf16>
    %c0_1 = arith.constant 0 : index
    %c0_2 = arith.constant 0 : index
    %2 = vector.load %arg1[%c0_1, %c0_2] : memref<128x128xbf16, #tpu.memory_space<vmem>>, vector<128x128xbf16>
    %cst = arith.constant dense<0.000000e+00> : vector<2x128xf32>
    %3 = tpu.matmul %1, %2, %cst {dimension_numbers = #tpu.dot_dimension_numbers<[1], [0], [0], [1], [0, 0, 1, 1], [], []>} : vector<2x128xbf16>, vector<128x128xbf16>, vector<2x128xf32> -> vector<2x128xf32>
    %c0_3 = arith.constant 0 : index
    %c0_4 = arith.constant 0 : index
    %4 = vector.load %arg2[%c0_3, %c0_4] : memref<1x128xf32, #tpu.memory_space<vmem>>, vector<1x128xf32>
    %5 = vector.broadcast %4 : vector<1x128xf32> to vector<2x128xf32>
    %6 = arith.addf %3, %5 : vector<2x128xf32>
    %7 = math.tanh %6 : vector<2x128xf32>
    %8 = arith.truncf %7 : vector<2x128xf32> to vector<2x128xbf16>
    %c0_5 = arith.constant 0 : index
    %c0_6 = arith.constant 0 : index
    %9 = vector.load %arg3[%c0_5, %c0_6] : memref<128x256xbf16, #tpu.memory_space<vmem>>, vector<128x256xbf16>
    %cst_7 = arith.constant dense<0.000000e+00> : vector<2x256xf32>
    %10 = tpu.matmul %8, %9, %cst_7 {dimension_numbers = #tpu.dot_dimension_numbers<[1], [0], [0], [1], [0, 0, 1, 1], [], []>} : vector<2x128xbf16>, vector<128x256xbf16>, vector<2x256xf32> -> vector<2x256xf32>
    %c0_8 = arith.constant 0 : index
    %c0_9 = arith.constant 0 : index
    %11 = vector.load %arg4[%c0_8, %c0_9] : memref<1x256xf32, #tpu.memory_space<vmem>>, vector<1x256xf32>
    %12 = vector.broadcast %11 : vector<1x256xf32> to vector<2x256xf32>
    %13 = arith.addf %10, %12 : vector<2x256xf32>
    %cst_10 = arith.constant 0.000000e+00 : f32
    %14 = vector.broadcast %cst_10 : f32 to vector<2x256xf32>
    %15 = arith.maximumf %13, %14 : vector<2x256xf32>
    %16 = arith.truncf %15 : vector<2x256xf32> to vector<2x256xbf16>
    %c0_11 = arith.constant 0 : index
    %c0_12 = arith.constant 0 : index
    %17 = vector.load %arg5[%c0_11, %c0_12] : memref<256x384xbf16, #tpu.memory_space<vmem>>, vector<256x384xbf16>
    %cst_13 = arith.constant dense<0.000000e+00> : vector<2x384xf32>
    %18 = tpu.matmul %16, %17, %cst_13 {dimension_numbers = #tpu.dot_dimension_numbers<[1], [0], [0], [1], [0, 0, 1, 1], [], []>} : vector<2x256xbf16>, vector<256x384xbf16>, vector<2x384xf32> -> vector<2x384xf32>
    %c0_14 = arith.constant 0 : index
    %c0_15 = arith.constant 0 : index
    %19 = vector.load %arg6[%c0_14, %c0_15] : memref<1x384xf32, #tpu.memory_space<vmem>>, vector<1x384xf32>
    %20 = vector.broadcast %19 : vector<1x384xf32> to vector<2x384xf32>
    %21 = arith.addf %18, %20 : vector<2x384xf32>
    %c0_16 = arith.constant 0 : index
    %c0_17 = arith.constant 0 : index
    %22 = vector.load %arg7[%c0_16, %c0_17] : memref<2x384xf32, #tpu.memory_space<vmem>>, vector<2x384xf32>
    tpu.vector_store %arg7[%c0_16, %c0_17], %21 {strides = array<i32>} : memref<2x384xf32, #tpu.memory_space<vmem>>, vector<2x384xf32>,
    return
  }
}

</mosaic_0001>

<llo_original>
// kernel: legal_model_forward.4
$region0: #{legal_model_forward.4}
  #allocation0 [shape = 'u32[]', space=smem, size = 0x4, offset = 0x4, fixed_abs, tag = 'smem constant byte address 0x4 - core index']
  #allocation1 [shape = 'u32[72,128]{1,0:T(1,128)}', space=vmem, size = 0x9000, scoped, tag = 'internal scratch']
  %s0 = inlined_call_operand.vmem [shape: f32[16,128], index: 0, kind: input, shape index: {}]
  %s1 = inlined_call_operand.vmem [shape: f32[1,128], index: 1, kind: input, shape index: {}]
  %s2 = inlined_call_operand.vmem [shape: f32[1,128], index: 2, kind: input, shape index: {}]
  %s3 = inlined_call_operand.vmem [shape: f32[16,128], index: 3, kind: output, shape index: {}]
  %s4 = sld [smem:[#allocation0]]
  $region22: #{legal_model_forward.4} parent=0
    _
  %s6 = ssub.s32 1, %s4
  %s7 = scalar_select 0, %s6, %s4
  // Predicated region
  $region2: #{legal_model_forward.4} parent=0 // pred_check
    _
  $region3: #{legal_model_forward.4} parent=0 // pred_check_branch
    %9 = sbr.rel (0) target = $region5
  $region4: #{legal_model_forward.4} parent=0 // pred_region
    _
  $region5: #{legal_model_forward.4} parent=0 // pred_fallthru
    _
  // Predicated region
  $region6: #{legal_model_forward.4} parent=0 // pred_check
    _
  $region7: #{legal_model_forward.4} parent=0 // pred_check_branch
    %11 = sbr.rel (0) target = $region9
  $region8: #{legal_model_forward.4} parent=0 // pred_region
    _
  $region9: #{legal_model_forward.4} parent=0 // pred_fallthru
    _
  // Predicated region
  $region10: #{legal_model_forward.4} parent=0 // pred_check
    _
  $region11: #{legal_model_forward.4} parent=0 // pred_check_branch
    %13 = sbr.rel (0) target = $region13
  $region12: #{legal_model_forward.4} parent=0 // pred_region
    _
  $region13: #{legal_model_forward.4} parent=0 // pred_fallthru
    _
  %v14 = vld [vmem:[%s0] sm:$0xff]
  %v15 = vld [vmem:[%s0 + $0x8] sm:$0xff]
  %16 = vadd.xlane.f32.xlu0 %v14
  %v17 = vpop.xlane.xlu0 %16
  %18 = vadd.xlane.f32.xlu0 %v15
  %v19 = vpop.xlane.xlu0 %18
  %v20 = vrcp.pop 128.0
  %v21 = vmul.f32 128.0, %v20
  %v22 = vsub.f32 1.0, %v21
  %v23 = vmul.f32 %v20, %v22
  %v24 = vadd.f32 %v20, %v23
  %vm25 = vweird.f32 %v20
  %v26 = vsel %vm25, %v20, %v24
  %v27 = vmul.f32 %v17, %v26
  %v28 = vmul.f32 %v19, %v26
  %v29 = vmul.f32 %v14, %v14
  %v30 = vmul.f32 %v15, %v15
  %31 = vadd.xlane.f32.xlu0 %v29
  %v32 = vpop.xlane.xlu0 %31
  %33 = vadd.xlane.f32.xlu0 %v30
  %v34 = vpop.xlane.xlu0 %33
  %v35 = vmul.f32 %v32, %v26
  %v36 = vmul.f32 %v34, %v26
  %v37 = vmul.f32 %v27, %v27
  %v38 = vmul.f32 %v28, %v28
  %v39 = vsub.f32 %v35, %v37
  %v40 = vsub.f32 %v36, %v38
  %v41 = vadd.f32 %v39, 1e-12
  %v42 = vadd.f32 %v40, 1e-12
  %v43 = vrsqrt.pop %v41
  %v44 = vmul.f32 %v43, %v41
  %v45 = vmul.f32 %v44, %v43
  %v46 = vmul.f32 0.5, %v45
  %v47 = vsub.f32 1.5, %v46
  %v48 = vmul.f32 %v43, %v47
  %vm49 = vweird.f32 %v41
  %vm50 = vweird.f32 %v43
  %vm51 = vmor %vm49, %vm50
  %v52 = vsel %vm51, %v43, %v48
  %v53 = vrsqrt.pop %v42
  %v54 = vmul.f32 %v53, %v42
  %v55 = vmul.f32 %v54, %v53
  %v56 = vmul.f32 0.5, %v55
  %v57 = vsub.f32 1.5, %v56
  %v58 = vmul.f32 %v53, %v57
  %vm59 = vweird.f32 %v42
  %vm60 = vweird.f32 %v53
  %vm61 = vmor %vm59, %vm60
  %v62 = vsel %vm61, %v53, %v58
  %v63 = vsub.f32 %v14, %v27
  %v64 = vsub.f32 %v15, %v28
  %v65 = vmul.f32 %v63, %v52
  %v66 = vmul.f32 %v64, %v62
  %v67 = vld [vmem:[%s1] sm:$0x1]
  %v69 = vperm.slane %v67, 0
  %v71 = vmul.f32 %v65, %v69
  %v72 = vmul.f32 %v66, %v69
  %v73 = vld [vmem:[%s2] sm:$0x1]
  %v75 = vperm.slane %v73, 0
  %v77 = vadd.f32 %v71, %v75
  %v78 = vadd.f32 %v72, %v75
  %79 = vst [vmem:[%s3] sm:$0xff] %v77
  %80 = vst [vmem:[%s3 + $0x8] sm:$0xff] %v78
  // Predicated region
  $region14: #{legal_model_forward.4} parent=0 // pred_check
    _
  $region15: #{legal_model_forward.4} parent=0 // pred_check_branch
    %82 = sbr.rel (0) target = $region17
  $region16: #{legal_model_forward.4} parent=0 // pred_region
    _
  $region17: #{legal_model_forward.4} parent=0 // pred_fallthru
    _
  // Predicated region
  $region18: #{legal_model_forward.4} parent=0 // pred_check
    _
  $region19: #{legal_model_forward.4} parent=0 // pred_check_branch
    %84 = sbr.rel (0) target = $region21
  $region20: #{legal_model_forward.4} parent=0 // pred_region
    _
  $region21: #{legal_model_forward.4} parent=0 // pred_fallthru
    _

// kernel: legal_model_forward.7
$region0: #{legal_model_forward.7}
  #allocation0 [shape = 'u32[]', space=smem, size = 0x4, offset = 0x4, fixed_abs, tag = 'smem constant byte address 0x4 - core index']
  #allocation1 [shape = 'u32[72,128]{1,0:T(1,128)}', space=vmem, size = 0x9000, scoped, tag = 'internal scratch']
  %s0 = inlined_call_operand.vmem [shape: f32[2,128], index: 0, kind: input, shape index: {}]
  %s1 = inlined_call_operand.hbm [shape: bf16[128,128], index: 1, kind: input, shape index: {}]
  %s2 = inlined_call_operand.vmem [shape: f32[1,128], index: 2, kind: input, shape index: {}]
  %s3 = inlined_call_operand.hbm [shape: bf16[128,256], index: 3, kind: input, shape index: {}]
  %s4 = inlined_call_operand.vmem [shape: f32[1,256], index: 4, kind: input, shape index: {}]
  %s5 = inlined_call_operand.hbm [shape: bf16[256,384], index: 5, kind: input, shape index: {}]
  %s6 = inlined_call_operand.vmem [shape: f32[1,384], index: 6, kind: input, shape index: {}]
  %s7 = inlined_call_operand.vmem [shape: f32[2,384], index: 7, kind: output, shape index: {}]
  %s8 = sld [smem:[#allocation0]]
  $region50: #{legal_model_forward.7} parent=0
    _
  %s10 = ssub.s32 1, %s8
  %s11 = scalar_select 0, %s10, %s8
  $region1: #{legal_model_forward.7} parent=0
    #allocation2 [shape = 'u8[32768]{0}', space=vmem, size = 0x8000, scoped, tag = 'input window, operand 1, single buffered']
    #allocation3 [shape = 's32[1]{0}', space=sflag, size = 0x4, scoped, tag = 'scoped memory for legal_model_forward.7']
    #allocation4 [shape = 'u8[65536]{0}', space=vmem, size = 0x10000, scoped, tag = 'input window, operand 3, single buffered']
    #allocation5 [shape = 's32[1]{0}', space=sflag, size = 0x4, scoped, tag = 'scoped memory for legal_model_forward.7']
    #allocation6 [shape = 'u8[196608]{0}', space=vmem, size = 0x30000, scoped, tag = 'input window, operand 5, single buffered']
    %12 = vsyncpa [#allocation3], 0
    %13 = vsyncpa [#allocation5], 0
    // Predicated region
    $region2: #{legal_model_forward.7} parent=1 // pred_check
      _
    $region3: #{legal_model_forward.7} parent=1 // pred_check_branch
      %15 = sbr.rel (0) target = $region5
    $region4: #{legal_model_forward.7} parent=1 // pred_region
      _
    $region5: #{legal_model_forward.7} parent=1 // pred_fallthru
      _
    // Predicated region
    $region6: #{legal_model_forward.7} parent=1 // pred_check
      _
    $region7: #{legal_model_forward.7} parent=1 // pred_check_branch
      %17 = sbr.rel (0) target = $region9
    $region8: #{legal_model_forward.7} parent=1 // pred_region
      %19 = vsyncadd [#allocation3], 0
      %s20 = sshll.u32 %s1, 4
      %s21 = int_to_ptr.hbm [resolvable:$true] %s20
      %s22 = sshll.u32 [#allocation2], 4
      %s23 = int_to_ptr.vmem [resolvable:$true] %s22
      %28 = dma.hbm_to_vmem [thread:$0]  %s21, 1024, %s23, [#allocation3], 64, 64, 4
    $region9: #{legal_model_forward.7} parent=1 // pred_fallthru
      _
    // Predicated region
    $region10: #{legal_model_forward.7} parent=1 // pred_check
      _
    $region11: #{legal_model_forward.7} parent=1 // pred_check_branch
      %30 = sbr.rel (0) target = $region13
    $region12: #{legal_model_forward.7} parent=1 // pred_region
      _
    $region13: #{legal_model_forward.7} parent=1 // pred_fallthru
      _
    // Predicated region
    $region14: #{legal_model_forward.7} parent=1 // pred_check
      _
    $region15: #{legal_model_forward.7} parent=1 // pred_check_branch
      %32 = sbr.rel (0) target = $region17
    $region16: #{legal_model_forward.7} parent=1 // pred_region
      %34 = vsyncadd [#allocation5], 0
      %s35 = sshll.u32 %s3, 4
      %s36 = int_to_ptr.hbm [resolvable:$true] %s35
      %s37 = sshll.u32 [#allocation4], 4
      %s38 = int_to_ptr.vmem [resolvable:$true] %s37
      %43 = dma.hbm_to_vmem [thread:$0]  %s36, 2048, %s38, [#allocation5], 128, 128, 8
    $region17: #{legal_model_forward.7} parent=1 // pred_fallthru
      _
    // Predicated region
    $region18: #{legal_model_forward.7} parent=1 // pred_check
      _
    $region19: #{legal_model_forward.7} parent=1 // pred_check_branch
      %45 = sbr.rel (0) target = $region21
    $region20: #{legal_model_forward.7} parent=1 // pred_region
      _
    $region21: #{legal_model_forward.7} parent=1 // pred_fallthru
      _
    // Predicated region
    $region22: #{legal_model_forward.7} parent=1 // pred_check
      _
    $region23: #{legal_model_forward.7} parent=1 // pred_check_branch
      %47 = sbr.rel (0) target = $region25
    $region24: #{legal_model_forward.7} parent=1 // pred_region
      %49 = vsyncadd [#allocation5], 0
      %s50 = sshll.u32 %s5, 4
      %s51 = int_to_ptr.hbm [resolvable:$true] %s50
      %s52 = sshll.u32 [#allocation6], 4
      %s53 = int_to_ptr.vmem [resolvable:$true] %s52
      %58 = dma.hbm_to_vmem [thread:$0]  %s51, 6144, %s53, [#allocation5], 192, 192, 12
    $region25: #{legal_model_forward.7} parent=1 // pred_fallthru
      _
    // Predicated region
    $region26: #{legal_model_forward.7} parent=1 // pred_check
      _
    $region27: #{legal_model_forward.7} parent=1 // pred_check_branch
      %60 = sbr.rel (0) target = $region29
    $region28: #{legal_model_forward.7} parent=1 // pred_region
      _
    $region29: #{legal_model_forward.7} parent=1 // pred_fallthru
      _
    // Predicated region
    $region30: #{legal_model_forward.7} parent=1 // pred_check
      _
    $region31: #{legal_model_forward.7} parent=1 // pred_check_branch
      %62 = sbr.rel (0) target = $region33
    $region32: #{legal_model_forward.7} parent=1 // pred_region
      %64 = dma.done [#allocation3], 1024
    $region33: #{legal_model_forward.7} parent=1 // pred_fallthru
      _
    // Predicated region
    $region34: #{legal_model_forward.7} parent=1 // pred_check
      _
    $region35: #{legal_model_forward.7} parent=1 // pred_check_branch
      %66 = sbr.rel (0) target = $region37
    $region36: #{legal_model_forward.7} parent=1 // pred_region
      %68 = dma.done [#allocation5], 2048
    $region37: #{legal_model_forward.7} parent=1 // pred_fallthru
      _
    // Predicated region
    $region38: #{legal_model_forward.7} parent=1 // pred_check
      _
    $region39: #{legal_model_forward.7} parent=1 // pred_check_branch
      %70 = sbr.rel (0) target = $region41
    $region40: #{legal_model_forward.7} parent=1 // pred_region
      %72 = dma.done [#allocation5], 6144
    $region41: #{legal_model_forward.7} parent=1 // pred_fallthru
      _
    %v73 = vld [vmem:[%s0] sm:$0x3]
    %v74 = vpack.c.bf16 %v73, %v73
    %v75 = vld [vmem:[#allocation2] sm:$0xf]
    %v76 = vld [vmem:[#allocation2 + $0x4] sm:$0xf]
    %v77 = vld [vmem:[#allocation2 + $0x8] sm:$0xf]
    %v78 = vld [vmem:[#allocation2 + $0xc] sm:$0xf]
    %v79 = vld [vmem:[#allocation2 + $0x10] sm:$0xf]
    %v80 = vld [vmem:[#allocation2 + $0x14] sm:$0xf]
    %v81 = vld [vmem:[#allocation2 + $0x18] sm:$0xf]
    %v82 = vld [vmem:[#allocation2 + $0x1c] sm:$0xf]
    %v83 = vld [vmem:[#allocation2 + $0x20] sm:$0xf]
    %v84 = vld [vmem:[#allocation2 + $0x24] sm:$0xf]
    %v85 = vld [vmem:[#allocation2 + $0x28] sm:$0xf]
    %v86 = vld [vmem:[#allocation2 + $0x2c] sm:$0xf]
    %v87 = vld [vmem:[#allocation2 + $0x30] sm:$0xf]
    %v88 = vld [vmem:[#allocation2 + $0x34] sm:$0xf]
    %v89 = vld [vmem:[#allocation2 + $0x38] sm:$0xf]
    %v90 = vld [vmem:[#allocation2 + $0x3c] sm:$0xf]
    %v91 = vld [vmem:[%s2] sm:$0x1]
    %v93 = vperm.slane %v91, 0
    %v111 = vunpack.c.l.b16 %v75
    %v112 = vunpack.c.l.b16 %v76
    %v113 = vunpack.c.l.b16 %v77
    %v114 = vunpack.c.l.b16 %v78
    %v115 = vunpack.c.l.b16 %v79
    %v116 = vunpack.c.l.b16 %v80
    %v117 = vunpack.c.l.b16 %v81
    %v118 = vunpack.c.l.b16 %v82
    %v119 = vunpack.c.l.b16 %v83
    %v120 = vunpack.c.l.b16 %v84
    %v121 = vunpack.c.l.b16 %v85
    %v122 = vunpack.c.l.b16 %v86
    %v123 = vunpack.c.l.b16 %v87
    %v124 = vunpack.c.l.b16 %v88
    %v125 = vunpack.c.l.b16 %v89
    %v126 = vunpack.c.l.b16 %v90
    %v127 = vpack.c.b16 %v112, %v111
    %v128 = vpack.c.b16 %v114, %v113
    %v129 = vpack.c.b16 %v116, %v115
    %v130 = vpack.c.b16 %v118, %v117
    %v131 = vpack.c.b16 %v120, %v119
    %v132 = vpack.c.b16 %v122, %v121
    %v133 = vpack.c.b16 %v124, %v123
    %v134 = vpack.c.b16 %v126, %v125
    %143 = vmatpush.bf16.msra.mxu0 %v134
    %144 = vmatpush.bf16.msra.mxu0 %v133
    %145 = vmatpush.bf16.msra.mxu0 %v132
    %146 = vmatpush.bf16.msra.mxu0 %v131
    %147 = vmatpush.bf16.msra.mxu0 %v130
    %148 = vmatpush.bf16.msra.mxu0 %v129
    %149 = vmatpush.bf16.msra.mxu0 %v128
    %150 = vmatpush.bf16.msra.mxu0 %v127
    %151 = vmatmul.bf16.gmra.mxu0 %v74
    %v152 = vpop.f32.mrf.mxu0
    %v153 = vadd.f32 %v93, %v152
    %v154 = vpop.f32.mrf.mxu0
    %155 = vdwg.mxu0
    %v156 = vtanh.pop %v153
    %v157 = vpack.c.bf16 %v156, %v156
    %v158 = vld [vmem:[#allocation4] sm:$0xff]
    %v159 = vld [vmem:[#allocation4 + $0x8] sm:$0xff]
    %v160 = vld [vmem:[#allocation4 + $0x10] sm:$0xff]
    %v161 = vld [vmem:[#allocation4 + $0x18] sm:$0xff]
    %v162 = vld [vmem:[#allocation4 + $0x20] sm:$0xff]
    %v163 = vld [vmem:[#allocation4 + $0x28] sm:$0xff]
    %v164 = vld [vmem:[#allocation4 + $0x30] sm:$0xff]
    %v165 = vld [vmem:[#allocation4 + $0x38] sm:$0xff]
    %v166 = vld [vmem:[#allocation4 + $0x40] sm:$0xff]
    %v167 = vld [vmem:[#allocation4 + $0x48] sm:$0xff]
    %v168 = vld [vmem:[#allocation4 + $0x50] sm:$0xff]
    %v169 = vld [vmem:[#allocation4 + $0x58] sm:$0xff]
    %v170 = vld [vmem:[#allocation4 + $0x60] sm:$0xff]
    %v171 = vld [vmem:[#allocation4 + $0x68] sm:$0xff]
    %v172 = vld [vmem:[#allocation4 + $0x70] sm:$0xff]
    %v173 = vld [vmem:[#allocation4 + $0x78] sm:$0xff]
    %v174 = vld [vmem:[%s4] sm:$0x3]
    %v176 = vperm.slane %v174, 0
    %v177 = vperm.slane %v174, 1
    %v196 = vunpack.c.l.b16 %v158
    %v197 = vunpack.c.h.b16 %v158
    %v198 = vunpack.c.l.b16 %v159
    %v199 = vunpack.c.h.b16 %v159
    %v200 = vunpack.c.l.b16 %v160
    %v201 = vunpack.c.h.b16 %v160
    %v202 = vunpack.c.l.b16 %v161
    %v203 = vunpack.c.h.b16 %v161
    %v204 = vunpack.c.l.b16 %v162
    %v205 = vunpack.c.h.b16 %v162
    %v206 = vunpack.c.l.b16 %v163
    %v207 = vunpack.c.h.b16 %v163
    %v208 = vunpack.c.l.b16 %v164
    %v209 = vunpack.c.h.b16 %v164
    %v210 = vunpack.c.l.b16 %v165
    %v211 = vunpack.c.h.b16 %v165
    %v212 = vunpack.c.l.b16 %v166
    %v213 = vunpack.c.h.b16 %v166
    %v214 = vunpack.c.l.b16 %v167
    %v215 = vunpack.c.h.b16 %v167
    %v216 = vunpack.c.l.b16 %v168
    %v217 = vunpack.c.h.b16 %v168
    %v218 = vunpack.c.l.b16 %v169
    %v219 = vunpack.c.h.b16 %v169
    %v220 = vunpack.c.l.b16 %v170
    %v221 = vunpack.c.h.b16 %v170
    %v222 = vunpack.c.l.b16 %v171
    %v223 = vunpack.c.h.b16 %v171
    %v224 = vunpack.c.l.b16 %v172
    %v225 = vunpack.c.h.b16 %v172
    %v226 = vunpack.c.l.b16 %v173
    %v227 = vunpack.c.h.b16 %v173
    %v228 = vpack.c.b16 %v198, %v196
    %v229 = vpack.c.b16 %v199, %v197
    %v230 = vpack.c.b16 %v202, %v200
    %v231 = vpack.c.b16 %v203, %v201
    %v232 = vpack.c.b16 %v206, %v204
    %v233 = vpack.c.b16 %v207, %v205
    %v234 = vpack.c.b16 %v210, %v208
    %v235 = vpack.c.b16 %v211, %v209
    %v236 = vpack.c.b16 %v214, %v212
    %v237 = vpack.c.b16 %v215, %v213
    %v238 = vpack.c.b16 %v218, %v216
    %v239 = vpack.c.b16 %v219, %v217
    %v240 = vpack.c.b16 %v222, %v220
    %v241 = vpack.c.b16 %v223, %v221
    %v242 = vpack.c.b16 %v226, %v224
    %v243 = vpack.c.b16 %v227, %v225
    %260 = vmatpush.bf16.msra.mxu0 %v242
    %261 = vmatpush.bf16.msra.mxu0 %v240
    %262 = vmatpush.bf16.msra.mxu0 %v238
    %263 = vmatpush.bf16.msra.mxu0 %v236
    %264 = vmatpush.bf16.msra.mxu0 %v234
    %265 = vmatpush.bf16.msra.mxu0 %v232
    %266 = vmatpush.bf16.msra.mxu0 %v230
    %267 = vmatpush.bf16.msra.mxu0 %v228
    %268 = vmatmul.bf16.gmra.mxu0 %v157
    %v269 = vpop.f32.mrf.mxu0
    %v270 = vadd.f32 %v176, %v269
    %v271 = vpop.f32.mrf.mxu0
    %272 = vdwg.mxu0
    %273 = vmatpush.bf16.msra.mxu0 %v243
    %274 = vmatpush.bf16.msra.mxu0 %v241
    %275 = vmatpush.bf16.msra.mxu0 %v239
    %276 = vmatpush.bf16.msra.mxu0 %v237
    %277 = vmatpush.bf16.msra.mxu0 %v235
    %278 = vmatpush.bf16.msra.mxu0 %v233
    %279 = vmatpush.bf16.msra.mxu0 %v231
    %280 = vmatpush.bf16.msra.mxu0 %v229
    %281 = vmatmul.bf16.gmra.mxu0 %v157
    %v282 = vpop.f32.mrf.mxu0
    %v283 = vadd.f32 %v177, %v282
    %v284 = vpop.f32.mrf.mxu0
    %285 = vdwg.mxu0
    %v286 = vmax.f32 %v270, 0.0
    %v287 = vmax.f32 %v283, 0.0
    %v288 = vpack.c.bf16 %v286, %v286
    %v289 = vpack.c.bf16 %v287, %v287
    %v290 = vld [vmem:[#allocation6] sm:$0xff]
    %v291 = vld [vmem:[#allocation6 + $0x8] sm:$0xf]
    %v292 = vld [vmem:[#allocation6 + $0xc] sm:$0xff]
    %v293 = vld [vmem:[#allocation6 + $0x14] sm:$0xf]
    %v294 = vld [vmem:[#allocation6 + $0x18] sm:$0xff]
    %v295 = vld [vmem:[#allocation6 + $0x20] sm:$0xf]
    %v296 = vld [vmem:[#allocation6 + $0x24] sm:$0xff]
    %v297 = vld [vmem:[#allocation6 + $0x2c] sm:$0xf]
    %v298 = vld [vmem:[#allocation6 + $0x30] sm:$0xff]
    %v299 = vld [vmem:[#allocation6 + $0x38] sm:$0xf]
    %v300 = vld [vmem:[#allocation6 + $0x3c] sm:$0xff]
    %v301 = vld [vmem:[#allocation6 + $0x44] sm:$0xf]
    %v302 = vld [vmem:[#allocation6 + $0x48] sm:$0xff]
    %v303 = vld [vmem:[#allocation6 + $0x50] sm:$0xf]
    %v304 = vld [vmem:[#allocation6 + $0x54] sm:$0xff]
    %v305 = vld [vmem:[#allocation6 + $0x5c] sm:$0xf]
    %v306 = vld [vmem:[#allocation6 + $0x60] sm:$0xff]
    %v307 = vld [vmem:[#allocation6 + $0x68] sm:$0xf]
    %v308 = vld [vmem:[#allocation6 + $0x6c] sm:$0xff]
    %v309 = vld [vmem:[#allocation6 + $0x74] sm:$0xf]
    %v310 = vld [vmem:[#allocation6 + $0x78] sm:$0xff]
    %v311 = vld [vmem:[#allocation6 + $0x80] sm:$0xf]
    %v312 = vld [vmem:[#allocation6 + $0x84] sm:$0xff]
    %v313 = vld [vmem:[#allocation6 + $0x8c] sm:$0xf]
    %v314 = vld [vmem:[#allocation6 + $0x90] sm:$0xff]
    %v315 = vld [vmem:[#allocation6 + $0x98] sm:$0xf]
    %v316 = vld [vmem:[#allocation6 + $0x9c] sm:$0xff]
    %v317 = vld [vmem:[#allocation6 + $0xa4] sm:$0xf]
    %v318 = vld [vmem:[#allocation6 + $0xa8] sm:$0xff]
    %v319 = vld [vmem:[#allocation6 + $0xb0] sm:$0xf]
    %v320 = vld [vmem:[#allocation6 + $0xb4] sm:$0xff]
    %v321 = vld [vmem:[#allocation6 + $0xbc] sm:$0xf]
    %v322 = vld [vmem:[#allocation6 + $0xc0] sm:$0xff]
    %v323 = vld [vmem:[#allocation6 + $0xc8] sm:$0xf]
    %v324 = vld [vmem:[#allocation6 + $0xcc] sm:$0xff]
    %v325 = vld [vmem:[#allocation6 + $0xd4] sm:$0xf]
    %v326 = vld [vmem:[#allocation6 + $0xd8] sm:$0xff]
    %v327 = vld [vmem:[#allocation6 + $0xe0] sm:$0xf]
    %v328 = vld [vmem:[#allocation6 + $0xe4] sm:$0xff]
    %v329 = vld [vmem:[#allocation6 + $0xec] sm:$0xf]
    %v330 = vld [vmem:[#allocation6 + $0xf0] sm:$0xff]
    %v331 = vld [vmem:[#allocation6 + $0xf8] sm:$0xf]
    %v332 = vld [vmem:[#allocation6 + $0xfc] sm:$0xff]
    %v333 = vld [vmem:[#allocation6 + $0x104] sm:$0xf]
    %v334 = vld [vmem:[#allocation6 + $0x108] sm:$0xff]
    %v335 = vld [vmem:[#allocation6 + $0x110] sm:$0xf]
    %v336 = vld [vmem:[#allocation6 + $0x114] sm:$0xff]
    %v337 = vld [vmem:[#allocation6 + $0x11c] sm:$0xf]
    %v338 = vld [vmem:[#allocation6 + $0x120] sm:$0xff]
    %v339 = vld [vmem:[#allocation6 + $0x128] sm:$0xf]
    %v340 = vld [vmem:[#allocation6 + $0x12c] sm:$0xff]
    %v341 = vld [vmem:[#allocation6 + $0x134] sm:$0xf]
    %v342 = vld [vmem:[#allocation6 + $0x138] sm:$0xff]
    %v343 = vld [vmem:[#allocation6 + $0x140] sm:$0xf]
    %v344 = vld [vmem:[#allocation6 + $0x144] sm:$0xff]
    %v345 = vld [vmem:[#allocation6 + $0x14c] sm:$0xf]
    %v346 = vld [vmem:[#allocation6 + $0x150] sm:$0xff]
    %v347 = vld [vmem:[#allocation6 + $0x158] sm:$0xf]
    %v348 = vld [vmem:[#allocation6 + $0x15c] sm:$0xff]
    %v349 = vld [vmem:[#allocation6 + $0x164] sm:$0xf]
    %v350 = vld [vmem:[#allocation6 + $0x168] sm:$0xff]
    %v351 = vld [vmem:[#allocation6 + $0x170] sm:$0xf]
    %v352 = vld [vmem:[#allocation6 + $0x174] sm:$0xff]
    %v353 = vld [vmem:[#allocation6 + $0x17c] sm:$0xf]
    %v354 = vld [vmem:[%s6] sm:$0x7]
    %v356 = vperm.slane %v354, 0
    %v357 = vperm.slane %v354, 1
    %v358 = vperm.slane %v354, 2
    %v426 = vunpack.c.l.b16 %v290
    %v427 = vunpack.c.h.b16 %v290
    %v428 = vunpack.c.l.b16 %v291
    %v429 = vunpack.c.l.b16 %v292
    %v430 = vunpack.c.h.b16 %v292
    %v431 = vunpack.c.l.b16 %v293
    %v432 = vunpack.c.l.b16 %v294
    %v433 = vunpack.c.h.b16 %v294
    %v434 = vunpack.c.l.b16 %v295
    %v435 = vunpack.c.l.b16 %v296
    %v436 = vunpack.c.h.b16 %v296
    %v437 = vunpack.c.l.b16 %v297
    %v438 = vunpack.c.l.b16 %v298
    %v439 = vunpack.c.h.b16 %v298
    %v440 = vunpack.c.l.b16 %v299
    %v441 = vunpack.c.l.b16 %v300
    %v442 = vunpack.c.h.b16 %v300
    %v443 = vunpack.c.l.b16 %v301
    %v444 = vunpack.c.l.b16 %v302
    %v445 = vunpack.c.h.b16 %v302
    %v446 = vunpack.c.l.b16 %v303
    %v447 = vunpack.c.l.b16 %v304
    %v448 = vunpack.c.h.b16 %v304
    %v449 = vunpack.c.l.b16 %v305
    %v450 = vunpack.c.l.b16 %v306
    %v451 = vunpack.c.h.b16 %v306
    %v452 = vunpack.c.l.b16 %v307
    %v453 = vunpack.c.l.b16 %v308
    %v454 = vunpack.c.h.b16 %v308
    %v455 = vunpack.c.l.b16 %v309
    %v456 = vunpack.c.l.b16 %v310
    %v457 = vunpack.c.h.b16 %v310
    %v458 = vunpack.c.l.b16 %v311
    %v459 = vunpack.c.l.b16 %v312
    %v460 = vunpack.c.h.b16 %v312
    %v461 = vunpack.c.l.b16 %v313
    %v462 = vunpack.c.l.b16 %v314
    %v463 = vunpack.c.h.b16 %v314
    %v464 = vunpack.c.l.b16 %v315
    %v465 = vunpack.c.l.b16 %v316
    %v466 = vunpack.c.h.b16 %v316
    %v467 = vunpack.c.l.b16 %v317
    %v468 = vunpack.c.l.b16 %v318
    %v469 = vunpack.c.h.b16 %v318
    %v470 = vunpack.c.l.b16 %v319
    %v471 = vunpack.c.l.b16 %v320
    %v472 = vunpack.c.h.b16 %v320
    %v473 = vunpack.c.l.b16 %v321
    %v474 = vunpack.c.l.b16 %v322
    %v475 = vunpack.c.h.b16 %v322
    %v476 = vunpack.c.l.b16 %v323
    %v477 = vunpack.c.l.b16 %v324
    %v478 = vunpack.c.h.b16 %v324
    %v479 = vunpack.c.l.b16 %v325
    %v480 = vunpack.c.l.b16 %v326
    %v481 = vunpack.c.h.b16 %v326
    %v482 = vunpack.c.l.b16 %v327
    %v483 = vunpack.c.l.b16 %v328
    %v484 = vunpack.c.h.b16 %v328
    %v485 = vunpack.c.l.b16 %v329
    %v486 = vunpack.c.l.b16 %v330
    %v487 = vunpack.c.h.b16 %v330
    %v488 = vunpack.c.l.b16 %v331
    %v489 = vunpack.c.l.b16 %v332
    %v490 = vunpack.c.h.b16 %v332
    %v491 = vunpack.c.l.b16 %v333
    %v492 = vunpack.c.l.b16 %v334
    %v493 = vunpack.c.h.b16 %v334
    %v494 = vunpack.c.l.b16 %v335
    %v495 = vunpack.c.l.b16 %v336
    %v496 = vunpack.c.h.b16 %v336
    %v497 = vunpack.c.l.b16 %v337
    %v498 = vunpack.c.l.b16 %v338
    %v499 = vunpack.c.h.b16 %v338
    %v500 = vunpack.c.l.b16 %v339
    %v501 = vunpack.c.l.b16 %v340
    %v502 = vunpack.c.h.b16 %v340
    %v503 = vunpack.c.l.b16 %v341
    %v504 = vunpack.c.l.b16 %v342
    %v505 = vunpack.c.h.b16 %v342
    %v506 = vunpack.c.l.b16 %v343
    %v507 = vunpack.c.l.b16 %v344
    %v508 = vunpack.c.h.b16 %v344
    %v509 = vunpack.c.l.b16 %v345
    %v510 = vunpack.c.l.b16 %v346
    %v511 = vunpack.c.h.b16 %v346
    %v512 = vunpack.c.l.b16 %v347
    %v513 = vunpack.c.l.b16 %v348
    %v514 = vunpack.c.h.b16 %v348
    %v515 = vunpack.c.l.b16 %v349
    %v516 = vunpack.c.l.b16 %v350
    %v517 = vunpack.c.h.b16 %v350
    %v518 = vunpack.c.l.b16 %v351
    %v519 = vunpack.c.l.b16 %v352
    %v520 = vunpack.c.h.b16 %v352
    %v521 = vunpack.c.l.b16 %v353
    %v522 = vpack.c.b16 %v429, %v426
    %v523 = vpack.c.b16 %v430, %v427
    %v524 = vpack.c.b16 %v431, %v428
    %v525 = vpack.c.b16 %v435, %v432
    %v526 = vpack.c.b16 %v436, %v433
    %v527 = vpack.c.b16 %v437, %v434
    %v528 = vpack.c.b16 %v441, %v438
    %v529 = vpack.c.b16 %v442, %v439
    %v530 = vpack.c.b16 %v443, %v440
    %v531 = vpack.c.b16 %v447, %v444
    %v532 = vpack.c.b16 %v448, %v445
    %v533 = vpack.c.b16 %v449, %v446
    %v534 = vpack.c.b16 %v453, %v450
    %v535 = vpack.c.b16 %v454, %v451
    %v536 = vpack.c.b16 %v455, %v452
    %v537 = vpack.c.b16 %v459, %v456
    %v538 = vpack.c.b16 %v460, %v457
    %v539 = vpack.c.b16 %v461, %v458
    %v540 = vpack.c.b16 %v465, %v462
    %v541 = vpack.c.b16 %v466, %v463
    %v542 = vpack.c.b16 %v467, %v464
    %v543 = vpack.c.b16 %v471, %v468
    %v544 = vpack.c.b16 %v472, %v469
    %v545 = vpack.c.b16 %v473, %v470
    %v546 = vpack.c.b16 %v477, %v474
    %v547 = vpack.c.b16 %v478, %v475
    %v548 = vpack.c.b16 %v479, %v476
    %v549 = vpack.c.b16 %v483, %v480
    %v550 = vpack.c.b16 %v484, %v481
    %v551 = vpack.c.b16 %v485, %v482
    %v552 = vpack.c.b16 %v489, %v486
    %v553 = vpack.c.b16 %v490, %v487
    %v554 = vpack.c.b16 %v491, %v488
    %v555 = vpack.c.b16 %v495, %v492
    %v556 = vpack.c.b16 %v496, %v493
    %v557 = vpack.c.b16 %v497, %v494
    %v558 = vpack.c.b16 %v501, %v498
    %v559 = vpack.c.b16 %v502, %v499
    %v560 = vpack.c.b16 %v503, %v500
    %v561 = vpack.c.b16 %v507, %v504
    %v562 = vpack.c.b16 %v508, %v505
    %v563 = vpack.c.b16 %v509, %v506
    %v564 = vpack.c.b16 %v513, %v510
    %v565 = vpack.c.b16 %v514, %v511
    %v566 = vpack.c.b16 %v515, %v512
    %v567 = vpack.c.b16 %v519, %v516
    %v568 = vpack.c.b16 %v520, %v517
    %v569 = vpack.c.b16 %v521, %v518
    %618 = vmatpush.bf16.msra.mxu0 %v543
    %619 = vmatpush.bf16.msra.mxu0 %v540
    %620 = vmatpush.bf16.msra.mxu0 %v537
    %621 = vmatpush.bf16.msra.mxu0 %v534
    %622 = vmatpush.bf16.msra.mxu0 %v531
    %623 = vmatpush.bf16.msra.mxu0 %v528
    %624 = vmatpush.bf16.msra.mxu0 %v525
    %625 = vmatpush.bf16.msra.mxu0 %v522
    %626 = vmatmul.bf16.gmra.mxu0 %v288
    %v627 = vpop.f32.mrf.mxu0
    %v628 = vadd.f32 %v356, %v627
    %v629 = vpop.f32.mrf.mxu0
    %630 = vdwg.mxu0
    %631 = vmatpush.bf16.msra.mxu0 %v567
    %632 = vmatpush.bf16.msra.mxu0 %v564
    %633 = vmatpush.bf16.msra.mxu0 %v561
    %634 = vmatpush.bf16.msra.mxu0 %v558
    %635 = vmatpush.bf16.msra.mxu0 %v555
    %636 = vmatpush.bf16.msra.mxu0 %v552
    %637 = vmatpush.bf16.msra.mxu0 %v549
    %638 = vmatpush.bf16.msra.mxu0 %v546
    %639 = vmatmul.bf16.gmra.mxu0 %v289
    %v640 = vpop.f32.mrf.mxu0
    %v641 = vadd.f32 %v628, %v640
    %v642 = vpop.f32.mrf.mxu0
    %643 = vdwg.mxu0
    %644 = vmatpush.bf16.msra.mxu0 %v544
    %645 = vmatpush.bf16.msra.mxu0 %v541
    %646 = vmatpush.bf16.msra.mxu0 %v538
    %647 = vmatpush.bf16.msra.mxu0 %v535
    %648 = vmatpush.bf16.msra.mxu0 %v532
    %649 = vmatpush.bf16.msra.mxu0 %v529
    %650 = vmatpush.bf16.msra.mxu0 %v526
    %651 = vmatpush.bf16.msra.mxu0 %v523
    %652 = vmatmul.bf16.gmra.mxu0 %v288
    %v653 = vpop.f32.mrf.mxu0
    %v654 = vadd.f32 %v357, %v653
    %v655 = vpop.f32.mrf.mxu0
    %656 = vdwg.mxu0
    %657 = vmatpush.bf16.msra.mxu0 %v568
    %658 = vmatpush.bf16.msra.mxu0 %v565
    %659 = vmatpush.bf16.msra.mxu0 %v562
    %660 = vmatpush.bf16.msra.mxu0 %v559
    %661 = vmatpush.bf16.msra.mxu0 %v556
    %662 = vmatpush.bf16.msra.mxu0 %v553
    %663 = vmatpush.bf16.msra.mxu0 %v550
    %664 = vmatpush.bf16.msra.mxu0 %v547
    %665 = vmatmul.bf16.gmra.mxu0 %v289
    %v666 = vpop.f32.mrf.mxu0
    %v667 = vadd.f32 %v654, %v666
    %v668 = vpop.f32.mrf.mxu0
    %669 = vdwg.mxu0
    %670 = vmatpush.bf16.msra.mxu0 %v545
    %671 = vmatpush.bf16.msra.mxu0 %v542
    %672 = vmatpush.bf16.msra.mxu0 %v539
    %673 = vmatpush.bf16.msra.mxu0 %v536
    %674 = vmatpush.bf16.msra.mxu0 %v533
    %675 = vmatpush.bf16.msra.mxu0 %v530
    %676 = vmatpush.bf16.msra.mxu0 %v527
    %677 = vmatpush.bf16.msra.mxu0 %v524
    %678 = vmatmul.bf16.gmra.mxu0 %v288
    %v679 = vpop.f32.mrf.mxu0
    %v680 = vadd.f32 %v358, %v679
    %v681 = vpop.f32.mrf.mxu0
    %682 = vdwg.mxu0
    %683 = vmatpush.bf16.msra.mxu0 %v569
    %684 = vmatpush.bf16.msra.mxu0 %v566
    %685 = vmatpush.bf16.msra.mxu0 %v563
    %686 = vmatpush.bf16.msra.mxu0 %v560
    %687 = vmatpush.bf16.msra.mxu0 %v557
    %688 = vmatpush.bf16.msra.mxu0 %v554
    %689 = vmatpush.bf16.msra.mxu0 %v551
    %690 = vmatpush.bf16.msra.mxu0 %v548
    %691 = vmatmul.bf16.gmra.mxu0 %v289
    %v692 = vpop.f32.mrf.mxu0
    %v693 = vadd.f32 %v680, %v692
    %v694 = vpop.f32.mrf.mxu0
    %695 = vdwg.mxu0
    %v699 = vrot.slane %v667, 6
    %v700 = vrot.slane %v693, 4
    %vm701 = vcmask 1041408
    %v702 = vsel %vm701, %v641, %v699
    %vm703 = vcmask 1043456
    %v704 = vsel %vm703, %v702, %v700
    %706 = vst [vmem:[%s7] sm:$0x3f] %v704
    // Predicated region
    $region42: #{legal_model_forward.7} parent=1 // pred_check
      _
    $region43: #{legal_model_forward.7} parent=1 // pred_check_branch
      %708 = sbr.rel (0) target = $region45
    $region44: #{legal_model_forward.7} parent=1 // pred_region
      _
    $region45: #{legal_model_forward.7} parent=1 // pred_fallthru
      _
    // Predicated region
    $region46: #{legal_model_forward.7} parent=1 // pred_check
      _
    $region47: #{legal_model_forward.7} parent=1 // pred_check_branch
      %710 = sbr.rel (0) target = $region49
    $region48: #{legal_model_forward.7} parent=1 // pred_region
      _
    $region49: #{legal_model_forward.7} parent=1 // pred_fallthru
      _
    %711 = vsyncpa [#allocation3], 1
    %712 = vsyncpa [#allocation5], 1

// kernel: legal_model_forward.6
$region0: #{legal_model_forward.6}
  #allocation0 [shape = 'u32[]', space=smem, size = 0x4, offset = 0x4, fixed_abs, tag = 'smem constant byte address 0x4 - core index']
  #allocation1 [shape = 'u32[72,128]{1,0:T(1,128)}', space=vmem, size = 0x9000, scoped, tag = 'internal scratch']
  #allocation2 [shape = 'f32[8,128]{1,0:T(8,128)}', space=vmem, size = 0x1000, scoped, tag = 'scratch operand']
  %s0 = inlined_call_operand.vmem [shape: f32[16,128], index: 0, kind: input, shape index: {}]
  %s1 = inlined_call_operand.vmem [shape: f32[2,1,8], index: 1, kind: input, shape index: {}]
  %s2 = inlined_call_operand.hbm [shape: bf16[128,384], index: 2, kind: input, shape index: {}]
  %s3 = inlined_call_operand.vmem [shape: f32[1,384], index: 3, kind: input, shape index: {}]
  %s4 = inlined_call_operand.hbm [shape: bf16[128,128], index: 4, kind: input, shape index: {}]
  %s5 = inlined_call_operand.vmem [shape: f32[1,128], index: 5, kind: input, shape index: {}]
  %s6 = inlined_call_operand.vmem [shape: f32[1,128], index: 6, kind: input, shape index: {}]
  %s7 = inlined_call_operand.vmem [shape: f32[1,128], index: 7, kind: input, shape index: {}]
  %s8 = inlined_call_operand.hbm [shape: bf16[128,256], index: 8, kind: input, shape index: {}]
  %s9 = inlined_call_operand.vmem [shape: f32[1,256], index: 9, kind: input, shape index: {}]
  %s10 = inlined_call_operand.hbm [shape: bf16[256,128], index: 10, kind: input, shape index: {}]
  %s11 = inlined_call_operand.vmem [shape: f32[1,128], index: 11, kind: input, shape index: {}]
  %s12 = inlined_call_operand.vmem [shape: f32[1,128], index: 12, kind: input, shape index: {}]
  %s13 = inlined_call_operand.vmem [shape: f32[1,128], index: 13, kind: input, shape index: {}]
  %s14 = inlined_call_operand.vmem [shape: f32[16,128], index: 14, kind: output, shape index: {}]
  %s15 = sld [smem:[#allocation0]]
  $region105: #{legal_model_forward.6} parent=0
    _
  %s17 = ssub.s32 1, %s15
  %s18 = scalar_select 0, %s17, %s15
  $region1: #{legal_model_forward.6} parent=0
    #allocation3 [shape = 'u8[98304]{0}', space=vmem, size = 0x18000, scoped, tag = 'input window, operand 2, single buffered']
    #allocation4 [shape = 's32[2]{0}', space=sflag, size = 0x8, scoped, tag = 'scoped memory for legal_model_forward.6']
    #allocation5 [shape = 'u8[32768]{0}', space=vmem, size = 0x8000, scoped, tag = 'input window, operand 4, single buffered']
    #allocation6 [shape = 's32[1]{0}', space=sflag, size = 0x4, scoped, tag = 'scoped memory for legal_model_forward.6']
    #allocation7 [shape = 'u8[65536]{0}', space=vmem, size = 0x10000, scoped, tag = 'input window, operand 8, single buffered']
    #allocation8 [shape = 'u8[65536]{0}', space=vmem, size = 0x10000, scoped, tag = 'input window, operand 10, single buffered']
    #allocation9 [shape = 's32[1]{0}', space=sflag, size = 0x4, scoped, tag = 'scoped memory for legal_model_forward.6']
    %19 = vsyncpa [#allocation4], 0
    %20 = vsyncpa [#allocation6], 0
    %21 = vsyncpa [#allocation9], 0
    loop: start=0, step=1, limit=4
    $region2: #{legal_model_forward.6} parent=1 // loop_pre_header
      _
    $region3: #{legal_model_forward.6} parent=1 // loop_header
      %s23 = sphi 0, %s27
      %p24 = scmp.ge.s32.totalorder %s23, 4
      %s33 = sphi 0, %s35
      %s36 = sphi 0, %s33
      %s37 = sphi 0, %s36
      %s53 = sphi 0, %s37
      %s59 = sphi 0, %s61
      %s62 = sphi 0, %s59
      %s63 = sphi 0, %s62
      %s79 = sphi 0, %s63
      %s83 = sphi 0, %s83
      %s85 = sphi 0, %s83
      %s86 = sphi 0, %s85
      %s100 = sphi 0, %s86
      %s104 = sphi 0, %s104
      %s106 = sphi 0, %s104
      %s107 = sphi 0, %s106
      %s121 = sphi 0, %s107
      %s125 = sphi 0, %s125
      %s127 = sphi 0, %s125
      %s128 = sphi 0, %s127
      %s142 = sphi 0, %s128
      %s146 = sphi 0, %s146
      %s148 = sphi 0, %s146
      %s149 = sphi 0, %s148
      %s163 = sphi 0, %s149
      %s167 = sphi 0, %s167
      %s169 = sphi 0, %s167
      %s170 = sphi 0, %s169
      %s184 = sphi 0, %s170
      %s188 = sphi 0, %s188
      %s190 = sphi 0, %s188
      %s191 = sphi 0, %s190
      %s205 = sphi 0, %s191
      %s209 = sphi 0, %s209
      %s211 = sphi 0, %s209
      %s212 = sphi 0, %s211
      %s226 = sphi 0, %s212
      %s230 = sphi 0, %s230
      %s232 = sphi 0, %s230
      %s233 = sphi 0, %s232
      %s247 = sphi 0, %s233
      %s251 = sphi 0, %s251
      %s253 = sphi 0, %s251
      %s254 = sphi 0, %s253
      %s268 = sphi 0, %s254
      %s272 = sphi 0, %s272
      %s274 = sphi 0, %s272
      %s275 = sphi 0, %s274
      %s289 = sphi 0, %s275
      %s293 = sphi 0, %s293
      %s295 = sphi 0, %s293
      %s296 = sphi 0, %s295
      %s310 = sphi 0, %s296
      %s314 = sphi 0, %s314
      %s316 = sphi 0, %s314
      %s317 = sphi 0, %s316
      %s331 = sphi 0, %s317
      %s337 = sphi 0, %s339
      %s340 = sphi 0, %s337
      %s341 = sphi 0, %s340
      %s357 = sphi 0, %s341
    $region4: #{legal_model_forward.6} parent=1 // loop_header_branch
      %26 = sbr.rel (%p24) target = $region8
    $region5: #{legal_model_forward.6} parent=1 // loop_body
      %s28 = ssub.s32 %s23, 1
      %s29 = ssub.s32 %s23, 2
      %s30 = sadd.s32 %s23, 1
      %s31 = ssub.s32 %s23, %s30
      %p32 = scmp.eq.s32.totalorder %s31, 0
      %s34 = sadd.s32 %s33, 1
      %s35 = scalar_select %p32, %s33, %s34
      %p38 = pneg %p32
      %p39 = scmp.eq.s32.totalorder %s23, 1
      %p40 = por %p38, %p39
      %p41 = scmp.ne.s32.totalorder %s33, %s36
      %p42 = scmp.eq.s32.totalorder %s23, 0
      %p43 = por %p41, %p42
      %p44 = scmp.ne.s32.totalorder %s33, %s36
      %p45 = scmp.eq.s32.totalorder %s28, 1
      %p46 = por %p44, %p45
      %p47 = scmp.ne.s32.totalorder %s36, %s37
      %p48 = scmp.eq.s32.totalorder %s28, 0
      %p49 = por %p47, %p48
      %p50 = scmp.ne.s32.totalorder %s36, %s37
      %p51 = scmp.eq.s32.totalorder %s29, 1
      %p52 = por %p50, %p51
      %p54 = scmp.ne.s32.totalorder %s37, %s53
      %p55 = scmp.eq.s32.totalorder %s29, 0
      %p56 = por %p54, %p55
      %s57 = ssub.s32 %s23, %s30
      %p58 = scmp.eq.s32.totalorder %s57, 0
      %s60 = sadd.s32 %s59, 1
      %s61 = scalar_select %p58, %s59, %s60
      %p64 = pneg %p58
      %p65 = scmp.eq.s32.totalorder %s23, 1
      %p66 = por %p64, %p65
      %p67 = scmp.ne.s32.totalorder %s59, %s62
      %p68 = scmp.eq.s32.totalorder %s23, 0
      %p69 = por %p67, %p68
      %p70 = scmp.ne.s32.totalorder %s59, %s62
      %p71 = scmp.eq.s32.totalorder %s28, 1
      %p72 = por %p70, %p71
      %p73 = scmp.ne.s32.totalorder %s62, %s63
      %p74 = scmp.eq.s32.totalorder %s28, 0
      %p75 = por %p73, %p74
      %p76 = scmp.ne.s32.totalorder %s62, %s63
      %p77 = scmp.eq.s32.totalorder %s29, 1
      %p78 = por %p76, %p77
      %p80 = scmp.ne.s32.totalorder %s63, %s79
      %p81 = scmp.eq.s32.totalorder %s29, 0
      %p82 = por %p80, %p81
      %s84 = sadd.s32 %s83, 1
      %p87 = scmp.eq.s32.totalorder %s23, 1
      %p88 = scmp.ne.s32.totalorder %s83, %s85
      %p89 = scmp.eq.s32.totalorder %s23, 0
      %p90 = por %p88, %p89
      %p91 = scmp.ne.s32.totalorder %s83, %s85
      %p92 = scmp.eq.s32.totalorder %s28, 1
      %p93 = por %p91, %p92
      %p94 = scmp.ne.s32.totalorder %s85, %s86
      %p95 = scmp.eq.s32.totalorder %s28, 0
      %p96 = por %p94, %p95
      %p97 = scmp.ne.s32.totalorder %s85, %s86
      %p98 = scmp.eq.s32.totalorder %s29, 1
      %p99 = por %p97, %p98
      %p101 = scmp.ne.s32.totalorder %s86, %s100
      %p102 = scmp.eq.s32.totalorder %s29, 0
      %p103 = por %p101, %p102
      %s105 = sadd.s32 %s104, 1
      %p108 = scmp.eq.s32.totalorder %s23, 1
      %p109 = scmp.ne.s32.totalorder %s104, %s106
      %p110 = scmp.eq.s32.totalorder %s23, 0
      %p111 = por %p109, %p110
      %p112 = scmp.ne.s32.totalorder %s104, %s106
      %p113 = scmp.eq.s32.totalorder %s28, 1
      %p114 = por %p112, %p113
      %p115 = scmp.ne.s32.totalorder %s106, %s107
      %p116 = scmp.eq.s32.totalorder %s28, 0
      %p117 = por %p115, %p116
      %p118 = scmp.ne.s32.totalorder %s106, %s107
      %p119 = scmp.eq.s32.totalorder %s29, 1
      %p120 = por %p118, %p119
      %p122 = scmp.ne.s32.totalorder %s107, %s121
      %p123 = scmp.eq.s32.totalorder %s29, 0
      %p124 = por %p122, %p123
      %s126 = sadd.s32 %s125, 1
      %p129 = scmp.eq.s32.totalorder %s23, 1
      %p130 = scmp.ne.s32.totalorder %s125, %s127
      %p131 = scmp.eq.s32.totalorder %s23, 0
      %p132 = por %p130, %p131
      %p133 = scmp.ne.s32.totalorder %s125, %s127
      %p134 = scmp.eq.s32.totalorder %s28, 1
      %p135 = por %p133, %p134
      %p136 = scmp.ne.s32.totalorder %s127, %s128
      %p137 = scmp.eq.s32.totalorder %s28, 0
      %p138 = por %p136, %p137
      %p139 = scmp.ne.s32.totalorder %s127, %s128
      %p140 = scmp.eq.s32.totalorder %s29, 1
      %p141 = por %p139, %p140
      %p143 = scmp.ne.s32.totalorder %s128, %s142
      %p144 = scmp.eq.s32.totalorder %s29, 0
      %p145 = por %p143, %p144
      %s147 = sadd.s32 %s146, 1
      %p150 = scmp.eq.s32.totalorder %s23, 1
      %p151 = scmp.ne.s32.totalorder %s146, %s148
      %p152 = scmp.eq.s32.totalorder %s23, 0
      %p153 = por %p151, %p152
      %p154 = scmp.ne.s32.totalorder %s146, %s148
      %p155 = scmp.eq.s32.totalorder %s28, 1
      %p156 = por %p154, %p155
      %p157 = scmp.ne.s32.totalorder %s148, %s149
      %p158 = scmp.eq.s32.totalorder %s28, 0
      %p159 = por %p157, %p158
      %p160 = scmp.ne.s32.totalorder %s148, %s149
      %p161 = scmp.eq.s32.totalorder %s29, 1
      %p162 = por %p160, %p161
      %p164 = scmp.ne.s32.totalorder %s149, %s163
      %p165 = scmp.eq.s32.totalorder %s29, 0
      %p166 = por %p164, %p165
      %s168 = sadd.s32 %s167, 1
      %p171 = scmp.eq.s32.totalorder %s23, 1
      %p172 = scmp.ne.s32.totalorder %s167, %s169
      %p173 = scmp.eq.s32.totalorder %s23, 0
      %p174 = por %p172, %p173
      %p175 = scmp.ne.s32.totalorder %s167, %s169
      %p176 = scmp.eq.s32.totalorder %s28, 1
      %p177 = por %p175, %p176
      %p178 = scmp.ne.s32.totalorder %s169, %s170
      %p179 = scmp.eq.s32.totalorder %s28, 0
      %p180 = por %p178, %p179
      %p181 = scmp.ne.s32.totalorder %s169, %s170
      %p182 = scmp.eq.s32.totalorder %s29, 1
      %p183 = por %p181, %p182
      %p185 = scmp.ne.s32.totalorder %s170, %s184
      %p186 = scmp.eq.s32.totalorder %s29, 0
      %p187 = por %p185, %p186
      %s189 = sadd.s32 %s188, 1
      %p192 = scmp.eq.s32.totalorder %s23, 1
      %p193 = scmp.ne.s32.totalorder %s188, %s190
      %p194 = scmp.eq.s32.totalorder %s23, 0
      %p195 = por %p193, %p194
      %p196 = scmp.ne.s32.totalorder %s188, %s190
      %p197 = scmp.eq.s32.totalorder %s28, 1
      %p198 = por %p196, %p197
      %p199 = scmp.ne.s32.totalorder %s190, %s191
      %p200 = scmp.eq.s32.totalorder %s28, 0
      %p201 = por %p199, %p200
      %p202 = scmp.ne.s32.totalorder %s190, %s191
      %p203 = scmp.eq.s32.totalorder %s29, 1
      %p204 = por %p202, %p203
      %p206 = scmp.ne.s32.totalorder %s191, %s205
      %p207 = scmp.eq.s32.totalorder %s29, 0
      %p208 = por %p206, %p207
      %s210 = sadd.s32 %s209, 1
      %p213 = scmp.eq.s32.totalorder %s23, 1
      %p214 = scmp.ne.s32.totalorder %s209, %s211
      %p215 = scmp.eq.s32.totalorder %s23, 0
      %p216 = por %p214, %p215
      %p217 = scmp.ne.s32.totalorder %s209, %s211
      %p218 = scmp.eq.s32.totalorder %s28, 1
      %p219 = por %p217, %p218
      %p220 = scmp.ne.s32.totalorder %s211, %s212
      %p221 = scmp.eq.s32.totalorder %s28, 0
      %p222 = por %p220, %p221
      %p223 = scmp.ne.s32.totalorder %s211, %s212
      %p224 = scmp.eq.s32.totalorder %s29, 1
      %p225 = por %p223, %p224
      %p227 = scmp.ne.s32.totalorder %s212, %s226
      %p228 = scmp.eq.s32.totalorder %s29, 0
      %p229 = por %p227, %p228
      %s231 = sadd.s32 %s230, 1
      %p234 = scmp.eq.s32.totalorder %s23, 1
      %p235 = scmp.ne.s32.totalorder %s230, %s232
      %p236 = scmp.eq.s32.totalorder %s23, 0
      %p237 = por %p235, %p236
      %p238 = scmp.ne.s32.totalorder %s230, %s232
      %p239 = scmp.eq.s32.totalorder %s28, 1
      %p240 = por %p238, %p239
      %p241 = scmp.ne.s32.totalorder %s232, %s233
      %p242 = scmp.eq.s32.totalorder %s28, 0
      %p243 = por %p241, %p242
      %p244 = scmp.ne.s32.totalorder %s232, %s233
      %p245 = scmp.eq.s32.totalorder %s29, 1
      %p246 = por %p244, %p245
      %p248 = scmp.ne.s32.totalorder %s233, %s247
      %p249 = scmp.eq.s32.totalorder %s29, 0
      %p250 = por %p248, %p249
      %s252 = sadd.s32 %s251, 1
      %p255 = scmp.eq.s32.totalorder %s23, 1
      %p256 = scmp.ne.s32.totalorder %s251, %s253
      %p257 = scmp.eq.s32.totalorder %s23, 0
      %p258 = por %p256, %p257
      %p259 = scmp.ne.s32.totalorder %s251, %s253
      %p260 = scmp.eq.s32.totalorder %s28, 1
      %p261 = por %p259, %p260
      %p262 = scmp.ne.s32.totalorder %s253, %s254
      %p263 = scmp.eq.s32.totalorder %s28, 0
      %p264 = por %p262, %p263
      %p265 = scmp.ne.s32.totalorder %s253, %s254
      %p266 = scmp.eq.s32.totalorder %s29, 1
      %p267 = por %p265, %p266
      %p269 = scmp.ne.s32.totalorder %s254, %s268
      %p270 = scmp.eq.s32.totalorder %s29, 0
      %p271 = por %p269, %p270
      %s273 = sadd.s32 %s272, 1
      %p276 = scmp.eq.s32.totalorder %s23, 1
      %p277 = scmp.ne.s32.totalorder %s272, %s274
      %p278 = scmp.eq.s32.totalorder %s23, 0
      %p279 = por %p277, %p278
      %p280 = scmp.ne.s32.totalorder %s272, %s274
      %p281 = scmp.eq.s32.totalorder %s28, 1
      %p282 = por %p280, %p281
      %p283 = scmp.ne.s32.totalorder %s274, %s275
      %p284 = scmp.eq.s32.totalorder %s28, 0
      %p285 = por %p283, %p284
      %p286 = scmp.ne.s32.totalorder %s274, %s275
      %p287 = scmp.eq.s32.totalorder %s29, 1
      %p288 = por %p286, %p287
      %p290 = scmp.ne.s32.totalorder %s275, %s289
      %p291 = scmp.eq.s32.totalorder %s29, 0
      %p292 = por %p290, %p291
      %s294 = sadd.s32 %s293, 1
      %p297 = scmp.eq.s32.totalorder %s23, 1
      %p298 = scmp.ne.s32.totalorder %s293, %s295
      %p299 = scmp.eq.s32.totalorder %s23, 0
      %p300 = por %p298, %p299
      %p301 = scmp.ne.s32.totalorder %s293, %s295
      %p302 = scmp.eq.s32.totalorder %s28, 1
      %p303 = por %p301, %p302
      %p304 = scmp.ne.s32.totalorder %s295, %s296
      %p305 = scmp.eq.s32.totalorder %s28, 0
      %p306 = por %p304, %p305
      %p307 = scmp.ne.s32.totalorder %s295, %s296
      %p308 = scmp.eq.s32.totalorder %s29, 1
      %p309 = por %p307, %p308
      %p311 = scmp.ne.s32.totalorder %s296, %s310
      %p312 = scmp.eq.s32.totalorder %s29, 0
      %p313 = por %p311, %p312
      %s315 = sadd.s32 %s314, 1
      %p318 = scmp.eq.s32.totalorder %s23, 1
      %p319 = scmp.ne.s32.totalorder %s314, %s316
      %p320 = scmp.eq.s32.totalorder %s23, 0
      %p321 = por %p319, %p320
      %p322 = scmp.ne.s32.totalorder %s314, %s316
      %p323 = scmp.eq.s32.totalorder %s28, 1
      %p324 = por %p322, %p323
      %p325 = scmp.ne.s32.totalorder %s316, %s317
      %p326 = scmp.eq.s32.totalorder %s28, 0
      %p327 = por %p325, %p326
      %p328 = scmp.ne.s32.totalorder %s316, %s317
      %p329 = scmp.eq.s32.totalorder %s29, 1
      %p330 = por %p328, %p329
      %p332 = scmp.ne.s32.totalorder %s317, %s331
      %p333 = scmp.eq.s32.totalorder %s29, 0
      %p334 = por %p332, %p333
      %s335 = ssub.s32 %s23, %s30
      %p336 = scmp.eq.s32.totalorder %s335, 0
      %s338 = sadd.s32 %s337, 1
      %s339 = scalar_select %p336, %s337, %s338
      %p342 = pneg %p336
      %p343 = scmp.eq.s32.totalorder %s23, 1
      %p344 = por %p342, %p343
      %p345 = scmp.ne.s32.totalorder %s337, %s340
      %p346 = scmp.eq.s32.totalorder %s23, 0
      %p347 = por %p345, %p346
      %p348 = scmp.ne.s32.totalorder %s337, %s340
      %p349 = scmp.eq.s32.totalorder %s28, 1
      %p350 = por %p348, %p349
      %p351 = scmp.ne.s32.totalorder %s340, %s341
      %p352 = scmp.eq.s32.totalorder %s28, 0
      %p353 = por %p351, %p352
      %p354 = scmp.ne.s32.totalorder %s340, %s341
      %p355 = scmp.eq.s32.totalorder %s29, 1
      %p356 = por %p354, %p355
      %p358 = scmp.ne.s32.totalorder %s341, %s357
      %p359 = scmp.eq.s32.totalorder %s29, 0
      %p360 = por %p358, %p359
      %p361 = scmp.le.s32.totalorder 1, %s23
      %p362 = scmp.lt.s32.totalorder %s23, 3
      %p363 = pnand %p361, %p362
      %p364 = pneg %p363
      // Predicated region
      $region9: #{legal_model_forward.6} parent=5 // pred_check
        _
      $region10: #{legal_model_forward.6} parent=5 // pred_check_branch
        %366 = sbr.rel (%p363) target = $region12
      $region11: #{legal_model_forward.6} parent=5 // pred_region
        %s367 = ssub.s32 %s23, 1
        // Predicated region
        $region13: #{legal_model_forward.6} parent=11 // pred_check
          %p368 = pneg %p96
        $region14: #{legal_model_forward.6} parent=11 // pred_check_branch
          %370 = sbr.rel (%p368) target = $region16
        $region15: #{legal_model_forward.6} parent=11 // pred_region
          %372 = vsyncadd [#allocation4], 0
          %s373 = sshll.u32 %s2, 4
          %s374 = int_to_ptr.hbm [resolvable:$true] %s373
          %s375 = sshll.u32 [#allocation3], 4
          %s376 = int_to_ptr.vmem [resolvable:$true] %s375
          %381 = dma.hbm_to_vmem [thread:$0]  %s374, 3072, %s376, [#allocation4], 192, 192, 12
        $region16: #{legal_model_forward.6} parent=11 // pred_fallthru
          _
        // Predicated region
        $region17: #{legal_model_forward.6} parent=11 // pred_check
          %p382 = pneg %p117
        $region18: #{legal_model_forward.6} parent=11 // pred_check_branch
          %384 = sbr.rel (%p382) target = $region20
        $region19: #{legal_model_forward.6} parent=11 // pred_region
          _
        $region20: #{legal_model_forward.6} parent=11 // pred_fallthru
          _
        // Predicated region
        $region21: #{legal_model_forward.6} parent=11 // pred_check
          %p385 = pneg %p138
        $region22: #{legal_model_forward.6} parent=11 // pred_check_branch
          %387 = sbr.rel (%p385) target = $region24
        $region23: #{legal_model_forward.6} parent=11 // pred_region
          %389 = vsyncadd [#allocation6], 0
          %s390 = sshll.u32 %s4, 4
          %s391 = int_to_ptr.hbm [resolvable:$true] %s390
          %s392 = sshll.u32 [#allocation5], 4
          %s393 = int_to_ptr.vmem [resolvable:$true] %s392
          %398 = dma.hbm_to_vmem [thread:$0]  %s391, 1024, %s393, [#allocation6], 64, 64, 4
        $region24: #{legal_model_forward.6} parent=11 // pred_fallthru
          _
        // Predicated region
        $region25: #{legal_model_forward.6} parent=11 // pred_check
          %p399 = pneg %p159
        $region26: #{legal_model_forward.6} parent=11 // pred_check_branch
          %401 = sbr.rel (%p399) target = $region28
        $region27: #{legal_model_forward.6} parent=11 // pred_region
          _
        $region28: #{legal_model_forward.6} parent=11 // pred_fallthru
          _
        // Predicated region
        $region29: #{legal_model_forward.6} parent=11 // pred_check
          %p402 = pneg %p180
        $region30: #{legal_model_forward.6} parent=11 // pred_check_branch
          %404 = sbr.rel (%p402) target = $region32
        $region31: #{legal_model_forward.6} parent=11 // pred_region
          _
        $region32: #{legal_model_forward.6} parent=11 // pred_fallthru
          _
        // Predicated region
        $region33: #{legal_model_forward.6} parent=11 // pred_check
          %p405 = pneg %p201
        $region34: #{legal_model_forward.6} parent=11 // pred_check_branch
          %407 = sbr.rel (%p405) target = $region36
        $region35: #{legal_model_forward.6} parent=11 // pred_region
          _
        $region36: #{legal_model_forward.6} parent=11 // pred_fallthru
          _
        // Predicated region
        $region37: #{legal_model_forward.6} parent=11 // pred_check
          %p408 = pneg %p222
        $region38: #{legal_model_forward.6} parent=11 // pred_check_branch
          %410 = sbr.rel (%p408) target = $region40
        $region39: #{legal_model_forward.6} parent=11 // pred_region
          %412 = vsyncadd [#allocation6], 0
          %s413 = sshll.u32 %s8, 4
          %s414 = int_to_ptr.hbm [resolvable:$true] %s413
          %s415 = sshll.u32 [#allocation7], 4
          %s416 = int_to_ptr.vmem [resolvable:$true] %s415
          %421 = dma.hbm_to_vmem [thread:$0]  %s414, 2048, %s416, [#allocation6], 128, 128, 8
        $region40: #{legal_model_forward.6} parent=11 // pred_fallthru
          _
        // Predicated region
        $region41: #{legal_model_forward.6} parent=11 // pred_check
          %p422 = pneg %p243
        $region42: #{legal_model_forward.6} parent=11 // pred_check_branch
          %424 = sbr.rel (%p422) target = $region44
        $region43: #{legal_model_forward.6} parent=11 // pred_region
          _
        $region44: #{legal_model_forward.6} parent=11 // pred_fallthru
          _
        // Predicated region
        $region45: #{legal_model_forward.6} parent=11 // pred_check
          %p425 = pneg %p264
        $region46: #{legal_model_forward.6} parent=11 // pred_check_branch
          %427 = sbr.rel (%p425) target = $region48
        $region47: #{legal_model_forward.6} parent=11 // pred_region
          %429 = vsyncadd [#allocation9], 0
          %s430 = sshll.u32 %s10, 4
          %s431 = int_to_ptr.hbm [resolvable:$true] %s430
          %s432 = sshll.u32 [#allocation8], 4
          %s433 = int_to_ptr.vmem [resolvable:$true] %s432
          %438 = dma.hbm_to_vmem [thread:$0]  %s431, 2048, %s433, [#allocation9], 64, 64, 4
        $region48: #{legal_model_forward.6} parent=11 // pred_fallthru
          _
        // Predicated region
        $region49: #{legal_model_forward.6} parent=11 // pred_check
          %p439 = pneg %p285
        $region50: #{legal_model_forward.6} parent=11 // pred_check_branch
          %441 = sbr.rel (%p439) target = $region52
        $region51: #{legal_model_forward.6} parent=11 // pred_region
          _
        $region52: #{legal_model_forward.6} parent=11 // pred_fallthru
          _
        // Predicated region
        $region53: #{legal_model_forward.6} parent=11 // pred_check
          %p442 = pneg %p306
        $region54: #{legal_model_forward.6} parent=11 // pred_check_branch
          %444 = sbr.rel (%p442) target = $region56
        $region55: #{legal_model_forward.6} parent=11 // pred_region
          _
        $region56: #{legal_model_forward.6} parent=11 // pred_fallthru
          _
        // Predicated region
        $region57: #{legal_model_forward.6} parent=11 // pred_check
          %p445 = pneg %p327
        $region58: #{legal_model_forward.6} parent=11 // pred_check_branch
          %447 = sbr.rel (%p445) target = $region60
        $region59: #{legal_model_forward.6} parent=11 // pred_region
          _
        $region60: #{legal_model_forward.6} parent=11 // pred_fallthru
          _
      $region12: #{legal_model_forward.6} parent=5 // pred_fallthru
        _
      %p448 = scmp.lt.s32.totalorder %s23, 2
      // Predicated region
      $region61: #{legal_model_forward.6} parent=5 // pred_check
        %p449 = pneg %p448
      $region62: #{legal_model_forward.6} parent=5 // pred_check_branch
        %451 = sbr.rel (%p449) target = $region64
      $region63: #{legal_model_forward.6} parent=5 // pred_region
        // Predicated region
        $region65: #{legal_model_forward.6} parent=63 // pred_check
          %p452 = pneg %p43
        $region66: #{legal_model_forward.6} parent=63 // pred_check_branch
          %454 = sbr.rel (%p452) target = $region68
        $region67: #{legal_model_forward.6} parent=63 // pred_region
          %p455 = scmp.lt.s32.totalorder %s23, 1
          %s456 = scalar_select %p455, %s23, 1
          %s457 = smul.addr %s456, 8
          %s458 = scalar_lea.vmem %s0, %s457
        $region68: #{legal_model_forward.6} parent=63 // pred_fallthru
          _
        // Predicated region
        $region69: #{legal_model_forward.6} parent=63 // pred_check
          %p459 = pneg %p69
        $region70: #{legal_model_forward.6} parent=63 // pred_check_branch
          %461 = sbr.rel (%p459) target = $region72
        $region71: #{legal_model_forward.6} parent=63 // pred_region
          %p462 = scmp.lt.s32.totalorder %s23, 1
          %s463 = scalar_select %p462, %s23, 1
          %s464 = scalar_lea.vmem %s1, %s463
        $region72: #{legal_model_forward.6} parent=63 // pred_fallthru
          _
      $region64: #{legal_model_forward.6} parent=5 // pred_fallthru
        _
      %p465 = scmp.le.s32.totalorder 1, %s23
      %p466 = scmp.lt.s32.totalorder %s23, 3
      %p467 = pnand %p465, %p466
      %p468 = pneg %p467
      // Predicated region
      $region73: #{legal_model_forward.6} parent=5 // pred_check
        _
      $region74: #{legal_model_forward.6} parent=5 // pred_check_branch
        %470 = sbr.rel (%p467) target = $region76
      $region75: #{legal_model_forward.6} parent=5 // pred_region
        %s471 = ssub.s32 %s23, 1
        // Predicated region
        $region77: #{legal_model_forward.6} parent=75 // pred_check
          %p472 = pneg %p96
        $region78: #{legal_model_forward.6} parent=75 // pred_check_branch
          %474 = sbr.rel (%p472) target = $region80
        $region79: #{legal_model_forward.6} parent=75 // pred_region
          %476 = dma.done [#allocation4], 3072
        $region80: #{legal_model_forward.6} parent=75 // pred_fallthru
          _
        // Predicated region
        $region81: #{legal_model_forward.6} parent=75 // pred_check
          %p477 = pneg %p138
        $region82: #{legal_model_forward.6} parent=75 // pred_check_branch
          %479 = sbr.rel (%p477) target = $region84
        $region83: #{legal_model_forward.6} parent=75 // pred_region
          %481 = dma.done [#allocation6], 1024
        $region84: #{legal_model_forward.6} parent=75 // pred_fallthru
          _
        // Predicated region
        $region85: #{legal_model_forward.6} parent=75 // pred_check
          %p482 = pneg %p222
        $region86: #{legal_model_forward.6} parent=75 // pred_check_branch
          %484 = sbr.rel (%p482) target = $region88
        $region87: #{legal_model_forward.6} parent=75 // pred_region
          %486 = dma.done [#allocation6], 2048
        $region88: #{legal_model_forward.6} parent=75 // pred_fallthru
          _
        // Predicated region
        $region89: #{legal_model_forward.6} parent=75 // pred_check
          %p487 = pneg %p264
        $region90: #{legal_model_forward.6} parent=75 // pred_check_branch
          %489 = sbr.rel (%p487) target = $region92
        $region91: #{legal_model_forward.6} parent=75 // pred_region
          %491 = dma.done [#allocation9], 2048
        $region92: #{legal_model_forward.6} parent=75 // pred_fallthru
          _
        %p492 = scmp.lt.s32.totalorder %s28, 1
        %s493 = scalar_select %p492, %s28, 1
        %s494 = smul.addr %s493, 8
        %s495 = scalar_lea.vmem %s0, %s494
        %p496 = pneg %p49
        %p497 = pneg %p46
        %p498 = scmp.lt.s32.totalorder %s28, 1
        %s499 = scalar_select %p498, %s28, 1
        %s500 = scalar_lea.vmem %s1, %s499
        %p501 = pneg %p75
        %p502 = pneg %p72
        %p503 = pneg %p96
        %p504 = pneg %p93
        %p505 = pneg %p117
        %p506 = pneg %p114
        %p507 = pneg %p138
        %p508 = pneg %p135
        %p509 = pneg %p159
        %p510 = pneg %p156
        %p511 = pneg %p180
        %p512 = pneg %p177
        %p513 = pneg %p201
        %p514 = pneg %p198
        %p515 = pneg %p222
        %p516 = pneg %p219
        %p517 = pneg %p243
        %p518 = pneg %p240
        %p519 = pneg %p264
        %p520 = pneg %p261
        %p521 = pneg %p285
        %p522 = pneg %p282
        %p523 = pneg %p306
        %p524 = pneg %p303
        %p525 = pneg %p327
        %p526 = pneg %p324
        %p527 = pneg %p353
        %p528 = pneg %p350
        %p529 = scmp.lt.s32.totalorder %s28, 1
        %s530 = scalar_select %p529, %s28, 1
        %s531 = smul.addr %s530, 8
        %s532 = scalar_lea.vmem %s14, %s531
        %p533 = scmp.lt.s32.totalorder %s28, 1
        %s534 = scalar_select %p533, %s28, 1
        %s535 = smul.addr %s534, 8
        %s536 = scalar_lea.vmem %s0, %s535
        %p537 = scmp.lt.s32.totalorder %s28, 1
        %s538 = scalar_select %p537, %s28, 1
        %s539 = scalar_lea.vmem %s1, %s538
        %p540 = scmp.lt.s32.totalorder %s28, 1
        %s541 = scalar_select %p540, %s28, 1
        %s542 = smul.addr %s541, 8
        %s543 = scalar_lea.vmem %s14, %s542
        %v545 = vld [vmem:[%s536] sm:$0xff]
        %v546 = vpack.c.bf16 %v545, %v545
        %v547 = vld [vmem:[#allocation3] sm:$0xff]
        %v548 = vld [vmem:[#allocation3 + $0x8] sm:$0xf]
        %v549 = vld [vmem:[#allocation3 + $0xc] sm:$0xff]
        %v550 = vld [vmem:[#allocation3 + $0x14] sm:$0xf]
        %v551 = vld [vmem:[#allocation3 + $0x18] sm:$0xff]
        %v552 = vld [vmem:[#allocation3 + $0x20] sm:$0xf]
        %v553 = vld [vmem:[#allocation3 + $0x24] sm:$0xff]
        %v554 = vld [vmem:[#allocation3 + $0x2c] sm:$0xf]
        %v555 = vld [vmem:[#allocation3 + $0x30] sm:$0xff]
        %v556 = vld [vmem:[#allocation3 + $0x38] sm:$0xf]
        %v557 = vld [vmem:[#allocation3 + $0x3c] sm:$0xff]
        %v558 = vld [vmem:[#allocation3 + $0x44] sm:$0xf]
        %v559 = vld [vmem:[#allocation3 + $0x48] sm:$0xff]
        %v560 = vld [vmem:[#allocation3 + $0x50] sm:$0xf]
        %v561 = vld [vmem:[#allocation3 + $0x54] sm:$0xff]
        %v562 = vld [vmem:[#allocation3 + $0x5c] sm:$0xf]
        %v563 = vld [vmem:[#allocation3 + $0x60] sm:$0xff]
        %v564 = vld [vmem:[#allocation3 + $0x68] sm:$0xf]
        %v565 = vld [vmem:[#allocation3 + $0x6c] sm:$0xff]
        %v566 = vld [vmem:[#allocation3 + $0x74] sm:$0xf]
        %v567 = vld [vmem:[#allocation3 + $0x78] sm:$0xff]
        %v568 = vld [vmem:[#allocation3 + $0x80] sm:$0xf]
        %v569 = vld [vmem:[#allocation3 + $0x84] sm:$0xff]
        %v570 = vld [vmem:[#allocation3 + $0x8c] sm:$0xf]
        %v571 = vld [vmem:[#allocation3 + $0x90] sm:$0xff]
        %v572 = vld [vmem:[#allocation3 + $0x98] sm:$0xf]
        %v573 = vld [vmem:[#allocation3 + $0x9c] sm:$0xff]
        %v574 = vld [vmem:[#allocation3 + $0xa4] sm:$0xf]
        %v575 = vld [vmem:[#allocation3 + $0xa8] sm:$0xff]
        %v576 = vld [vmem:[#allocation3 + $0xb0] sm:$0xf]
        %v577 = vld [vmem:[#allocation3 + $0xb4] sm:$0xff]
        %v578 = vld [vmem:[#allocation3 + $0xbc] sm:$0xf]
        %v579 = vld [vmem:[%s3] sm:$0x7]
        %v581 = vperm.slane %v579, 0
        %v582 = vperm.slane %v579, 1
        %v583 = vperm.slane %v579, 2
        %v619 = vunpack.c.l.b16 %v547
        %v620 = vunpack.c.h.b16 %v547
        %v621 = vunpack.c.l.b16 %v548
        %v622 = vunpack.c.l.b16 %v549
        %v623 = vunpack.c.h.b16 %v549
        %v624 = vunpack.c.l.b16 %v550
        %v625 = vunpack.c.l.b16 %v551
        %v626 = vunpack.c.h.b16 %v551
        %v627 = vunpack.c.l.b16 %v552
        %v628 = vunpack.c.l.b16 %v553
        %v629 = vunpack.c.h.b16 %v553
        %v630 = vunpack.c.l.b16 %v554
        %v631 = vunpack.c.l.b16 %v555
        %v632 = vunpack.c.h.b16 %v555
        %v633 = vunpack.c.l.b16 %v556
        %v634 = vunpack.c.l.b16 %v557
        %v635 = vunpack.c.h.b16 %v557
        %v636 = vunpack.c.l.b16 %v558
        %v637 = vunpack.c.l.b16 %v559
        %v638 = vunpack.c.h.b16 %v559
        %v639 = vunpack.c.l.b16 %v560
        %v640 = vunpack.c.l.b16 %v561
        %v641 = vunpack.c.h.b16 %v561
        %v642 = vunpack.c.l.b16 %v562
        %v643 = vunpack.c.l.b16 %v563
        %v644 = vunpack.c.h.b16 %v563
        %v645 = vunpack.c.l.b16 %v564
        %v646 = vunpack.c.l.b16 %v565
        %v647 = vunpack.c.h.b16 %v565
        %v648 = vunpack.c.l.b16 %v566
        %v649 = vunpack.c.l.b16 %v567
        %v650 = vunpack.c.h.b16 %v567
        %v651 = vunpack.c.l.b16 %v568
        %v652 = vunpack.c.l.b16 %v569
        %v653 = vunpack.c.h.b16 %v569
        %v654 = vunpack.c.l.b16 %v570
        %v655 = vunpack.c.l.b16 %v571
        %v656 = vunpack.c.h.b16 %v571
        %v657 = vunpack.c.l.b16 %v572
        %v658 = vunpack.c.l.b16 %v573
        %v659 = vunpack.c.h.b16 %v573
        %v660 = vunpack.c.l.b16 %v574
        %v661 = vunpack.c.l.b16 %v575
        %v662 = vunpack.c.h.b16 %v575
        %v663 = vunpack.c.l.b16 %v576
        %v664 = vunpack.c.l.b16 %v577
        %v665 = vunpack.c.h.b16 %v577
        %v666 = vunpack.c.l.b16 %v578
        %v667 = vpack.c.b16 %v622, %v619
        %v668 = vpack.c.b16 %v623, %v620
        %v669 = vpack.c.b16 %v624, %v621
        %v670 = vpack.c.b16 %v628, %v625
        %v671 = vpack.c.b16 %v629, %v626
        %v672 = vpack.c.b16 %v630, %v627
        %v673 = vpack.c.b16 %v634, %v631
        %v674 = vpack.c.b16 %v635, %v632
        %v675 = vpack.c.b16 %v636, %v633
        %v676 = vpack.c.b16 %v640, %v637
        %v677 = vpack.c.b16 %v641, %v638
        %v678 = vpack.c.b16 %v642, %v639
        %v679 = vpack.c.b16 %v646, %v643
        %v680 = vpack.c.b16 %v647, %v644
        %v681 = vpack.c.b16 %v648, %v645
        %v682 = vpack.c.b16 %v652, %v649
        %v683 = vpack.c.b16 %v653, %v650
        %v684 = vpack.c.b16 %v654, %v651
        %v685 = vpack.c.b16 %v658, %v655
        %v686 = vpack.c.b16 %v659, %v656
        %v687 = vpack.c.b16 %v660, %v657
        %v688 = vpack.c.b16 %v664, %v661
        %v689 = vpack.c.b16 %v665, %v662
        %v690 = vpack.c.b16 %v666, %v663
        %715 = vmatpush.bf16.msra.mxu0 %v688
        %716 = vmatpush.bf16.msra.mxu0 %v685
        %717 = vmatpush.bf16.msra.mxu0 %v682
        %718 = vmatpush.bf16.msra.mxu0 %v679
        %719 = vmatpush.bf16.msra.mxu0 %v676
        %720 = vmatpush.bf16.msra.mxu0 %v673
        %721 = vmatpush.bf16.msra.mxu0 %v670
        %722 = vmatpush.bf16.msra.mxu0 %v667
        %723 = vmatmul.bf16.gmra.mxu0 %v546
        %v724 = vpop.f32.mrf.mxu0
        %v725 = vadd.f32 %v581, %v724
        %v726 = vpop.f32.mrf.mxu0
        %727 = vdwg.mxu0
        %728 = vmatpush.bf16.msra.mxu0 %v689
        %729 = vmatpush.bf16.msra.mxu0 %v686
        %730 = vmatpush.bf16.msra.mxu0 %v683
        %731 = vmatpush.bf16.msra.mxu0 %v680
        %732 = vmatpush.bf16.msra.mxu0 %v677
        %733 = vmatpush.bf16.msra.mxu0 %v674
        %734 = vmatpush.bf16.msra.mxu0 %v671
        %735 = vmatpush.bf16.msra.mxu0 %v668
        %736 = vmatmul.bf16.gmra.mxu0 %v546
        %v737 = vpop.f32.mrf.mxu0
        %v738 = vadd.f32 %v582, %v737
        %v739 = vpop.f32.mrf.mxu0
        %740 = vdwg.mxu0
        %741 = vmatpush.bf16.msra.mxu0 %v690
        %742 = vmatpush.bf16.msra.mxu0 %v687
        %743 = vmatpush.bf16.msra.mxu0 %v684
        %744 = vmatpush.bf16.msra.mxu0 %v681
        %745 = vmatpush.bf16.msra.mxu0 %v678
        %746 = vmatpush.bf16.msra.mxu0 %v675
        %747 = vmatpush.bf16.msra.mxu0 %v672
        %748 = vmatpush.bf16.msra.mxu0 %v669
        %749 = vmatmul.bf16.gmra.mxu0 %v546
        %v750 = vpop.f32.mrf.mxu0
        %v751 = vadd.f32 %v583, %v750
        %v752 = vpop.f32.mrf.mxu0
        %753 = vdwg.mxu0
        %v754 = vld [vmem:[%s539] sm:$0x1]
        %v755 = vpack.c.bf16 %v725, %v725
        %v756 = vpack.c.bf16 %v738, %v738
        %v757 = vpack.c.bf16 %v751, %v751
        %vm758 = vcmask 523264
        %v760 = vsel %vm758, %v755, 0
        %v763 = vsel %vm758, %v756, 0
        %765 = vmatpush.bf16.xpose.msra.mxu0 0
        %766 = vmatpush.bf16.xpose.msra.mxu0 0
        %767 = vmatpush.bf16.xpose.msra.mxu0 0
        %768 = vmatpush.bf16.xpose.msra.mxu0 0
        %769 = vmatpush.bf16.xpose.msra.mxu0 0
        %770 = vmatpush.bf16.xpose.msra.mxu0 0
        %771 = vmatpush.bf16.xpose.msra.mxu0 0
        %772 = vmatpush.bf16.xpose.msra.mxu0 %v763
        %773 = vmatmul.bf16.gmra.mxu0 %v760
        %v774 = vpop.f32.mrf.mxu0
        %v775 = vadd.f32 0.0, %v774
        %v776 = vpop.f32.mrf.mxu0
        %777 = vdwg.mxu0
        %v778 = vmul.f32 %v775, 0.125
        %v780 = vperm.slane %v754, 0
        %v782 = vadd.f32 %v778, %v780
        %vm783 = vcmask 64512
        %v784 = vsel %vm783, %v782, -inf
        %785 = vmax.xlane.f32.xlu0 %v784
        %v786 = vpop.xlane.xlu0 %785
        %v787 = vsub.f32 %v782, %v786
        %v788 = vmul.f32 %v787, 1.442695
        %v789 = vpow.pop %v788
        %v790 = vsel %vm783, %v789, 0.0
        %791 = vadd.xlane.f32.xlu0 %v790
        %v792 = vpop.xlane.xlu0 %791
        %v793 = vrcp.pop %v792
        %v794 = vmul.f32 %v789, %v793
        %v795 = vpack.c.bf16 %v794, %v794
        %v797 = vsel %vm783, %v795, 0
        %vm799 = vcmask 1043456
        %v801 = vsel %vm799, %v757, 0
        %803 = vmatpush.bf16.msra.mxu0 0
        %804 = vmatpush.bf16.msra.mxu0 0
        %805 = vmatpush.bf16.msra.mxu0 0
        %806 = vmatpush.bf16.msra.mxu0 0
        %807 = vmatpush.bf16.msra.mxu0 0
        %808 = vmatpush.bf16.msra.mxu0 0
        %809 = vmatpush.bf16.msra.mxu0 0
        %810 = vmatpush.bf16.msra.mxu0 %v801
        %811 = vmatmul.bf16.gmra.mxu0 %v797
        %v812 = vpop.f32.mrf.mxu0
        %v813 = vadd.f32 0.0, %v812
        %v814 = vpop.f32.mrf.mxu0
        %815 = vdwg.mxu0
        %816 = vst.msk [vmem:[#allocation2] sm:$0xff] %vm758, %v813
        %818 = vrot.lane.b32.xlu0 %v755, 64
        %v819 = vpop.permute.xlu0 %818
        %821 = vrot.lane.b32.xlu0 %v756, 64
        %v822 = vpop.permute.xlu0 %821
        %v824 = vsel %vm758, %v819, 0
        %v827 = vsel %vm758, %v822, 0
        %829 = vmatpush.bf16.xpose.msra.mxu0 0
        %830 = vmatpush.bf16.xpose.msra.mxu0 0
        %831 = vmatpush.bf16.xpose.msra.mxu0 0
        %832 = vmatpush.bf16.xpose.msra.mxu0 0
        %833 = vmatpush.bf16.xpose.msra.mxu0 0
        %834 = vmatpush.bf16.xpose.msra.mxu0 0
        %835 = vmatpush.bf16.xpose.msra.mxu0 0
        %836 = vmatpush.bf16.xpose.msra.mxu0 %v827
        %837 = vmatmul.bf16.gmra.mxu0 %v824
        %v838 = vpop.f32.mrf.mxu0
        %v839 = vadd.f32 0.0, %v838
        %v840 = vpop.f32.mrf.mxu0
        %841 = vdwg.mxu0
        %v842 = vmul.f32 %v839, 0.125
        %v843 = vadd.f32 %v842, %v780
        %v844 = vsel %vm783, %v843, -inf
        %845 = vmax.xlane.f32.xlu0 %v844
        %v846 = vpop.xlane.xlu0 %845
        %v847 = vsub.f32 %v843, %v846
        %v848 = vmul.f32 %v847, 1.442695
        %v849 = vpow.pop %v848
        %v850 = vsel %vm783, %v849, 0.0
        %851 = vadd.xlane.f32.xlu0 %v850
        %v852 = vpop.xlane.xlu0 %851
        %v853 = vrcp.pop %v852
        %v854 = vmul.f32 %v849, %v853
        %v855 = vpack.c.bf16 %v854, %v854
        %857 = vrot.lane.b32.xlu0 %v757, 64
        %v858 = vpop.permute.xlu0 %857
        %v860 = vsel %vm783, %v855, 0
        %v863 = vsel %vm799, %v858, 0
        %865 = vmatpush.bf16.msra.mxu0 0
        %866 = vmatpush.bf16.msra.mxu0 0
        %867 = vmatpush.bf16.msra.mxu0 0
        %868 = vmatpush.bf16.msra.mxu0 0
        %869 = vmatpush.bf16.msra.mxu0 0
        %870 = vmatpush.bf16.msra.mxu0 0
        %871 = vmatpush.bf16.msra.mxu0 0
        %872 = vmatpush.bf16.msra.mxu0 %v863
        %873 = vmatmul.bf16.gmra.mxu0 %v860
        %v874 = vpop.f32.mrf.mxu0
        %v875 = vadd.f32 0.0, %v874
        %v876 = vpop.f32.mrf.mxu0
        %877 = vdwg.mxu0
        %879 = vrot.lane.b32.xlu0 %v875, 64
        %v880 = vpop.permute.xlu0 %879
        %vm882 = vcmask 1048064
        %883 = vst.msk [vmem:[#allocation2] sm:$0xff] %vm882, %v880
        %v884 = vld [vmem:[#allocation2] sm:$0xff]
        %v885 = vpack.c.bf16 %v884, %v884
        %v886 = vld [vmem:[#allocation5] sm:$0xf]
        %v887 = vld [vmem:[#allocation5 + $0x4] sm:$0xf]
        %v888 = vld [vmem:[#allocation5 + $0x8] sm:$0xf]
        %v889 = vld [vmem:[#allocation5 + $0xc] sm:$0xf]
        %v890 = vld [vmem:[#allocation5 + $0x10] sm:$0xf]
        %v891 = vld [vmem:[#allocation5 + $0x14] sm:$0xf]
        %v892 = vld [vmem:[#allocation5 + $0x18] sm:$0xf]
        %v893 = vld [vmem:[#allocation5 + $0x1c] sm:$0xf]
        %v894 = vld [vmem:[#allocation5 + $0x20] sm:$0xf]
        %v895 = vld [vmem:[#allocation5 + $0x24] sm:$0xf]
        %v896 = vld [vmem:[#allocation5 + $0x28] sm:$0xf]
        %v897 = vld [vmem:[#allocation5 + $0x2c] sm:$0xf]
        %v898 = vld [vmem:[#allocation5 + $0x30] sm:$0xf]
        %v899 = vld [vmem:[#allocation5 + $0x34] sm:$0xf]
        %v900 = vld [vmem:[#allocation5 + $0x38] sm:$0xf]
        %v901 = vld [vmem:[#allocation5 + $0x3c] sm:$0xf]
        %v902 = vld [vmem:[%s5] sm:$0x1]
        %v904 = vperm.slane %v902, 0
        %v922 = vunpack.c.l.b16 %v886
        %v923 = vunpack.c.l.b16 %v887
        %v924 = vunpack.c.l.b16 %v888
        %v925 = vunpack.c.l.b16 %v889
        %v926 = vunpack.c.l.b16 %v890
        %v927 = vunpack.c.l.b16 %v891
        %v928 = vunpack.c.l.b16 %v892
        %v929 = vunpack.c.l.b16 %v893
        %v930 = vunpack.c.l.b16 %v894
        %v931 = vunpack.c.l.b16 %v895
        %v932 = vunpack.c.l.b16 %v896
        %v933 = vunpack.c.l.b16 %v897
        %v934 = vunpack.c.l.b16 %v898
        %v935 = vunpack.c.l.b16 %v899
        %v936 = vunpack.c.l.b16 %v900
        %v937 = vunpack.c.l.b16 %v901
        %v938 = vpack.c.b16 %v923, %v922
        %v939 = vpack.c.b16 %v925, %v924
        %v940 = vpack.c.b16 %v927, %v926
        %v941 = vpack.c.b16 %v929, %v928
        %v942 = vpack.c.b16 %v931, %v930
        %v943 = vpack.c.b16 %v933, %v932
        %v944 = vpack.c.b16 %v935, %v934
        %v945 = vpack.c.b16 %v937, %v936
        %954 = vmatpush.bf16.msra.mxu0 %v945
        %955 = vmatpush.bf16.msra.mxu0 %v944
        %956 = vmatpush.bf16.msra.mxu0 %v943
        %957 = vmatpush.bf16.msra.mxu0 %v942
        %958 = vmatpush.bf16.msra.mxu0 %v941
        %959 = vmatpush.bf16.msra.mxu0 %v940
        %960 = vmatpush.bf16.msra.mxu0 %v939
        %961 = vmatpush.bf16.msra.mxu0 %v938
        %962 = vmatmul.bf16.gmra.mxu0 %v885
        %v963 = vpop.f32.mrf.mxu0
        %v964 = vadd.f32 %v904, %v963
        %v965 = vpop.f32.mrf.mxu0
        %966 = vdwg.mxu0
        %v967 = vadd.f32 %v964, %v545
        %968 = vadd.xlane.f32.xlu0 %v967
        %v969 = vpop.xlane.xlu0 %968
        %v970 = vrcp.pop 128.0
        %v971 = vmul.f32 128.0, %v970
        %v972 = vsub.f32 1.0, %v971
        %v973 = vmul.f32 %v970, %v972
        %v974 = vadd.f32 %v970, %v973
        %vm975 = vweird.f32 %v970
        %v976 = vsel %vm975, %v970, %v974
        %v977 = vmul.f32 %v969, %v976
        %v978 = vmul.f32 %v967, %v967
        %979 = vadd.xlane.f32.xlu0 %v978
        %v980 = vpop.xlane.xlu0 %979
        %v981 = vmul.f32 %v980, %v976
        %v982 = vmul.f32 %v977, %v977
        %v983 = vsub.f32 %v981, %v982
        %v984 = vsub.f32 %v967, %v977
        %v985 = vadd.f32 %v983, 1e-12
        %v986 = vrsqrt.pop %v985
        %v987 = vmul.f32 %v986, %v985
        %v988 = vmul.f32 %v987, %v986
        %v989 = vmul.f32 0.5, %v988
        %v990 = vsub.f32 1.5, %v989
        %v991 = vmul.f32 %v986, %v990
        %vm992 = vweird.f32 %v985
        %vm993 = vweird.f32 %v986
        %vm994 = vmor %vm992, %vm993
        %v995 = vsel %vm994, %v986, %v991
        %v996 = vmul.f32 %v984, %v995
        %v997 = vld [vmem:[%s6] sm:$0x1]
        %v999 = vperm.slane %v997, 0
        %v1001 = vmul.f32 %v996, %v999
        %v1002 = vld [vmem:[%s7] sm:$0x1]
        %v1004 = vperm.slane %v1002, 0
        %v1006 = vadd.f32 %v1001, %v1004
        %v1007 = vpack.c.bf16 %v1006, %v1006
        %v1008 = vld [vmem:[#allocation7] sm:$0xff]
        %v1009 = vld [vmem:[#allocation7 + $0x8] sm:$0xff]
        %v1010 = vld [vmem:[#allocation7 + $0x10] sm:$0xff]
        %v1011 = vld [vmem:[#allocation7 + $0x18] sm:$0xff]
        %v1012 = vld [vmem:[#allocation7 + $0x20] sm:$0xff]
        %v1013 = vld [vmem:[#allocation7 + $0x28] sm:$0xff]
        %v1014 = vld [vmem:[#allocation7 + $0x30] sm:$0xff]
        %v1015 = vld [vmem:[#allocation7 + $0x38] sm:$0xff]
        %v1016 = vld [vmem:[#allocation7 + $0x40] sm:$0xff]
        %v1017 = vld [vmem:[#allocation7 + $0x48] sm:$0xff]
        %v1018 = vld [vmem:[#allocation7 + $0x50] sm:$0xff]
        %v1019 = vld [vmem:[#allocation7 + $0x58] sm:$0xff]
        %v1020 = vld [vmem:[#allocation7 + $0x60] sm:$0xff]
        %v1021 = vld [vmem:[#allocation7 + $0x68] sm:$0xff]
        %v1022 = vld [vmem:[#allocation7 + $0x70] sm:$0xff]
        %v1023 = vld [vmem:[#allocation7 + $0x78] sm:$0xff]
        %v1024 = vld [vmem:[%s9] sm:$0x3]
        %v1026 = vperm.slane %v1024, 0
        %v1027 = vperm.slane %v1024, 1
        %v1046 = vunpack.c.l.b16 %v1008
        %v1047 = vunpack.c.h.b16 %v1008
        %v1048 = vunpack.c.l.b16 %v1009
        %v1049 = vunpack.c.h.b16 %v1009
        %v1050 = vunpack.c.l.b16 %v1010
        %v1051 = vunpack.c.h.b16 %v1010
        %v1052 = vunpack.c.l.b16 %v1011
        %v1053 = vunpack.c.h.b16 %v1011
        %v1054 = vunpack.c.l.b16 %v1012
        %v1055 = vunpack.c.h.b16 %v1012
        %v1056 = vunpack.c.l.b16 %v1013
        %v1057 = vunpack.c.h.b16 %v1013
        %v1058 = vunpack.c.l.b16 %v1014
        %v1059 = vunpack.c.h.b16 %v1014
        %v1060 = vunpack.c.l.b16 %v1015
        %v1061 = vunpack.c.h.b16 %v1015
        %v1062 = vunpack.c.l.b16 %v1016
        %v1063 = vunpack.c.h.b16 %v1016
        %v1064 = vunpack.c.l.b16 %v1017
        %v1065 = vunpack.c.h.b16 %v1017
        %v1066 = vunpack.c.l.b16 %v1018
        %v1067 = vunpack.c.h.b16 %v1018
        %v1068 = vunpack.c.l.b16 %v1019
        %v1069 = vunpack.c.h.b16 %v1019
        %v1070 = vunpack.c.l.b16 %v1020
        %v1071 = vunpack.c.h.b16 %v1020
        %v1072 = vunpack.c.l.b16 %v1021
        %v1073 = vunpack.c.h.b16 %v1021
        %v1074 = vunpack.c.l.b16 %v1022
        %v1075 = vunpack.c.h.b16 %v1022
        %v1076 = vunpack.c.l.b16 %v1023
        %v1077 = vunpack.c.h.b16 %v1023
        %v1078 = vpack.c.b16 %v1048, %v1046
        %v1079 = vpack.c.b16 %v1049, %v1047
        %v1080 = vpack.c.b16 %v1052, %v1050
        %v1081 = vpack.c.b16 %v1053, %v1051
        %v1082 = vpack.c.b16 %v1056, %v1054
        %v1083 = vpack.c.b16 %v1057, %v1055
        %v1084 = vpack.c.b16 %v1060, %v1058
        %v1085 = vpack.c.b16 %v1061, %v1059
        %v1086 = vpack.c.b16 %v1064, %v1062
        %v1087 = vpack.c.b16 %v1065, %v1063
        %v1088 = vpack.c.b16 %v1068, %v1066
        %v1089 = vpack.c.b16 %v1069, %v1067
        %v1090 = vpack.c.b16 %v1072, %v1070
        %v1091 = vpack.c.b16 %v1073, %v1071
        %v1092 = vpack.c.b16 %v1076, %v1074
        %v1093 = vpack.c.b16 %v1077, %v1075
        %1110 = vmatpush.bf16.msra.mxu0 %v1092
        %1111 = vmatpush.bf16.msra.mxu0 %v1090
        %1112 = vmatpush.bf16.msra.mxu0 %v1088
        %1113 = vmatpush.bf16.msra.mxu0 %v1086
        %1114 = vmatpush.bf16.msra.mxu0 %v1084
        %1115 = vmatpush.bf16.msra.mxu0 %v1082
        %1116 = vmatpush.bf16.msra.mxu0 %v1080
        %1117 = vmatpush.bf16.msra.mxu0 %v1078
        %1118 = vmatmul.bf16.gmra.mxu0 %v1007
        %v1119 = vpop.f32.mrf.mxu0
        %v1120 = vadd.f32 %v1026, %v1119
        %v1121 = vpop.f32.mrf.mxu0
        %1122 = vdwg.mxu0
        %1123 = vmatpush.bf16.msra.mxu0 %v1093
        %1124 = vmatpush.bf16.msra.mxu0 %v1091
        %1125 = vmatpush.bf16.msra.mxu0 %v1089
        %1126 = vmatpush.bf16.msra.mxu0 %v1087
        %1127 = vmatpush.bf16.msra.mxu0 %v1085
        %1128 = vmatpush.bf16.msra.mxu0 %v1083
        %1129 = vmatpush.bf16.msra.mxu0 %v1081
        %1130 = vmatpush.bf16.msra.mxu0 %v1079
        %1131 = vmatmul.bf16.gmra.mxu0 %v1007
        %v1132 = vpop.f32.mrf.mxu0
        %v1133 = vadd.f32 %v1027, %v1132
        %v1134 = vpop.f32.mrf.mxu0
        %1135 = vdwg.mxu0
        %v1136 = vmul.f32 %v1120, 0.5
        %v1137 = vmul.f32 %v1133, 0.5
        %v1138 = vmul.f32 %v1120, 0.044715
        %v1139 = vmul.f32 %v1133, 0.044715
        %v1140 = vmul.f32 %v1138, %v1120
        %v1141 = vmul.f32 %v1139, %v1133
        %v1142 = vmul.f32 %v1140, %v1120
        %v1143 = vmul.f32 %v1141, %v1133
        %v1144 = vadd.f32 %v1120, %v1142
        %v1145 = vadd.f32 %v1133, %v1143
        %v1146 = vmul.f32 %v1144, 0.7978846
        %v1147 = vmul.f32 %v1145, 0.7978846
        %v1148 = vtanh.pop %v1146
        %v1149 = vtanh.pop %v1147
        %v1150 = vadd.f32 %v1148, 1.0
        %v1151 = vadd.f32 %v1149, 1.0
        %v1152 = vmul.f32 %v1136, %v1150
        %v1153 = vmul.f32 %v1137, %v1151
        %v1154 = vpack.c.bf16 %v1152, %v1152
        %v1155 = vpack.c.bf16 %v1153, %v1153
        %v1156 = vld [vmem:[#allocation8] sm:$0xf]
        %v1157 = vld [vmem:[#allocation8 + $0x4] sm:$0xf]
        %v1158 = vld [vmem:[#allocation8 + $0x8] sm:$0xf]
        %v1159 = vld [vmem:[#allocation8 + $0xc] sm:$0xf]
        %v1160 = vld [vmem:[#allocation8 + $0x10] sm:$0xf]
        %v1161 = vld [vmem:[#allocation8 + $0x14] sm:$0xf]
        %v1162 = vld [vmem:[#allocation8 + $0x18] sm:$0xf]
        %v1163 = vld [vmem:[#allocation8 + $0x1c] sm:$0xf]
        %v1164 = vld [vmem:[#allocation8 + $0x20] sm:$0xf]
        %v1165 = vld [vmem:[#allocation8 + $0x24] sm:$0xf]
        %v1166 = vld [vmem:[#allocation8 + $0x28] sm:$0xf]
        %v1167 = vld [vmem:[#allocation8 + $0x2c] sm:$0xf]
        %v1168 = vld [vmem:[#allocation8 + $0x30] sm:$0xf]
        %v1169 = vld [vmem:[#allocation8 + $0x34] sm:$0xf]
        %v1170 = vld [vmem:[#allocation8 + $0x38] sm:$0xf]
        %v1171 = vld [vmem:[#allocation8 + $0x3c] sm:$0xf]
        %v1172 = vld [vmem:[#allocation8 + $0x40] sm:$0xf]
        %v1173 = vld [vmem:[#allocation8 + $0x44] sm:$0xf]
        %v1174 = vld [vmem:[#allocation8 + $0x48] sm:$0xf]
        %v1175 = vld [vmem:[#allocation8 + $0x4c] sm:$0xf]
        %v1176 = vld [vmem:[#allocation8 + $0x50] sm:$0xf]
        %v1177 = vld [vmem:[#allocation8 + $0x54] sm:$0xf]
        %v1178 = vld [vmem:[#allocation8 + $0x58] sm:$0xf]
        %v1179 = vld [vmem:[#allocation8 + $0x5c] sm:$0xf]
        %v1180 = vld [vmem:[#allocation8 + $0x60] sm:$0xf]
        %v1181 = vld [vmem:[#allocation8 + $0x64] sm:$0xf]
        %v1182 = vld [vmem:[#allocation8 + $0x68] sm:$0xf]
        %v1183 = vld [vmem:[#allocation8 + $0x6c] sm:$0xf]
        %v1184 = vld [vmem:[#allocation8 + $0x70] sm:$0xf]
        %v1185 = vld [vmem:[#allocation8 + $0x74] sm:$0xf]
        %v1186 = vld [vmem:[#allocation8 + $0x78] sm:$0xf]
        %v1187 = vld [vmem:[#allocation8 + $0x7c] sm:$0xf]
        %v1188 = vld [vmem:[%s11] sm:$0x1]
        %v1190 = vperm.slane %v1188, 0
        %v1224 = vunpack.c.l.b16 %v1156
        %v1225 = vunpack.c.l.b16 %v1157
        %v1226 = vunpack.c.l.b16 %v1158
        %v1227 = vunpack.c.l.b16 %v1159
        %v1228 = vunpack.c.l.b16 %v1160
        %v1229 = vunpack.c.l.b16 %v1161
        %v1230 = vunpack.c.l.b16 %v1162
        %v1231 = vunpack.c.l.b16 %v1163
        %v1232 = vunpack.c.l.b16 %v1164
        %v1233 = vunpack.c.l.b16 %v1165
        %v1234 = vunpack.c.l.b16 %v1166
        %v1235 = vunpack.c.l.b16 %v1167
        %v1236 = vunpack.c.l.b16 %v1168
        %v1237 = vunpack.c.l.b16 %v1169
        %v1238 = vunpack.c.l.b16 %v1170
        %v1239 = vunpack.c.l.b16 %v1171
        %v1240 = vunpack.c.l.b16 %v1172
        %v1241 = vunpack.c.l.b16 %v1173
        %v1242 = vunpack.c.l.b16 %v1174
        %v1243 = vunpack.c.l.b16 %v1175
        %v1244 = vunpack.c.l.b16 %v1176
        %v1245 = vunpack.c.l.b16 %v1177
        %v1246 = vunpack.c.l.b16 %v1178
        %v1247 = vunpack.c.l.b16 %v1179
        %v1248 = vunpack.c.l.b16 %v1180
        %v1249 = vunpack.c.l.b16 %v1181
        %v1250 = vunpack.c.l.b16 %v1182
        %v1251 = vunpack.c.l.b16 %v1183
        %v1252 = vunpack.c.l.b16 %v1184
        %v1253 = vunpack.c.l.b16 %v1185
        %v1254 = vunpack.c.l.b16 %v1186
        %v1255 = vunpack.c.l.b16 %v1187
        %v1256 = vpack.c.b16 %v1225, %v1224
        %v1257 = vpack.c.b16 %v1227, %v1226
        %v1258 = vpack.c.b16 %v1229, %v1228
        %v1259 = vpack.c.b16 %v1231, %v1230
        %v1260 = vpack.c.b16 %v1233, %v1232
        %v1261 = vpack.c.b16 %v1235, %v1234
        %v1262 = vpack.c.b16 %v1237, %v1236
        %v1263 = vpack.c.b16 %v1239, %v1238
        %v1264 = vpack.c.b16 %v1241, %v1240
        %v1265 = vpack.c.b16 %v1243, %v1242
        %v1266 = vpack.c.b16 %v1245, %v1244
        %v1267 = vpack.c.b16 %v1247, %v1246
        %v1268 = vpack.c.b16 %v1249, %v1248
        %v1269 = vpack.c.b16 %v1251, %v1250
        %v1270 = vpack.c.b16 %v1253, %v1252
        %v1271 = vpack.c.b16 %v1255, %v1254
        %1288 = vmatpush.bf16.msra.mxu0 %v1263
        %1289 = vmatpush.bf16.msra.mxu0 %v1262
        %1290 = vmatpush.bf16.msra.mxu0 %v1261
        %1291 = vmatpush.bf16.msra.mxu0 %v1260
        %1292 = vmatpush.bf16.msra.mxu0 %v1259
        %1293 = vmatpush.bf16.msra.mxu0 %v1258
        %1294 = vmatpush.bf16.msra.mxu0 %v1257
        %1295 = vmatpush.bf16.msra.mxu0 %v1256
        %1296 = vmatmul.bf16.gmra.mxu0 %v1154
        %v1297 = vpop.f32.mrf.mxu0
        %v1298 = vadd.f32 %v1190, %v1297
        %v1299 = vpop.f32.mrf.mxu0
        %1300 = vdwg.mxu0
        %1301 = vmatpush.bf16.msra.mxu0 %v1271
        %1302 = vmatpush.bf16.msra.mxu0 %v1270
        %1303 = vmatpush.bf16.msra.mxu0 %v1269
        %1304 = vmatpush.bf16.msra.mxu0 %v1268
        %1305 = vmatpush.bf16.msra.mxu0 %v1267
        %1306 = vmatpush.bf16.msra.mxu0 %v1266
        %1307 = vmatpush.bf16.msra.mxu0 %v1265
        %1308 = vmatpush.bf16.msra.mxu0 %v1264
        %1309 = vmatmul.bf16.gmra.mxu0 %v1155
        %v1310 = vpop.f32.mrf.mxu0
        %v1311 = vadd.f32 %v1298, %v1310
        %v1312 = vpop.f32.mrf.mxu0
        %1313 = vdwg.mxu0
        %v1314 = vadd.f32 %v1311, %v1006
        %1315 = vadd.xlane.f32.xlu0 %v1314
        %v1316 = vpop.xlane.xlu0 %1315
        %v1317 = vmul.f32 %v1316, %v976
        %v1318 = vmul.f32 %v1314, %v1314
        %1319 = vadd.xlane.f32.xlu0 %v1318
        %v1320 = vpop.xlane.xlu0 %1319
        %v1321 = vmul.f32 %v1320, %v976
        %v1322 = vmul.f32 %v1317, %v1317
        %v1323 = vsub.f32 %v1321, %v1322
        %v1324 = vsub.f32 %v1314, %v1317
        %v1325 = vadd.f32 %v1323, 1e-12
        %v1326 = vrsqrt.pop %v1325
        %v1327 = vmul.f32 %v1326, %v1325
        %v1328 = vmul.f32 %v1327, %v1326
        %v1329 = vmul.f32 0.5, %v1328
        %v1330 = vsub.f32 1.5, %v1329
        %v1331 = vmul.f32 %v1326, %v1330
        %vm1332 = vweird.f32 %v1325
        %vm1333 = vweird.f32 %v1326
        %vm1334 = vmor %vm1332, %vm1333
        %v1335 = vsel %vm1334, %v1326, %v1331
        %v1336 = vmul.f32 %v1324, %v1335
        %v1337 = vld [vmem:[%s12] sm:$0x1]
        %v1339 = vperm.slane %v1337, 0
        %v1341 = vmul.f32 %v1336, %v1339
        %v1342 = vld [vmem:[%s13] sm:$0x1]
        %v1344 = vperm.slane %v1342, 0
        %v1346 = vadd.f32 %v1341, %v1344
        %1347 = vst [vmem:[%s543] sm:$0xff] %v1346
        %p1348 = scmp.lt.s32.totalorder %s28, 1
        %s1349 = scalar_select %p1348, %s28, 1
        %s1350 = smul.addr %s1349, 8
        %s1351 = scalar_lea.vmem %s14, %s1350
        // Predicated region
        $region93: #{legal_model_forward.6} parent=75 // pred_check
          %p1352 = pneg %p350
        $region94: #{legal_model_forward.6} parent=75 // pred_check_branch
          %1354 = sbr.rel (%p1352) target = $region96
        $region95: #{legal_model_forward.6} parent=75 // pred_region
          _
        $region96: #{legal_model_forward.6} parent=75 // pred_fallthru
          _
      $region76: #{legal_model_forward.6} parent=5 // pred_fallthru
        _
      %p1355 = scmp.le.s32.totalorder 2, %s23
      // Predicated region
      $region97: #{legal_model_forward.6} parent=5 // pred_check
        %p1356 = pneg %p1355
      $region98: #{legal_model_forward.6} parent=5 // pred_check_branch
        %1358 = sbr.rel (%p1356) target = $region100
      $region99: #{legal_model_forward.6} parent=5 // pred_region
        %s1359 = ssub.s32 %s23, 2
        // Predicated region
        $region101: #{legal_model_forward.6} parent=99 // pred_check
          %p1360 = pneg %p356
        $region102: #{legal_model_forward.6} parent=99 // pred_check_branch
          %1362 = sbr.rel (%p1360) target = $region104
        $region103: #{legal_model_forward.6} parent=99 // pred_region
          %p1363 = scmp.lt.s32.totalorder %s29, 1
          %s1364 = scalar_select %p1363, %s29, 1
          %s1365 = smul.addr %s1364, 8
          %s1366 = scalar_lea.vmem %s14, %s1365
        $region104: #{legal_model_forward.6} parent=99 // pred_fallthru
          _
      $region100: #{legal_model_forward.6} parent=5 // pred_fallthru
        _
    $region6: #{legal_model_forward.6} parent=1 // loop_footer
      %s27 = sadd.s32 1, %s23
    $region7: #{legal_model_forward.6} parent=1 // loop_footer_branch
      %22 = sbr.rel target = $region3
    $region8: #{legal_model_forward.6} parent=1 // loop_exit
      _
    %1367 = vsyncpa [#allocation4], 1
    %s1368 = scalar_lea.sflag [#allocation4], 1
    %1369 = vsyncpa %s1368, 1
    %1370 = vsyncpa [#allocation6], 1
    %1371 = vsyncpa [#allocation9], 1

// kernel: legal_model_forward.5
$region0: #{legal_model_forward.5}
  #allocation0 [shape = 'u32[]', space=smem, size = 0x4, offset = 0x4, fixed_abs, tag = 'smem constant byte address 0x4 - core index']
  #allocation1 [shape = 'u32[72,128]{1,0:T(1,128)}', space=vmem, size = 0x9000, scoped, tag = 'internal scratch']
  #allocation2 [shape = 'f32[8,128]{1,0:T(8,128)}', space=vmem, size = 0x1000, scoped, tag = 'scratch operand']
  %s0 = inlined_call_operand.vmem [shape: f32[16,128], index: 0, kind: input, shape index: {}]
  %s1 = inlined_call_operand.vmem [shape: f32[2,1,8], index: 1, kind: input, shape index: {}]
  %s2 = inlined_call_operand.hbm [shape: bf16[128,384], index: 2, kind: input, shape index: {}]
  %s3 = inlined_call_operand.vmem [shape: f32[1,384], index: 3, kind: input, shape index: {}]
  %s4 = inlined_call_operand.hbm [shape: bf16[128,128], index: 4, kind: input, shape index: {}]
  %s5 = inlined_call_operand.vmem [shape: f32[1,128], index: 5, kind: input, shape index: {}]
  %s6 = inlined_call_operand.vmem [shape: f32[1,128], index: 6, kind: input, shape index: {}]
  %s7 = inlined_call_operand.vmem [shape: f32[1,128], index: 7, kind: input, shape index: {}]
  %s8 = inlined_call_operand.vmem [shape: bf16[128,256], index: 8, kind: input, shape index: {}]
  %s9 = inlined_call_operand.vmem [shape: f32[1,256], index: 9, kind: input, shape index: {}]
  %s10 = inlined_call_operand.hbm [shape: bf16[256,128], index: 10, kind: input, shape index: {}]
  %s11 = inlined_call_operand.vmem [shape: f32[1,128], index: 11, kind: input, shape index: {}]
  %s12 = inlined_call_operand.vmem [shape: f32[1,128], index: 12, kind: input, shape index: {}]
  %s13 = inlined_call_operand.vmem [shape: f32[1,128], index: 13, kind: input, shape index: {}]
  %s14 = inlined_call_operand.vmem [shape: f32[16,128], index: 14, kind: output, shape index: {}]
  %s15 = sld [smem:[#allocation0]]
  $region101: #{legal_model_forward.5} parent=0
    _
  %s17 = ssub.s32 1, %s15
  %s18 = scalar_select 0, %s17, %s15
  $region1: #{legal_model_forward.5} parent=0
    #allocation3 [shape = 'u8[98304]{0}', space=vmem, size = 0x18000, scoped, tag = 'input window, operand 2, single buffered']
    #allocation4 [shape = 's32[2]{0}', space=sflag, size = 0x8, scoped, tag = 'scoped memory for legal_model_forward.5']
    #allocation5 [shape = 'u8[32768]{0}', space=vmem, size = 0x8000, scoped, tag = 'input window, operand 4, single buffered']
    #allocation6 [shape = 's32[1]{0}', space=sflag, size = 0x4, scoped, tag = 'scoped memory for legal_model_forward.5']
    #allocation7 [shape = 'u8[65536]{0}', space=vmem, size = 0x10000, scoped, tag = 'input window, operand 10, single buffered']
    %19 = vsyncpa [#allocation4], 0
    %20 = vsyncpa [#allocation6], 0
    loop: start=0, step=1, limit=4
    $region2: #{legal_model_forward.5} parent=1 // loop_pre_header
      _
    $region3: #{legal_model_forward.5} parent=1 // loop_header
      %s22 = sphi 0, %s26
      %p23 = scmp.ge.s32.totalorder %s22, 4
      %s32 = sphi 0, %s34
      %s35 = sphi 0, %s32
      %s36 = sphi 0, %s35
      %s52 = sphi 0, %s36
      %s58 = sphi 0, %s60
      %s61 = sphi 0, %s58
      %s62 = sphi 0, %s61
      %s78 = sphi 0, %s62
      %s82 = sphi 0, %s82
      %s84 = sphi 0, %s82
      %s85 = sphi 0, %s84
      %s99 = sphi 0, %s85
      %s103 = sphi 0, %s103
      %s105 = sphi 0, %s103
      %s106 = sphi 0, %s105
      %s120 = sphi 0, %s106
      %s124 = sphi 0, %s124
      %s126 = sphi 0, %s124
      %s127 = sphi 0, %s126
      %s141 = sphi 0, %s127
      %s145 = sphi 0, %s145
      %s147 = sphi 0, %s145
      %s148 = sphi 0, %s147
      %s162 = sphi 0, %s148
      %s166 = sphi 0, %s166
      %s168 = sphi 0, %s166
      %s169 = sphi 0, %s168
      %s183 = sphi 0, %s169
      %s187 = sphi 0, %s187
      %s189 = sphi 0, %s187
      %s190 = sphi 0, %s189
      %s204 = sphi 0, %s190
      %s208 = sphi 0, %s208
      %s210 = sphi 0, %s208
      %s211 = sphi 0, %s210
      %s225 = sphi 0, %s211
      %s229 = sphi 0, %s229
      %s231 = sphi 0, %s229
      %s232 = sphi 0, %s231
      %s246 = sphi 0, %s232
      %s250 = sphi 0, %s250
      %s252 = sphi 0, %s250
      %s253 = sphi 0, %s252
      %s267 = sphi 0, %s253
      %s271 = sphi 0, %s271
      %s273 = sphi 0, %s271
      %s274 = sphi 0, %s273
      %s288 = sphi 0, %s274
      %s292 = sphi 0, %s292
      %s294 = sphi 0, %s292
      %s295 = sphi 0, %s294
      %s309 = sphi 0, %s295
      %s313 = sphi 0, %s313
      %s315 = sphi 0, %s313
      %s316 = sphi 0, %s315
      %s330 = sphi 0, %s316
      %s336 = sphi 0, %s338
      %s339 = sphi 0, %s336
      %s340 = sphi 0, %s339
      %s356 = sphi 0, %s340
    $region4: #{legal_model_forward.5} parent=1 // loop_header_branch
      %25 = sbr.rel (%p23) target = $region8
    $region5: #{legal_model_forward.5} parent=1 // loop_body
      %s27 = ssub.s32 %s22, 1
      %s28 = ssub.s32 %s22, 2
      %s29 = sadd.s32 %s22, 1
      %s30 = ssub.s32 %s22, %s29
      %p31 = scmp.eq.s32.totalorder %s30, 0
      %s33 = sadd.s32 %s32, 1
      %s34 = scalar_select %p31, %s32, %s33
      %p37 = pneg %p31
      %p38 = scmp.eq.s32.totalorder %s22, 1
      %p39 = por %p37, %p38
      %p40 = scmp.ne.s32.totalorder %s32, %s35
      %p41 = scmp.eq.s32.totalorder %s22, 0
      %p42 = por %p40, %p41
      %p43 = scmp.ne.s32.totalorder %s32, %s35
      %p44 = scmp.eq.s32.totalorder %s27, 1
      %p45 = por %p43, %p44
      %p46 = scmp.ne.s32.totalorder %s35, %s36
      %p47 = scmp.eq.s32.totalorder %s27, 0
      %p48 = por %p46, %p47
      %p49 = scmp.ne.s32.totalorder %s35, %s36
      %p50 = scmp.eq.s32.totalorder %s28, 1
      %p51 = por %p49, %p50
      %p53 = scmp.ne.s32.totalorder %s36, %s52
      %p54 = scmp.eq.s32.totalorder %s28, 0
      %p55 = por %p53, %p54
      %s56 = ssub.s32 %s22, %s29
      %p57 = scmp.eq.s32.totalorder %s56, 0
      %s59 = sadd.s32 %s58, 1
      %s60 = scalar_select %p57, %s58, %s59
      %p63 = pneg %p57
      %p64 = scmp.eq.s32.totalorder %s22, 1
      %p65 = por %p63, %p64
      %p66 = scmp.ne.s32.totalorder %s58, %s61
      %p67 = scmp.eq.s32.totalorder %s22, 0
      %p68 = por %p66, %p67
      %p69 = scmp.ne.s32.totalorder %s58, %s61
      %p70 = scmp.eq.s32.totalorder %s27, 1
      %p71 = por %p69, %p70
      %p72 = scmp.ne.s32.totalorder %s61, %s62
      %p73 = scmp.eq.s32.totalorder %s27, 0
      %p74 = por %p72, %p73
      %p75 = scmp.ne.s32.totalorder %s61, %s62
      %p76 = scmp.eq.s32.totalorder %s28, 1
      %p77 = por %p75, %p76
      %p79 = scmp.ne.s32.totalorder %s62, %s78
      %p80 = scmp.eq.s32.totalorder %s28, 0
      %p81 = por %p79, %p80
      %s83 = sadd.s32 %s82, 1
      %p86 = scmp.eq.s32.totalorder %s22, 1
      %p87 = scmp.ne.s32.totalorder %s82, %s84
      %p88 = scmp.eq.s32.totalorder %s22, 0
      %p89 = por %p87, %p88
      %p90 = scmp.ne.s32.totalorder %s82, %s84
      %p91 = scmp.eq.s32.totalorder %s27, 1
      %p92 = por %p90, %p91
      %p93 = scmp.ne.s32.totalorder %s84, %s85
      %p94 = scmp.eq.s32.totalorder %s27, 0
      %p95 = por %p93, %p94
      %p96 = scmp.ne.s32.totalorder %s84, %s85
      %p97 = scmp.eq.s32.totalorder %s28, 1
      %p98 = por %p96, %p97
      %p100 = scmp.ne.s32.totalorder %s85, %s99
      %p101 = scmp.eq.s32.totalorder %s28, 0
      %p102 = por %p100, %p101
      %s104 = sadd.s32 %s103, 1
      %p107 = scmp.eq.s32.totalorder %s22, 1
      %p108 = scmp.ne.s32.totalorder %s103, %s105
      %p109 = scmp.eq.s32.totalorder %s22, 0
      %p110 = por %p108, %p109
      %p111 = scmp.ne.s32.totalorder %s103, %s105
      %p112 = scmp.eq.s32.totalorder %s27, 1
      %p113 = por %p111, %p112
      %p114 = scmp.ne.s32.totalorder %s105, %s106
      %p115 = scmp.eq.s32.totalorder %s27, 0
      %p116 = por %p114, %p115
      %p117 = scmp.ne.s32.totalorder %s105, %s106
      %p118 = scmp.eq.s32.totalorder %s28, 1
      %p119 = por %p117, %p118
      %p121 = scmp.ne.s32.totalorder %s106, %s120
      %p122 = scmp.eq.s32.totalorder %s28, 0
      %p123 = por %p121, %p122
      %s125 = sadd.s32 %s124, 1
      %p128 = scmp.eq.s32.totalorder %s22, 1
      %p129 = scmp.ne.s32.totalorder %s124, %s126
      %p130 = scmp.eq.s32.totalorder %s22, 0
      %p131 = por %p129, %p130
      %p132 = scmp.ne.s32.totalorder %s124, %s126
      %p133 = scmp.eq.s32.totalorder %s27, 1
      %p134 = por %p132, %p133
      %p135 = scmp.ne.s32.totalorder %s126, %s127
      %p136 = scmp.eq.s32.totalorder %s27, 0
      %p137 = por %p135, %p136
      %p138 = scmp.ne.s32.totalorder %s126, %s127
      %p139 = scmp.eq.s32.totalorder %s28, 1
      %p140 = por %p138, %p139
      %p142 = scmp.ne.s32.totalorder %s127, %s141
      %p143 = scmp.eq.s32.totalorder %s28, 0
      %p144 = por %p142, %p143
      %s146 = sadd.s32 %s145, 1
      %p149 = scmp.eq.s32.totalorder %s22, 1
      %p150 = scmp.ne.s32.totalorder %s145, %s147
      %p151 = scmp.eq.s32.totalorder %s22, 0
      %p152 = por %p150, %p151
      %p153 = scmp.ne.s32.totalorder %s145, %s147
      %p154 = scmp.eq.s32.totalorder %s27, 1
      %p155 = por %p153, %p154
      %p156 = scmp.ne.s32.totalorder %s147, %s148
      %p157 = scmp.eq.s32.totalorder %s27, 0
      %p158 = por %p156, %p157
      %p159 = scmp.ne.s32.totalorder %s147, %s148
      %p160 = scmp.eq.s32.totalorder %s28, 1
      %p161 = por %p159, %p160
      %p163 = scmp.ne.s32.totalorder %s148, %s162
      %p164 = scmp.eq.s32.totalorder %s28, 0
      %p165 = por %p163, %p164
      %s167 = sadd.s32 %s166, 1
      %p170 = scmp.eq.s32.totalorder %s22, 1
      %p171 = scmp.ne.s32.totalorder %s166, %s168
      %p172 = scmp.eq.s32.totalorder %s22, 0
      %p173 = por %p171, %p172
      %p174 = scmp.ne.s32.totalorder %s166, %s168
      %p175 = scmp.eq.s32.totalorder %s27, 1
      %p176 = por %p174, %p175
      %p177 = scmp.ne.s32.totalorder %s168, %s169
      %p178 = scmp.eq.s32.totalorder %s27, 0
      %p179 = por %p177, %p178
      %p180 = scmp.ne.s32.totalorder %s168, %s169
      %p181 = scmp.eq.s32.totalorder %s28, 1
      %p182 = por %p180, %p181
      %p184 = scmp.ne.s32.totalorder %s169, %s183
      %p185 = scmp.eq.s32.totalorder %s28, 0
      %p186 = por %p184, %p185
      %s188 = sadd.s32 %s187, 1
      %p191 = scmp.eq.s32.totalorder %s22, 1
      %p192 = scmp.ne.s32.totalorder %s187, %s189
      %p193 = scmp.eq.s32.totalorder %s22, 0
      %p194 = por %p192, %p193
      %p195 = scmp.ne.s32.totalorder %s187, %s189
      %p196 = scmp.eq.s32.totalorder %s27, 1
      %p197 = por %p195, %p196
      %p198 = scmp.ne.s32.totalorder %s189, %s190
      %p199 = scmp.eq.s32.totalorder %s27, 0
      %p200 = por %p198, %p199
      %p201 = scmp.ne.s32.totalorder %s189, %s190
      %p202 = scmp.eq.s32.totalorder %s28, 1
      %p203 = por %p201, %p202
      %p205 = scmp.ne.s32.totalorder %s190, %s204
      %p206 = scmp.eq.s32.totalorder %s28, 0
      %p207 = por %p205, %p206
      %s209 = sadd.s32 %s208, 1
      %p212 = scmp.eq.s32.totalorder %s22, 1
      %p213 = scmp.ne.s32.totalorder %s208, %s210
      %p214 = scmp.eq.s32.totalorder %s22, 0
      %p215 = por %p213, %p214
      %p216 = scmp.ne.s32.totalorder %s208, %s210
      %p217 = scmp.eq.s32.totalorder %s27, 1
      %p218 = por %p216, %p217
      %p219 = scmp.ne.s32.totalorder %s210, %s211
      %p220 = scmp.eq.s32.totalorder %s27, 0
      %p221 = por %p219, %p220
      %p222 = scmp.ne.s32.totalorder %s210, %s211
      %p223 = scmp.eq.s32.totalorder %s28, 1
      %p224 = por %p222, %p223
      %p226 = scmp.ne.s32.totalorder %s211, %s225
      %p227 = scmp.eq.s32.totalorder %s28, 0
      %p228 = por %p226, %p227
      %s230 = sadd.s32 %s229, 1
      %p233 = scmp.eq.s32.totalorder %s22, 1
      %p234 = scmp.ne.s32.totalorder %s229, %s231
      %p235 = scmp.eq.s32.totalorder %s22, 0
      %p236 = por %p234, %p235
      %p237 = scmp.ne.s32.totalorder %s229, %s231
      %p238 = scmp.eq.s32.totalorder %s27, 1
      %p239 = por %p237, %p238
      %p240 = scmp.ne.s32.totalorder %s231, %s232
      %p241 = scmp.eq.s32.totalorder %s27, 0
      %p242 = por %p240, %p241
      %p243 = scmp.ne.s32.totalorder %s231, %s232
      %p244 = scmp.eq.s32.totalorder %s28, 1
      %p245 = por %p243, %p244
      %p247 = scmp.ne.s32.totalorder %s232, %s246
      %p248 = scmp.eq.s32.totalorder %s28, 0
      %p249 = por %p247, %p248
      %s251 = sadd.s32 %s250, 1
      %p254 = scmp.eq.s32.totalorder %s22, 1
      %p255 = scmp.ne.s32.totalorder %s250, %s252
      %p256 = scmp.eq.s32.totalorder %s22, 0
      %p257 = por %p255, %p256
      %p258 = scmp.ne.s32.totalorder %s250, %s252
      %p259 = scmp.eq.s32.totalorder %s27, 1
      %p260 = por %p258, %p259
      %p261 = scmp.ne.s32.totalorder %s252, %s253
      %p262 = scmp.eq.s32.totalorder %s27, 0
      %p263 = por %p261, %p262
      %p264 = scmp.ne.s32.totalorder %s252, %s253
      %p265 = scmp.eq.s32.totalorder %s28, 1
      %p266 = por %p264, %p265
      %p268 = scmp.ne.s32.totalorder %s253, %s267
      %p269 = scmp.eq.s32.totalorder %s28, 0
      %p270 = por %p268, %p269
      %s272 = sadd.s32 %s271, 1
      %p275 = scmp.eq.s32.totalorder %s22, 1
      %p276 = scmp.ne.s32.totalorder %s271, %s273
      %p277 = scmp.eq.s32.totalorder %s22, 0
      %p278 = por %p276, %p277
      %p279 = scmp.ne.s32.totalorder %s271, %s273
      %p280 = scmp.eq.s32.totalorder %s27, 1
      %p281 = por %p279, %p280
      %p282 = scmp.ne.s32.totalorder %s273, %s274
      %p283 = scmp.eq.s32.totalorder %s27, 0
      %p284 = por %p282, %p283
      %p285 = scmp.ne.s32.totalorder %s273, %s274
      %p286 = scmp.eq.s32.totalorder %s28, 1
      %p287 = por %p285, %p286
      %p289 = scmp.ne.s32.totalorder %s274, %s288
      %p290 = scmp.eq.s32.totalorder %s28, 0
      %p291 = por %p289, %p290
      %s293 = sadd.s32 %s292, 1
      %p296 = scmp.eq.s32.totalorder %s22, 1
      %p297 = scmp.ne.s32.totalorder %s292, %s294
      %p298 = scmp.eq.s32.totalorder %s22, 0
      %p299 = por %p297, %p298
      %p300 = scmp.ne.s32.totalorder %s292, %s294
      %p301 = scmp.eq.s32.totalorder %s27, 1
      %p302 = por %p300, %p301
      %p303 = scmp.ne.s32.totalorder %s294, %s295
      %p304 = scmp.eq.s32.totalorder %s27, 0
      %p305 = por %p303, %p304
      %p306 = scmp.ne.s32.totalorder %s294, %s295
      %p307 = scmp.eq.s32.totalorder %s28, 1
      %p308 = por %p306, %p307
      %p310 = scmp.ne.s32.totalorder %s295, %s309
      %p311 = scmp.eq.s32.totalorder %s28, 0
      %p312 = por %p310, %p311
      %s314 = sadd.s32 %s313, 1
      %p317 = scmp.eq.s32.totalorder %s22, 1
      %p318 = scmp.ne.s32.totalorder %s313, %s315
      %p319 = scmp.eq.s32.totalorder %s22, 0
      %p320 = por %p318, %p319
      %p321 = scmp.ne.s32.totalorder %s313, %s315
      %p322 = scmp.eq.s32.totalorder %s27, 1
      %p323 = por %p321, %p322
      %p324 = scmp.ne.s32.totalorder %s315, %s316
      %p325 = scmp.eq.s32.totalorder %s27, 0
      %p326 = por %p324, %p325
      %p327 = scmp.ne.s32.totalorder %s315, %s316
      %p328 = scmp.eq.s32.totalorder %s28, 1
      %p329 = por %p327, %p328
      %p331 = scmp.ne.s32.totalorder %s316, %s330
      %p332 = scmp.eq.s32.totalorder %s28, 0
      %p333 = por %p331, %p332
      %s334 = ssub.s32 %s22, %s29
      %p335 = scmp.eq.s32.totalorder %s334, 0
      %s337 = sadd.s32 %s336, 1
      %s338 = scalar_select %p335, %s336, %s337
      %p341 = pneg %p335
      %p342 = scmp.eq.s32.totalorder %s22, 1
      %p343 = por %p341, %p342
      %p344 = scmp.ne.s32.totalorder %s336, %s339
      %p345 = scmp.eq.s32.totalorder %s22, 0
      %p346 = por %p344, %p345
      %p347 = scmp.ne.s32.totalorder %s336, %s339
      %p348 = scmp.eq.s32.totalorder %s27, 1
      %p349 = por %p347, %p348
      %p350 = scmp.ne.s32.totalorder %s339, %s340
      %p351 = scmp.eq.s32.totalorder %s27, 0
      %p352 = por %p350, %p351
      %p353 = scmp.ne.s32.totalorder %s339, %s340
      %p354 = scmp.eq.s32.totalorder %s28, 1
      %p355 = por %p353, %p354
      %p357 = scmp.ne.s32.totalorder %s340, %s356
      %p358 = scmp.eq.s32.totalorder %s28, 0
      %p359 = por %p357, %p358
      %p360 = scmp.le.s32.totalorder 1, %s22
      %p361 = scmp.lt.s32.totalorder %s22, 3
      %p362 = pnand %p360, %p361
      %p363 = pneg %p362
      // Predicated region
      $region9: #{legal_model_forward.5} parent=5 // pred_check
        _
      $region10: #{legal_model_forward.5} parent=5 // pred_check_branch
        %365 = sbr.rel (%p362) target = $region12
      $region11: #{legal_model_forward.5} parent=5 // pred_region
        %s366 = ssub.s32 %s22, 1
        // Predicated region
        $region13: #{legal_model_forward.5} parent=11 // pred_check
          %p367 = pneg %p95
        $region14: #{legal_model_forward.5} parent=11 // pred_check_branch
          %369 = sbr.rel (%p367) target = $region16
        $region15: #{legal_model_forward.5} parent=11 // pred_region
          %371 = vsyncadd [#allocation4], 0
          %s372 = sshll.u32 %s2, 4
          %s373 = int_to_ptr.hbm [resolvable:$true] %s372
          %s374 = sshll.u32 [#allocation3], 4
          %s375 = int_to_ptr.vmem [resolvable:$true] %s374
          %380 = dma.hbm_to_vmem [thread:$0]  %s373, 3072, %s375, [#allocation4], 192, 192, 12
        $region16: #{legal_model_forward.5} parent=11 // pred_fallthru
          _
        // Predicated region
        $region17: #{legal_model_forward.5} parent=11 // pred_check
          %p381 = pneg %p116
        $region18: #{legal_model_forward.5} parent=11 // pred_check_branch
          %383 = sbr.rel (%p381) target = $region20
        $region19: #{legal_model_forward.5} parent=11 // pred_region
          _
        $region20: #{legal_model_forward.5} parent=11 // pred_fallthru
          _
        // Predicated region
        $region21: #{legal_model_forward.5} parent=11 // pred_check
          %p384 = pneg %p137
        $region22: #{legal_model_forward.5} parent=11 // pred_check_branch
          %386 = sbr.rel (%p384) target = $region24
        $region23: #{legal_model_forward.5} parent=11 // pred_region
          %388 = vsyncadd [#allocation6], 0
          %s389 = sshll.u32 %s4, 4
          %s390 = int_to_ptr.hbm [resolvable:$true] %s389
          %s391 = sshll.u32 [#allocation5], 4
          %s392 = int_to_ptr.vmem [resolvable:$true] %s391
          %397 = dma.hbm_to_vmem [thread:$0]  %s390, 1024, %s392, [#allocation6], 64, 64, 4
        $region24: #{legal_model_forward.5} parent=11 // pred_fallthru
          _
        // Predicated region
        $region25: #{legal_model_forward.5} parent=11 // pred_check
          %p398 = pneg %p158
        $region26: #{legal_model_forward.5} parent=11 // pred_check_branch
          %400 = sbr.rel (%p398) target = $region28
        $region27: #{legal_model_forward.5} parent=11 // pred_region
          _
        $region28: #{legal_model_forward.5} parent=11 // pred_fallthru
          _
        // Predicated region
        $region29: #{legal_model_forward.5} parent=11 // pred_check
          %p401 = pneg %p179
        $region30: #{legal_model_forward.5} parent=11 // pred_check_branch
          %403 = sbr.rel (%p401) target = $region32
        $region31: #{legal_model_forward.5} parent=11 // pred_region
          _
        $region32: #{legal_model_forward.5} parent=11 // pred_fallthru
          _
        // Predicated region
        $region33: #{legal_model_forward.5} parent=11 // pred_check
          %p404 = pneg %p200
        $region34: #{legal_model_forward.5} parent=11 // pred_check_branch
          %406 = sbr.rel (%p404) target = $region36
        $region35: #{legal_model_forward.5} parent=11 // pred_region
          _
        $region36: #{legal_model_forward.5} parent=11 // pred_fallthru
          _
        // Predicated region
        $region37: #{legal_model_forward.5} parent=11 // pred_check
          %p407 = pneg %p221
        $region38: #{legal_model_forward.5} parent=11 // pred_check_branch
          %409 = sbr.rel (%p407) target = $region40
        $region39: #{legal_model_forward.5} parent=11 // pred_region
          _
        $region40: #{legal_model_forward.5} parent=11 // pred_fallthru
          _
        // Predicated region
        $region41: #{legal_model_forward.5} parent=11 // pred_check
          %p410 = pneg %p242
        $region42: #{legal_model_forward.5} parent=11 // pred_check_branch
          %412 = sbr.rel (%p410) target = $region44
        $region43: #{legal_model_forward.5} parent=11 // pred_region
          _
        $region44: #{legal_model_forward.5} parent=11 // pred_fallthru
          _
        // Predicated region
        $region45: #{legal_model_forward.5} parent=11 // pred_check
          %p413 = pneg %p263
        $region46: #{legal_model_forward.5} parent=11 // pred_check_branch
          %415 = sbr.rel (%p413) target = $region48
        $region47: #{legal_model_forward.5} parent=11 // pred_region
          %417 = vsyncadd [#allocation6], 0
          %s418 = sshll.u32 %s10, 4
          %s419 = int_to_ptr.hbm [resolvable:$true] %s418
          %s420 = sshll.u32 [#allocation7], 4
          %s421 = int_to_ptr.vmem [resolvable:$true] %s420
          %426 = dma.hbm_to_vmem [thread:$0]  %s419, 2048, %s421, [#allocation6], 64, 64, 4
        $region48: #{legal_model_forward.5} parent=11 // pred_fallthru
          _
        // Predicated region
        $region49: #{legal_model_forward.5} parent=11 // pred_check
          %p427 = pneg %p284
        $region50: #{legal_model_forward.5} parent=11 // pred_check_branch
          %429 = sbr.rel (%p427) target = $region52
        $region51: #{legal_model_forward.5} parent=11 // pred_region
          _
        $region52: #{legal_model_forward.5} parent=11 // pred_fallthru
          _
        // Predicated region
        $region53: #{legal_model_forward.5} parent=11 // pred_check
          %p430 = pneg %p305
        $region54: #{legal_model_forward.5} parent=11 // pred_check_branch
          %432 = sbr.rel (%p430) target = $region56
        $region55: #{legal_model_forward.5} parent=11 // pred_region
          _
        $region56: #{legal_model_forward.5} parent=11 // pred_fallthru
          _
        // Predicated region
        $region57: #{legal_model_forward.5} parent=11 // pred_check
          %p433 = pneg %p326
        $region58: #{legal_model_forward.5} parent=11 // pred_check_branch
          %435 = sbr.rel (%p433) target = $region60
        $region59: #{legal_model_forward.5} parent=11 // pred_region
          _
        $region60: #{legal_model_forward.5} parent=11 // pred_fallthru
          _
      $region12: #{legal_model_forward.5} parent=5 // pred_fallthru
        _
      %p436 = scmp.lt.s32.totalorder %s22, 2
      // Predicated region
      $region61: #{legal_model_forward.5} parent=5 // pred_check
        %p437 = pneg %p436
      $region62: #{legal_model_forward.5} parent=5 // pred_check_branch
        %439 = sbr.rel (%p437) target = $region64
      $region63: #{legal_model_forward.5} parent=5 // pred_region
        // Predicated region
        $region65: #{legal_model_forward.5} parent=63 // pred_check
          %p440 = pneg %p42
        $region66: #{legal_model_forward.5} parent=63 // pred_check_branch
          %442 = sbr.rel (%p440) target = $region68
        $region67: #{legal_model_forward.5} parent=63 // pred_region
          %p443 = scmp.lt.s32.totalorder %s22, 1
          %s444 = scalar_select %p443, %s22, 1
          %s445 = smul.addr %s444, 8
          %s446 = scalar_lea.vmem %s0, %s445
        $region68: #{legal_model_forward.5} parent=63 // pred_fallthru
          _
        // Predicated region
        $region69: #{legal_model_forward.5} parent=63 // pred_check
          %p447 = pneg %p68
        $region70: #{legal_model_forward.5} parent=63 // pred_check_branch
          %449 = sbr.rel (%p447) target = $region72
        $region71: #{legal_model_forward.5} parent=63 // pred_region
          %p450 = scmp.lt.s32.totalorder %s22, 1
          %s451 = scalar_select %p450, %s22, 1
          %s452 = scalar_lea.vmem %s1, %s451
        $region72: #{legal_model_forward.5} parent=63 // pred_fallthru
          _
      $region64: #{legal_model_forward.5} parent=5 // pred_fallthru
        _
      %p453 = scmp.le.s32.totalorder 1, %s22
      %p454 = scmp.lt.s32.totalorder %s22, 3
      %p455 = pnand %p453, %p454
      %p456 = pneg %p455
      // Predicated region
      $region73: #{legal_model_forward.5} parent=5 // pred_check
        _
      $region74: #{legal_model_forward.5} parent=5 // pred_check_branch
        %458 = sbr.rel (%p455) target = $region76
      $region75: #{legal_model_forward.5} parent=5 // pred_region
        %s459 = ssub.s32 %s22, 1
        // Predicated region
        $region77: #{legal_model_forward.5} parent=75 // pred_check
          %p460 = pneg %p95
        $region78: #{legal_model_forward.5} parent=75 // pred_check_branch
          %462 = sbr.rel (%p460) target = $region80
        $region79: #{legal_model_forward.5} parent=75 // pred_region
          %464 = dma.done [#allocation4], 3072
        $region80: #{legal_model_forward.5} parent=75 // pred_fallthru
          _
        // Predicated region
        $region81: #{legal_model_forward.5} parent=75 // pred_check
          %p465 = pneg %p137
        $region82: #{legal_model_forward.5} parent=75 // pred_check_branch
          %467 = sbr.rel (%p465) target = $region84
        $region83: #{legal_model_forward.5} parent=75 // pred_region
          %469 = dma.done [#allocation6], 1024
        $region84: #{legal_model_forward.5} parent=75 // pred_fallthru
          _
        // Predicated region
        $region85: #{legal_model_forward.5} parent=75 // pred_check
          %p470 = pneg %p263
        $region86: #{legal_model_forward.5} parent=75 // pred_check_branch
          %472 = sbr.rel (%p470) target = $region88
        $region87: #{legal_model_forward.5} parent=75 // pred_region
          %474 = dma.done [#allocation6], 2048
        $region88: #{legal_model_forward.5} parent=75 // pred_fallthru
          _
        %p475 = scmp.lt.s32.totalorder %s27, 1
        %s476 = scalar_select %p475, %s27, 1
        %s477 = smul.addr %s476, 8
        %s478 = scalar_lea.vmem %s0, %s477
        %p479 = pneg %p48
        %p480 = pneg %p45
        %p481 = scmp.lt.s32.totalorder %s27, 1
        %s482 = scalar_select %p481, %s27, 1
        %s483 = scalar_lea.vmem %s1, %s482
        %p484 = pneg %p74
        %p485 = pneg %p71
        %p486 = pneg %p95
        %p487 = pneg %p92
        %p488 = pneg %p116
        %p489 = pneg %p113
        %p490 = pneg %p137
        %p491 = pneg %p134
        %p492 = pneg %p158
        %p493 = pneg %p155
        %p494 = pneg %p179
        %p495 = pneg %p176
        %p496 = pneg %p200
        %p497 = pneg %p197
        %p498 = pneg %p221
        %p499 = pneg %p218
        %p500 = pneg %p242
        %p501 = pneg %p239
        %p502 = pneg %p263
        %p503 = pneg %p260
        %p504 = pneg %p284
        %p505 = pneg %p281
        %p506 = pneg %p305
        %p507 = pneg %p302
        %p508 = pneg %p326
        %p509 = pneg %p323
        %p510 = pneg %p352
        %p511 = pneg %p349
        %p512 = scmp.lt.s32.totalorder %s27, 1
        %s513 = scalar_select %p512, %s27, 1
        %s514 = smul.addr %s513, 8
        %s515 = scalar_lea.vmem %s14, %s514
        %p516 = scmp.lt.s32.totalorder %s27, 1
        %s517 = scalar_select %p516, %s27, 1
        %s518 = smul.addr %s517, 8
        %s519 = scalar_lea.vmem %s0, %s518
        %p520 = scmp.lt.s32.totalorder %s27, 1
        %s521 = scalar_select %p520, %s27, 1
        %s522 = scalar_lea.vmem %s1, %s521
        %p523 = scmp.lt.s32.totalorder %s27, 1
        %s524 = scalar_select %p523, %s27, 1
        %s525 = smul.addr %s524, 8
        %s526 = scalar_lea.vmem %s14, %s525
        %v528 = vld [vmem:[%s519] sm:$0xff]
        %v529 = vpack.c.bf16 %v528, %v528
        %v530 = vld [vmem:[#allocation3] sm:$0xff]
        %v531 = vld [vmem:[#allocation3 + $0x8] sm:$0xf]
        %v532 = vld [vmem:[#allocation3 + $0xc] sm:$0xff]
        %v533 = vld [vmem:[#allocation3 + $0x14] sm:$0xf]
        %v534 = vld [vmem:[#allocation3 + $0x18] sm:$0xff]
        %v535 = vld [vmem:[#allocation3 + $0x20] sm:$0xf]
        %v536 = vld [vmem:[#allocation3 + $0x24] sm:$0xff]
        %v537 = vld [vmem:[#allocation3 + $0x2c] sm:$0xf]
        %v538 = vld [vmem:[#allocation3 + $0x30] sm:$0xff]
        %v539 = vld [vmem:[#allocation3 + $0x38] sm:$0xf]
        %v540 = vld [vmem:[#allocation3 + $0x3c] sm:$0xff]
        %v541 = vld [vmem:[#allocation3 + $0x44] sm:$0xf]
        %v542 = vld [vmem:[#allocation3 + $0x48] sm:$0xff]
        %v543 = vld [vmem:[#allocation3 + $0x50] sm:$0xf]
        %v544 = vld [vmem:[#allocation3 + $0x54] sm:$0xff]
        %v545 = vld [vmem:[#allocation3 + $0x5c] sm:$0xf]
        %v546 = vld [vmem:[#allocation3 + $0x60] sm:$0xff]
        %v547 = vld [vmem:[#allocation3 + $0x68] sm:$0xf]
        %v548 = vld [vmem:[#allocation3 + $0x6c] sm:$0xff]
        %v549 = vld [vmem:[#allocation3 + $0x74] sm:$0xf]
        %v550 = vld [vmem:[#allocation3 + $0x78] sm:$0xff]
        %v551 = vld [vmem:[#allocation3 + $0x80] sm:$0xf]
        %v552 = vld [vmem:[#allocation3 + $0x84] sm:$0xff]
        %v553 = vld [vmem:[#allocation3 + $0x8c] sm:$0xf]
        %v554 = vld [vmem:[#allocation3 + $0x90] sm:$0xff]
        %v555 = vld [vmem:[#allocation3 + $0x98] sm:$0xf]
        %v556 = vld [vmem:[#allocation3 + $0x9c] sm:$0xff]
        %v557 = vld [vmem:[#allocation3 + $0xa4] sm:$0xf]
        %v558 = vld [vmem:[#allocation3 + $0xa8] sm:$0xff]
        %v559 = vld [vmem:[#allocation3 + $0xb0] sm:$0xf]
        %v560 = vld [vmem:[#allocation3 + $0xb4] sm:$0xff]
        %v561 = vld [vmem:[#allocation3 + $0xbc] sm:$0xf]
        %v562 = vld [vmem:[%s3] sm:$0x7]
        %v564 = vperm.slane %v562, 0
        %v565 = vperm.slane %v562, 1
        %v566 = vperm.slane %v562, 2
        %v602 = vunpack.c.l.b16 %v530
        %v603 = vunpack.c.h.b16 %v530
        %v604 = vunpack.c.l.b16 %v531
        %v605 = vunpack.c.l.b16 %v532
        %v606 = vunpack.c.h.b16 %v532
        %v607 = vunpack.c.l.b16 %v533
        %v608 = vunpack.c.l.b16 %v534
        %v609 = vunpack.c.h.b16 %v534
        %v610 = vunpack.c.l.b16 %v535
        %v611 = vunpack.c.l.b16 %v536
        %v612 = vunpack.c.h.b16 %v536
        %v613 = vunpack.c.l.b16 %v537
        %v614 = vunpack.c.l.b16 %v538
        %v615 = vunpack.c.h.b16 %v538
        %v616 = vunpack.c.l.b16 %v539
        %v617 = vunpack.c.l.b16 %v540
        %v618 = vunpack.c.h.b16 %v540
        %v619 = vunpack.c.l.b16 %v541
        %v620 = vunpack.c.l.b16 %v542
        %v621 = vunpack.c.h.b16 %v542
        %v622 = vunpack.c.l.b16 %v543
        %v623 = vunpack.c.l.b16 %v544
        %v624 = vunpack.c.h.b16 %v544
        %v625 = vunpack.c.l.b16 %v545
        %v626 = vunpack.c.l.b16 %v546
        %v627 = vunpack.c.h.b16 %v546
        %v628 = vunpack.c.l.b16 %v547
        %v629 = vunpack.c.l.b16 %v548
        %v630 = vunpack.c.h.b16 %v548
        %v631 = vunpack.c.l.b16 %v549
        %v632 = vunpack.c.l.b16 %v550
        %v633 = vunpack.c.h.b16 %v550
        %v634 = vunpack.c.l.b16 %v551
        %v635 = vunpack.c.l.b16 %v552
        %v636 = vunpack.c.h.b16 %v552
        %v637 = vunpack.c.l.b16 %v553
        %v638 = vunpack.c.l.b16 %v554
        %v639 = vunpack.c.h.b16 %v554
        %v640 = vunpack.c.l.b16 %v555
        %v641 = vunpack.c.l.b16 %v556
        %v642 = vunpack.c.h.b16 %v556
        %v643 = vunpack.c.l.b16 %v557
        %v644 = vunpack.c.l.b16 %v558
        %v645 = vunpack.c.h.b16 %v558
        %v646 = vunpack.c.l.b16 %v559
        %v647 = vunpack.c.l.b16 %v560
        %v648 = vunpack.c.h.b16 %v560
        %v649 = vunpack.c.l.b16 %v561
        %v650 = vpack.c.b16 %v605, %v602
        %v651 = vpack.c.b16 %v606, %v603
        %v652 = vpack.c.b16 %v607, %v604
        %v653 = vpack.c.b16 %v611, %v608
        %v654 = vpack.c.b16 %v612, %v609
        %v655 = vpack.c.b16 %v613, %v610
        %v656 = vpack.c.b16 %v617, %v614
        %v657 = vpack.c.b16 %v618, %v615
        %v658 = vpack.c.b16 %v619, %v616
        %v659 = vpack.c.b16 %v623, %v620
        %v660 = vpack.c.b16 %v624, %v621
        %v661 = vpack.c.b16 %v625, %v622
        %v662 = vpack.c.b16 %v629, %v626
        %v663 = vpack.c.b16 %v630, %v627
        %v664 = vpack.c.b16 %v631, %v628
        %v665 = vpack.c.b16 %v635, %v632
        %v666 = vpack.c.b16 %v636, %v633
        %v667 = vpack.c.b16 %v637, %v634
        %v668 = vpack.c.b16 %v641, %v638
        %v669 = vpack.c.b16 %v642, %v639
        %v670 = vpack.c.b16 %v643, %v640
        %v671 = vpack.c.b16 %v647, %v644
        %v672 = vpack.c.b16 %v648, %v645
        %v673 = vpack.c.b16 %v649, %v646
        %698 = vmatpush.bf16.msra.mxu0 %v671
        %699 = vmatpush.bf16.msra.mxu0 %v668
        %700 = vmatpush.bf16.msra.mxu0 %v665
        %701 = vmatpush.bf16.msra.mxu0 %v662
        %702 = vmatpush.bf16.msra.mxu0 %v659
        %703 = vmatpush.bf16.msra.mxu0 %v656
        %704 = vmatpush.bf16.msra.mxu0 %v653
        %705 = vmatpush.bf16.msra.mxu0 %v650
        %706 = vmatmul.bf16.gmra.mxu0 %v529
        %v707 = vpop.f32.mrf.mxu0
        %v708 = vadd.f32 %v564, %v707
        %v709 = vpop.f32.mrf.mxu0
        %710 = vdwg.mxu0
        %711 = vmatpush.bf16.msra.mxu0 %v672
        %712 = vmatpush.bf16.msra.mxu0 %v669
        %713 = vmatpush.bf16.msra.mxu0 %v666
        %714 = vmatpush.bf16.msra.mxu0 %v663
        %715 = vmatpush.bf16.msra.mxu0 %v660
        %716 = vmatpush.bf16.msra.mxu0 %v657
        %717 = vmatpush.bf16.msra.mxu0 %v654
        %718 = vmatpush.bf16.msra.mxu0 %v651
        %719 = vmatmul.bf16.gmra.mxu0 %v529
        %v720 = vpop.f32.mrf.mxu0
        %v721 = vadd.f32 %v565, %v720
        %v722 = vpop.f32.mrf.mxu0
        %723 = vdwg.mxu0
        %724 = vmatpush.bf16.msra.mxu0 %v673
        %725 = vmatpush.bf16.msra.mxu0 %v670
        %726 = vmatpush.bf16.msra.mxu0 %v667
        %727 = vmatpush.bf16.msra.mxu0 %v664
        %728 = vmatpush.bf16.msra.mxu0 %v661
        %729 = vmatpush.bf16.msra.mxu0 %v658
        %730 = vmatpush.bf16.msra.mxu0 %v655
        %731 = vmatpush.bf16.msra.mxu0 %v652
        %732 = vmatmul.bf16.gmra.mxu0 %v529
        %v733 = vpop.f32.mrf.mxu0
        %v734 = vadd.f32 %v566, %v733
        %v735 = vpop.f32.mrf.mxu0
        %736 = vdwg.mxu0
        %v737 = vld [vmem:[%s522] sm:$0x1]
        %v738 = vpack.c.bf16 %v708, %v708
        %v739 = vpack.c.bf16 %v721, %v721
        %v740 = vpack.c.bf16 %v734, %v734
        %vm741 = vcmask 523264
        %v743 = vsel %vm741, %v738, 0
        %v746 = vsel %vm741, %v739, 0
        %748 = vmatpush.bf16.xpose.msra.mxu0 0
        %749 = vmatpush.bf16.xpose.msra.mxu0 0
        %750 = vmatpush.bf16.xpose.msra.mxu0 0
        %751 = vmatpush.bf16.xpose.msra.mxu0 0
        %752 = vmatpush.bf16.xpose.msra.mxu0 0
        %753 = vmatpush.bf16.xpose.msra.mxu0 0
        %754 = vmatpush.bf16.xpose.msra.mxu0 0
        %755 = vmatpush.bf16.xpose.msra.mxu0 %v746
        %756 = vmatmul.bf16.gmra.mxu0 %v743
        %v757 = vpop.f32.mrf.mxu0
        %v758 = vadd.f32 0.0, %v757
        %v759 = vpop.f32.mrf.mxu0
        %760 = vdwg.mxu0
        %v761 = vmul.f32 %v758, 0.125
        %v763 = vperm.slane %v737, 0
        %v765 = vadd.f32 %v761, %v763
        %vm766 = vcmask 64512
        %v767 = vsel %vm766, %v765, -inf
        %768 = vmax.xlane.f32.xlu0 %v767
        %v769 = vpop.xlane.xlu0 %768
        %v770 = vsub.f32 %v765, %v769
        %v771 = vmul.f32 %v770, 1.442695
        %v772 = vpow.pop %v771
        %v773 = vsel %vm766, %v772, 0.0
        %774 = vadd.xlane.f32.xlu0 %v773
        %v775 = vpop.xlane.xlu0 %774
        %v776 = vrcp.pop %v775
        %v777 = vmul.f32 %v772, %v776
        %v778 = vpack.c.bf16 %v777, %v777
        %v780 = vsel %vm766, %v778, 0
        %vm782 = vcmask 1043456
        %v784 = vsel %vm782, %v740, 0
        %786 = vmatpush.bf16.msra.mxu0 0
        %787 = vmatpush.bf16.msra.mxu0 0
        %788 = vmatpush.bf16.msra.mxu0 0
        %789 = vmatpush.bf16.msra.mxu0 0
        %790 = vmatpush.bf16.msra.mxu0 0
        %791 = vmatpush.bf16.msra.mxu0 0
        %792 = vmatpush.bf16.msra.mxu0 0
        %793 = vmatpush.bf16.msra.mxu0 %v784
        %794 = vmatmul.bf16.gmra.mxu0 %v780
        %v795 = vpop.f32.mrf.mxu0
        %v796 = vadd.f32 0.0, %v795
        %v797 = vpop.f32.mrf.mxu0
        %798 = vdwg.mxu0
        %799 = vst.msk [vmem:[#allocation2] sm:$0xff] %vm741, %v796
        %801 = vrot.lane.b32.xlu0 %v738, 64
        %v802 = vpop.permute.xlu0 %801
        %804 = vrot.lane.b32.xlu0 %v739, 64
        %v805 = vpop.permute.xlu0 %804
        %v807 = vsel %vm741, %v802, 0
        %v810 = vsel %vm741, %v805, 0
        %812 = vmatpush.bf16.xpose.msra.mxu0 0
        %813 = vmatpush.bf16.xpose.msra.mxu0 0
        %814 = vmatpush.bf16.xpose.msra.mxu0 0
        %815 = vmatpush.bf16.xpose.msra.mxu0 0
        %816 = vmatpush.bf16.xpose.msra.mxu0 0
        %817 = vmatpush.bf16.xpose.msra.mxu0 0
        %818 = vmatpush.bf16.xpose.msra.mxu0 0
        %819 = vmatpush.bf16.xpose.msra.mxu0 %v810
        %820 = vmatmul.bf16.gmra.mxu0 %v807
        %v821 = vpop.f32.mrf.mxu0
        %v822 = vadd.f32 0.0, %v821
        %v823 = vpop.f32.mrf.mxu0
        %824 = vdwg.mxu0
        %v825 = vmul.f32 %v822, 0.125
        %v826 = vadd.f32 %v825, %v763
        %v827 = vsel %vm766, %v826, -inf
        %828 = vmax.xlane.f32.xlu0 %v827
        %v829 = vpop.xlane.xlu0 %828
        %v830 = vsub.f32 %v826, %v829
        %v831 = vmul.f32 %v830, 1.442695
        %v832 = vpow.pop %v831
        %v833 = vsel %vm766, %v832, 0.0
        %834 = vadd.xlane.f32.xlu0 %v833
        %v835 = vpop.xlane.xlu0 %834
        %v836 = vrcp.pop %v835
        %v837 = vmul.f32 %v832, %v836
        %v838 = vpack.c.bf16 %v837, %v837
        %840 = vrot.lane.b32.xlu0 %v740, 64
        %v841 = vpop.permute.xlu0 %840
        %v843 = vsel %vm766, %v838, 0
        %v846 = vsel %vm782, %v841, 0
        %848 = vmatpush.bf16.msra.mxu0 0
        %849 = vmatpush.bf16.msra.mxu0 0
        %850 = vmatpush.bf16.msra.mxu0 0
        %851 = vmatpush.bf16.msra.mxu0 0
        %852 = vmatpush.bf16.msra.mxu0 0
        %853 = vmatpush.bf16.msra.mxu0 0
        %854 = vmatpush.bf16.msra.mxu0 0
        %855 = vmatpush.bf16.msra.mxu0 %v846
        %856 = vmatmul.bf16.gmra.mxu0 %v843
        %v857 = vpop.f32.mrf.mxu0
        %v858 = vadd.f32 0.0, %v857
        %v859 = vpop.f32.mrf.mxu0
        %860 = vdwg.mxu0
        %862 = vrot.lane.b32.xlu0 %v858, 64
        %v863 = vpop.permute.xlu0 %862
        %vm865 = vcmask 1048064
        %866 = vst.msk [vmem:[#allocation2] sm:$0xff] %vm865, %v863
        %v867 = vld [vmem:[#allocation2] sm:$0xff]
        %v868 = vpack.c.bf16 %v867, %v867
        %v869 = vld [vmem:[#allocation5] sm:$0xf]
        %v870 = vld [vmem:[#allocation5 + $0x4] sm:$0xf]
        %v871 = vld [vmem:[#allocation5 + $0x8] sm:$0xf]
        %v872 = vld [vmem:[#allocation5 + $0xc] sm:$0xf]
        %v873 = vld [vmem:[#allocation5 + $0x10] sm:$0xf]
        %v874 = vld [vmem:[#allocation5 + $0x14] sm:$0xf]
        %v875 = vld [vmem:[#allocation5 + $0x18] sm:$0xf]
        %v876 = vld [vmem:[#allocation5 + $0x1c] sm:$0xf]
        %v877 = vld [vmem:[#allocation5 + $0x20] sm:$0xf]
        %v878 = vld [vmem:[#allocation5 + $0x24] sm:$0xf]
        %v879 = vld [vmem:[#allocation5 + $0x28] sm:$0xf]
        %v880 = vld [vmem:[#allocation5 + $0x2c] sm:$0xf]
        %v881 = vld [vmem:[#allocation5 + $0x30] sm:$0xf]
        %v882 = vld [vmem:[#allocation5 + $0x34] sm:$0xf]
        %v883 = vld [vmem:[#allocation5 + $0x38] sm:$0xf]
        %v884 = vld [vmem:[#allocation5 + $0x3c] sm:$0xf]
        %v885 = vld [vmem:[%s5] sm:$0x1]
        %v887 = vperm.slane %v885, 0
        %v905 = vunpack.c.l.b16 %v869
        %v906 = vunpack.c.l.b16 %v870
        %v907 = vunpack.c.l.b16 %v871
        %v908 = vunpack.c.l.b16 %v872
        %v909 = vunpack.c.l.b16 %v873
        %v910 = vunpack.c.l.b16 %v874
        %v911 = vunpack.c.l.b16 %v875
        %v912 = vunpack.c.l.b16 %v876
        %v913 = vunpack.c.l.b16 %v877
        %v914 = vunpack.c.l.b16 %v878
        %v915 = vunpack.c.l.b16 %v879
        %v916 = vunpack.c.l.b16 %v880
        %v917 = vunpack.c.l.b16 %v881
        %v918 = vunpack.c.l.b16 %v882
        %v919 = vunpack.c.l.b16 %v883
        %v920 = vunpack.c.l.b16 %v884
        %v921 = vpack.c.b16 %v906, %v905
        %v922 = vpack.c.b16 %v908, %v907
        %v923 = vpack.c.b16 %v910, %v909
        %v924 = vpack.c.b16 %v912, %v911
        %v925 = vpack.c.b16 %v914, %v913
        %v926 = vpack.c.b16 %v916, %v915
        %v927 = vpack.c.b16 %v918, %v917
        %v928 = vpack.c.b16 %v920, %v919
        %937 = vmatpush.bf16.msra.mxu0 %v928
        %938 = vmatpush.bf16.msra.mxu0 %v927
        %939 = vmatpush.bf16.msra.mxu0 %v926
        %940 = vmatpush.bf16.msra.mxu0 %v925
        %941 = vmatpush.bf16.msra.mxu0 %v924
        %942 = vmatpush.bf16.msra.mxu0 %v923
        %943 = vmatpush.bf16.msra.mxu0 %v922
        %944 = vmatpush.bf16.msra.mxu0 %v921
        %945 = vmatmul.bf16.gmra.mxu0 %v868
        %v946 = vpop.f32.mrf.mxu0
        %v947 = vadd.f32 %v887, %v946
        %v948 = vpop.f32.mrf.mxu0
        %949 = vdwg.mxu0
        %v950 = vadd.f32 %v947, %v528
        %951 = vadd.xlane.f32.xlu0 %v950
        %v952 = vpop.xlane.xlu0 %951
        %v953 = vrcp.pop 128.0
        %v954 = vmul.f32 128.0, %v953
        %v955 = vsub.f32 1.0, %v954
        %v956 = vmul.f32 %v953, %v955
        %v957 = vadd.f32 %v953, %v956
        %vm958 = vweird.f32 %v953
        %v959 = vsel %vm958, %v953, %v957
        %v960 = vmul.f32 %v952, %v959
        %v961 = vmul.f32 %v950, %v950
        %962 = vadd.xlane.f32.xlu0 %v961
        %v963 = vpop.xlane.xlu0 %962
        %v964 = vmul.f32 %v963, %v959
        %v965 = vmul.f32 %v960, %v960
        %v966 = vsub.f32 %v964, %v965
        %v967 = vsub.f32 %v950, %v960
        %v968 = vadd.f32 %v966, 1e-12
        %v969 = vrsqrt.pop %v968
        %v970 = vmul.f32 %v969, %v968
        %v971 = vmul.f32 %v970, %v969
        %v972 = vmul.f32 0.5, %v971
        %v973 = vsub.f32 1.5, %v972
        %v974 = vmul.f32 %v969, %v973
        %vm975 = vweird.f32 %v968
        %vm976 = vweird.f32 %v969
        %vm977 = vmor %vm975, %vm976
        %v978 = vsel %vm977, %v969, %v974
        %v979 = vmul.f32 %v967, %v978
        %v980 = vld [vmem:[%s6] sm:$0x1]
        %v982 = vperm.slane %v980, 0
        %v984 = vmul.f32 %v979, %v982
        %v985 = vld [vmem:[%s7] sm:$0x1]
        %v987 = vperm.slane %v985, 0
        %v989 = vadd.f32 %v984, %v987
        %v990 = vpack.c.bf16 %v989, %v989
        %v991 = vld [vmem:[%s8] sm:$0xff]
        %v992 = vld [vmem:[%s8 + $0x8] sm:$0xff]
        %v993 = vld [vmem:[%s8 + $0x10] sm:$0xff]
        %v994 = vld [vmem:[%s8 + $0x18] sm:$0xff]
        %v995 = vld [vmem:[%s8 + $0x20] sm:$0xff]
        %v996 = vld [vmem:[%s8 + $0x28] sm:$0xff]
        %v997 = vld [vmem:[%s8 + $0x30] sm:$0xff]
        %v998 = vld [vmem:[%s8 + $0x38] sm:$0xff]
        %v999 = vld [vmem:[%s8 + $0x40] sm:$0xff]
        %v1000 = vld [vmem:[%s8 + $0x48] sm:$0xff]
        %v1001 = vld [vmem:[%s8 + $0x50] sm:$0xff]
        %v1002 = vld [vmem:[%s8 + $0x58] sm:$0xff]
        %v1003 = vld [vmem:[%s8 + $0x60] sm:$0xff]
        %v1004 = vld [vmem:[%s8 + $0x68] sm:$0xff]
        %v1005 = vld [vmem:[%s8 + $0x70] sm:$0xff]
        %v1006 = vld [vmem:[%s8 + $0x78] sm:$0xff]
        %v1007 = vld [vmem:[%s9] sm:$0x3]
        %v1009 = vperm.slane %v1007, 0
        %v1010 = vperm.slane %v1007, 1
        %v1029 = vunpack.c.l.b16 %v991
        %v1030 = vunpack.c.h.b16 %v991
        %v1031 = vunpack.c.l.b16 %v992
        %v1032 = vunpack.c.h.b16 %v992
        %v1033 = vunpack.c.l.b16 %v993
        %v1034 = vunpack.c.h.b16 %v993
        %v1035 = vunpack.c.l.b16 %v994
        %v1036 = vunpack.c.h.b16 %v994
        %v1037 = vunpack.c.l.b16 %v995
        %v1038 = vunpack.c.h.b16 %v995
        %v1039 = vunpack.c.l.b16 %v996
        %v1040 = vunpack.c.h.b16 %v996
        %v1041 = vunpack.c.l.b16 %v997
        %v1042 = vunpack.c.h.b16 %v997
        %v1043 = vunpack.c.l.b16 %v998
        %v1044 = vunpack.c.h.b16 %v998
        %v1045 = vunpack.c.l.b16 %v999
        %v1046 = vunpack.c.h.b16 %v999
        %v1047 = vunpack.c.l.b16 %v1000
        %v1048 = vunpack.c.h.b16 %v1000
        %v1049 = vunpack.c.l.b16 %v1001
        %v1050 = vunpack.c.h.b16 %v1001
        %v1051 = vunpack.c.l.b16 %v1002
        %v1052 = vunpack.c.h.b16 %v1002
        %v1053 = vunpack.c.l.b16 %v1003
        %v1054 = vunpack.c.h.b16 %v1003
        %v1055 = vunpack.c.l.b16 %v1004
        %v1056 = vunpack.c.h.b16 %v1004
        %v1057 = vunpack.c.l.b16 %v1005
        %v1058 = vunpack.c.h.b16 %v1005
        %v1059 = vunpack.c.l.b16 %v1006
        %v1060 = vunpack.c.h.b16 %v1006
        %v1061 = vpack.c.b16 %v1031, %v1029
        %v1062 = vpack.c.b16 %v1032, %v1030
        %v1063 = vpack.c.b16 %v1035, %v1033
        %v1064 = vpack.c.b16 %v1036, %v1034
        %v1065 = vpack.c.b16 %v1039, %v1037
        %v1066 = vpack.c.b16 %v1040, %v1038
        %v1067 = vpack.c.b16 %v1043, %v1041
        %v1068 = vpack.c.b16 %v1044, %v1042
        %v1069 = vpack.c.b16 %v1047, %v1045
        %v1070 = vpack.c.b16 %v1048, %v1046
        %v1071 = vpack.c.b16 %v1051, %v1049
        %v1072 = vpack.c.b16 %v1052, %v1050
        %v1073 = vpack.c.b16 %v1055, %v1053
        %v1074 = vpack.c.b16 %v1056, %v1054
        %v1075 = vpack.c.b16 %v1059, %v1057
        %v1076 = vpack.c.b16 %v1060, %v1058
        %1093 = vmatpush.bf16.msra.mxu0 %v1075
        %1094 = vmatpush.bf16.msra.mxu0 %v1073
        %1095 = vmatpush.bf16.msra.mxu0 %v1071
        %1096 = vmatpush.bf16.msra.mxu0 %v1069
        %1097 = vmatpush.bf16.msra.mxu0 %v1067
        %1098 = vmatpush.bf16.msra.mxu0 %v1065
        %1099 = vmatpush.bf16.msra.mxu0 %v1063
        %1100 = vmatpush.bf16.msra.mxu0 %v1061
        %1101 = vmatmul.bf16.gmra.mxu0 %v990
        %v1102 = vpop.f32.mrf.mxu0
        %v1103 = vadd.f32 %v1009, %v1102
        %v1104 = vpop.f32.mrf.mxu0
        %1105 = vdwg.mxu0
        %1106 = vmatpush.bf16.msra.mxu0 %v1076
        %1107 = vmatpush.bf16.msra.mxu0 %v1074
        %1108 = vmatpush.bf16.msra.mxu0 %v1072
        %1109 = vmatpush.bf16.msra.mxu0 %v1070
        %1110 = vmatpush.bf16.msra.mxu0 %v1068
        %1111 = vmatpush.bf16.msra.mxu0 %v1066
        %1112 = vmatpush.bf16.msra.mxu0 %v1064
        %1113 = vmatpush.bf16.msra.mxu0 %v1062
        %1114 = vmatmul.bf16.gmra.mxu0 %v990
        %v1115 = vpop.f32.mrf.mxu0
        %v1116 = vadd.f32 %v1010, %v1115
        %v1117 = vpop.f32.mrf.mxu0
        %1118 = vdwg.mxu0
        %v1119 = vmul.f32 %v1103, 0.5
        %v1120 = vmul.f32 %v1116, 0.5
        %v1121 = vmul.f32 %v1103, 0.044715
        %v1122 = vmul.f32 %v1116, 0.044715
        %v1123 = vmul.f32 %v1121, %v1103
        %v1124 = vmul.f32 %v1122, %v1116
        %v1125 = vmul.f32 %v1123, %v1103
        %v1126 = vmul.f32 %v1124, %v1116
        %v1127 = vadd.f32 %v1103, %v1125
        %v1128 = vadd.f32 %v1116, %v1126
        %v1129 = vmul.f32 %v1127, 0.7978846
        %v1130 = vmul.f32 %v1128, 0.7978846
        %v1131 = vtanh.pop %v1129
        %v1132 = vtanh.pop %v1130
        %v1133 = vadd.f32 %v1131, 1.0
        %v1134 = vadd.f32 %v1132, 1.0
        %v1135 = vmul.f32 %v1119, %v1133
        %v1136 = vmul.f32 %v1120, %v1134
        %v1137 = vpack.c.bf16 %v1135, %v1135
        %v1138 = vpack.c.bf16 %v1136, %v1136
        %v1139 = vld [vmem:[#allocation7] sm:$0xf]
        %v1140 = vld [vmem:[#allocation7 + $0x4] sm:$0xf]
        %v1141 = vld [vmem:[#allocation7 + $0x8] sm:$0xf]
        %v1142 = vld [vmem:[#allocation7 + $0xc] sm:$0xf]
        %v1143 = vld [vmem:[#allocation7 + $0x10] sm:$0xf]
        %v1144 = vld [vmem:[#allocation7 + $0x14] sm:$0xf]
        %v1145 = vld [vmem:[#allocation7 + $0x18] sm:$0xf]
        %v1146 = vld [vmem:[#allocation7 + $0x1c] sm:$0xf]
        %v1147 = vld [vmem:[#allocation7 + $0x20] sm:$0xf]
        %v1148 = vld [vmem:[#allocation7 + $0x24] sm:$0xf]
        %v1149 = vld [vmem:[#allocation7 + $0x28] sm:$0xf]
        %v1150 = vld [vmem:[#allocation7 + $0x2c] sm:$0xf]
        %v1151 = vld [vmem:[#allocation7 + $0x30] sm:$0xf]
        %v1152 = vld [vmem:[#allocation7 + $0x34] sm:$0xf]
        %v1153 = vld [vmem:[#allocation7 + $0x38] sm:$0xf]
        %v1154 = vld [vmem:[#allocation7 + $0x3c] sm:$0xf]
        %v1155 = vld [vmem:[#allocation7 + $0x40] sm:$0xf]
        %v1156 = vld [vmem:[#allocation7 + $0x44] sm:$0xf]
        %v1157 = vld [vmem:[#allocation7 + $0x48] sm:$0xf]
        %v1158 = vld [vmem:[#allocation7 + $0x4c] sm:$0xf]
        %v1159 = vld [vmem:[#allocation7 + $0x50] sm:$0xf]
        %v1160 = vld [vmem:[#allocation7 + $0x54] sm:$0xf]
        %v1161 = vld [vmem:[#allocation7 + $0x58] sm:$0xf]
        %v1162 = vld [vmem:[#allocation7 + $0x5c] sm:$0xf]
        %v1163 = vld [vmem:[#allocation7 + $0x60] sm:$0xf]
        %v1164 = vld [vmem:[#allocation7 + $0x64] sm:$0xf]
        %v1165 = vld [vmem:[#allocation7 + $0x68] sm:$0xf]
        %v1166 = vld [vmem:[#allocation7 + $0x6c] sm:$0xf]
        %v1167 = vld [vmem:[#allocation7 + $0x70] sm:$0xf]
        %v1168 = vld [vmem:[#allocation7 + $0x74] sm:$0xf]
        %v1169 = vld [vmem:[#allocation7 + $0x78] sm:$0xf]
        %v1170 = vld [vmem:[#allocation7 + $0x7c] sm:$0xf]
        %v1171 = vld [vmem:[%s11] sm:$0x1]
        %v1173 = vperm.slane %v1171, 0
        %v1207 = vunpack.c.l.b16 %v1139
        %v1208 = vunpack.c.l.b16 %v1140
        %v1209 = vunpack.c.l.b16 %v1141
        %v1210 = vunpack.c.l.b16 %v1142
        %v1211 = vunpack.c.l.b16 %v1143
        %v1212 = vunpack.c.l.b16 %v1144
        %v1213 = vunpack.c.l.b16 %v1145
        %v1214 = vunpack.c.l.b16 %v1146
        %v1215 = vunpack.c.l.b16 %v1147
        %v1216 = vunpack.c.l.b16 %v1148
        %v1217 = vunpack.c.l.b16 %v1149
        %v1218 = vunpack.c.l.b16 %v1150
        %v1219 = vunpack.c.l.b16 %v1151
        %v1220 = vunpack.c.l.b16 %v1152
        %v1221 = vunpack.c.l.b16 %v1153
        %v1222 = vunpack.c.l.b16 %v1154
        %v1223 = vunpack.c.l.b16 %v1155
        %v1224 = vunpack.c.l.b16 %v1156
        %v1225 = vunpack.c.l.b16 %v1157
        %v1226 = vunpack.c.l.b16 %v1158
        %v1227 = vunpack.c.l.b16 %v1159
        %v1228 = vunpack.c.l.b16 %v1160
        %v1229 = vunpack.c.l.b16 %v1161
        %v1230 = vunpack.c.l.b16 %v1162
        %v1231 = vunpack.c.l.b16 %v1163
        %v1232 = vunpack.c.l.b16 %v1164
        %v1233 = vunpack.c.l.b16 %v1165
        %v1234 = vunpack.c.l.b16 %v1166
        %v1235 = vunpack.c.l.b16 %v1167
        %v1236 = vunpack.c.l.b16 %v1168
        %v1237 = vunpack.c.l.b16 %v1169
        %v1238 = vunpack.c.l.b16 %v1170
        %v1239 = vpack.c.b16 %v1208, %v1207
        %v1240 = vpack.c.b16 %v1210, %v1209
        %v1241 = vpack.c.b16 %v1212, %v1211
        %v1242 = vpack.c.b16 %v1214, %v1213
        %v1243 = vpack.c.b16 %v1216, %v1215
        %v1244 = vpack.c.b16 %v1218, %v1217
        %v1245 = vpack.c.b16 %v1220, %v1219
        %v1246 = vpack.c.b16 %v1222, %v1221
        %v1247 = vpack.c.b16 %v1224, %v1223
        %v1248 = vpack.c.b16 %v1226, %v1225
        %v1249 = vpack.c.b16 %v1228, %v1227
        %v1250 = vpack.c.b16 %v1230, %v1229
        %v1251 = vpack.c.b16 %v1232, %v1231
        %v1252 = vpack.c.b16 %v1234, %v1233
        %v1253 = vpack.c.b16 %v1236, %v1235
        %v1254 = vpack.c.b16 %v1238, %v1237
        %1271 = vmatpush.bf16.msra.mxu0 %v1246
        %1272 = vmatpush.bf16.msra.mxu0 %v1245
        %1273 = vmatpush.bf16.msra.mxu0 %v1244
        %1274 = vmatpush.bf16.msra.mxu0 %v1243
        %1275 = vmatpush.bf16.msra.mxu0 %v1242
        %1276 = vmatpush.bf16.msra.mxu0 %v1241
        %1277 = vmatpush.bf16.msra.mxu0 %v1240
        %1278 = vmatpush.bf16.msra.mxu0 %v1239
        %1279 = vmatmul.bf16.gmra.mxu0 %v1137
        %v1280 = vpop.f32.mrf.mxu0
        %v1281 = vadd.f32 %v1173, %v1280
        %v1282 = vpop.f32.mrf.mxu0
        %1283 = vdwg.mxu0
        %1284 = vmatpush.bf16.msra.mxu0 %v1254
        %1285 = vmatpush.bf16.msra.mxu0 %v1253
        %1286 = vmatpush.bf16.msra.mxu0 %v1252
        %1287 = vmatpush.bf16.msra.mxu0 %v1251
        %1288 = vmatpush.bf16.msra.mxu0 %v1250
        %1289 = vmatpush.bf16.msra.mxu0 %v1249
        %1290 = vmatpush.bf16.msra.mxu0 %v1248
        %1291 = vmatpush.bf16.msra.mxu0 %v1247
        %1292 = vmatmul.bf16.gmra.mxu0 %v1138
        %v1293 = vpop.f32.mrf.mxu0
        %v1294 = vadd.f32 %v1281, %v1293
        %v1295 = vpop.f32.mrf.mxu0
        %1296 = vdwg.mxu0
        %v1297 = vadd.f32 %v1294, %v989
        %1298 = vadd.xlane.f32.xlu0 %v1297
        %v1299 = vpop.xlane.xlu0 %1298
        %v1300 = vmul.f32 %v1299, %v959
        %v1301 = vmul.f32 %v1297, %v1297
        %1302 = vadd.xlane.f32.xlu0 %v1301
        %v1303 = vpop.xlane.xlu0 %1302
        %v1304 = vmul.f32 %v1303, %v959
        %v1305 = vmul.f32 %v1300, %v1300
        %v1306 = vsub.f32 %v1304, %v1305
        %v1307 = vsub.f32 %v1297, %v1300
        %v1308 = vadd.f32 %v1306, 1e-12
        %v1309 = vrsqrt.pop %v1308
        %v1310 = vmul.f32 %v1309, %v1308
        %v1311 = vmul.f32 %v1310, %v1309
        %v1312 = vmul.f32 0.5, %v1311
        %v1313 = vsub.f32 1.5, %v1312
        %v1314 = vmul.f32 %v1309, %v1313
        %vm1315 = vweird.f32 %v1308
        %vm1316 = vweird.f32 %v1309
        %vm1317 = vmor %vm1315, %vm1316
        %v1318 = vsel %vm1317, %v1309, %v1314
        %v1319 = vmul.f32 %v1307, %v1318
        %v1320 = vld [vmem:[%s12] sm:$0x1]
        %v1322 = vperm.slane %v1320, 0
        %v1324 = vmul.f32 %v1319, %v1322
        %v1325 = vld [vmem:[%s13] sm:$0x1]
        %v1327 = vperm.slane %v1325, 0
        %v1329 = vadd.f32 %v1324, %v1327
        %1330 = vst [vmem:[%s526] sm:$0xff] %v1329
        %p1331 = scmp.lt.s32.totalorder %s27, 1
        %s1332 = scalar_select %p1331, %s27, 1
        %s1333 = smul.addr %s1332, 8
        %s1334 = scalar_lea.vmem %s14, %s1333
        // Predicated region
        $region89: #{legal_model_forward.5} parent=75 // pred_check
          %p1335 = pneg %p349
        $region90: #{legal_model_forward.5} parent=75 // pred_check_branch
          %1337 = sbr.rel (%p1335) target = $region92
        $region91: #{legal_model_forward.5} parent=75 // pred_region
          _
        $region92: #{legal_model_forward.5} parent=75 // pred_fallthru
          _
      $region76: #{legal_model_forward.5} parent=5 // pred_fallthru
        _
      %p1338 = scmp.le.s32.totalorder 2, %s22
      // Predicated region
      $region93: #{legal_model_forward.5} parent=5 // pred_check
        %p1339 = pneg %p1338
      $region94: #{legal_model_forward.5} parent=5 // pred_check_branch
        %1341 = sbr.rel (%p1339) target = $region96
      $region95: #{legal_model_forward.5} parent=5 // pred_region
        %s1342 = ssub.s32 %s22, 2
        // Predicated region
        $region97: #{legal_model_forward.5} parent=95 // pred_check
          %p1343 = pneg %p355
        $region98: #{legal_model_forward.5} parent=95 // pred_check_branch
          %1345 = sbr.rel (%p1343) target = $region100
        $region99: #{legal_model_forward.5} parent=95 // pred_region
          %p1346 = scmp.lt.s32.totalorder %s28, 1
          %s1347 = scalar_select %p1346, %s28, 1
          %s1348 = smul.addr %s1347, 8
          %s1349 = scalar_lea.vmem %s14, %s1348
        $region100: #{legal_model_forward.5} parent=95 // pred_fallthru
          _
      $region96: #{legal_model_forward.5} parent=5 // pred_fallthru
        _
    $region6: #{legal_model_forward.5} parent=1 // loop_footer
      %s26 = sadd.s32 1, %s22
    $region7: #{legal_model_forward.5} parent=1 // loop_footer_branch
      %21 = sbr.rel target = $region3
    $region8: #{legal_model_forward.5} parent=1 // loop_exit
      _
    %1350 = vsyncpa [#allocation4], 1
    %s1351 = scalar_lea.sflag [#allocation4], 1
    %1352 = vsyncpa %s1351, 1
    %1353 = vsyncpa [#allocation6], 1

</llo_original>
